<compile_context>
chip_gen: v7x
topology: tpu7x:2x2x1
jax: 0.10.0
libtpu: 0.0.40
codegen_flags: <defaults>
</compile_context>

<pallas_src>
import functools

import jax
import jax.numpy as jnp
from jax.experimental import pallas as pl
from jax.experimental.pallas import tpu as pltpu


def _masked_mean_pool_kernel(x_ref, mask_ref, inv_ref, out_ref, acc_ref, *,
                             seq_len, seq_block):
    """Grid = (B_tiles, S_tiles); S (the reduction axis) is innermost.

    x_ref:    (Bt, St, H)  token embeddings, native dtype
    mask_ref: (Bt, St, 1)  {0,1} mask tile, native dtype, S on the sublane axis
    inv_ref:  (Bt, 1)      f32 precomputed 1 / max(sum_s mask, 1)
    out_ref:  (Bt, H)      dense output tile (written only at the last S step)
    acc_ref:  (Bt, H)      f32 VMEM accumulator (resident across S steps)
    """
    s = pl.program_id(1)

    @pl.when(s == 0)
    def _init():
        acc_ref[...] = jnp.zeros_like(acc_ref)

    # VPU mask-multiply + sublane (S) reduction, accumulated in f32.
    # TODO(synk): on v5e (no bf16 VALU) an MXU einsum fallback could be swapped
    # in if the VALU slot ever saturates; this op is HBM-bandwidth-bound.
    xm = x_ref[...].astype(jnp.float32) * mask_ref[...].astype(jnp.float32)
    if seq_len % seq_block != 0:
        # Ragged last S tile: x/mask are NOT padded in the wrapper, so the
        # out-of-bounds tail of the block holds garbage -> zero it explicitly.
        pos = s * seq_block + jax.lax.broadcasted_iota(
            jnp.int32, (1, seq_block, 1), 1)
        xm = jnp.where(pos < seq_len, xm, 0.0)
    acc_ref[...] += jnp.sum(xm, axis=1)

    @pl.when(s == pl.num_programs(1) - 1)
    def _finalize():
        out_ref[...] = (acc_ref[...] * inv_ref[...]).astype(out_ref.dtype)


def _vmem_budget_bytes():
    """Scoped-VMEM budget with headroom, derived from the chip generation."""
    cap = 64 * 1024 * 1024  # conservative default (v7x per-TC VMEM)
    try:
        info = pltpu.get_tpu_info()
        cap = int(getattr(info, "vmem_capacity_bytes", cap) or cap)
    except Exception:
        pass
    # ~5/8 of physical: ~40 MiB on v7x (64 MiB), ~80 MiB on v5e/v6e (128 MiB).
    return min((cap * 5) // 8, 96 * 1024 * 1024)


def _vmem_need_bytes(bt, st, H, itemsize):
    x_blk = bt * st * H * itemsize
    m_blk = bt * st * itemsize
    inv_blk = bt * 4
    out_blk = bt * H * itemsize
    acc = bt * H * 4
    return 2 * (x_blk + m_blk + inv_blk + out_blk) + acc


def _choose_tiles(B, S, H, itemsize, budget, block_b=None, block_s=None):
    # Batch tile: multiple of 8 (dense sublanes on the (Bt, H) output block);
    # bt=8 keeps >= 2 "parallel" B tiles for B >= 16 (v7x has 2 TensorCores).
    if block_b is not None:
        bt = max(1, min(block_b, B))
    elif B <= 8:
        bt = B                      # full extent: exempt from the 8-multiple rule
    else:
        bt = 8

    # Sequence tile: largest multiple of 8 whose x block is <= ~16 MiB and
    # whose double-buffered working set fits the generation VMEM budget.
    if block_s is not None:
        st = max(1, min(block_s, S))
        if st < S:
            st = max(8, (st // 8) * 8)
    else:
        per_block_target = min(budget // 3, 16 * 1024 * 1024)
        st = per_block_target // max(1, bt * H * itemsize)
        st = max(8, (st // 8) * 8)
    if st >= S:
        st = S
    while st > 8 and _vmem_need_bytes(bt, st, H, itemsize) > budget:
        st = max(8, ((st // 2) // 8) * 8)
    return bt, st


class PallasMeanPooler:
    """JAX/Pallas counterpart of latentis `Pooler` (mean-pooling variant)."""

    def __init__(self, name: str, output_dim: int):
        self.name = name
        self._output_dim = output_dim

    @property
    def output_dim(self):
        return self._output_dim

    def __call__(self, x, mask, *, block_b=None, block_s=None):
        """x: (B, S, H) float (f32 or bf16); mask: (B, S) or (B, S, 1) in {0,1}.

        Returns (B, H) in x.dtype.  x/mask are DMA'd in their native dtype
        (bf16 stays bf16 -> half the HBM bytes); accumulation is always f32.
        """
        B, S, H = x.shape
        if H != self._output_dim:
            raise ValueError("hidden dim must equal pooler output_dim")
        if mask.ndim == 3:
            mask = mask[..., 0]

        itemsize = jnp.dtype(x.dtype).itemsize
        budget = _vmem_budget_bytes()
        bt, st = _choose_tiles(B, S, H, itemsize, budget,
                               block_b=block_b, block_s=block_s)

        # Inverse token counts (correct under S tiling; computed once in XLA).
        counts = jnp.sum(mask.astype(jnp.float32), axis=1)            # (B,)
        inv = (1.0 / jnp.maximum(counts, 1.0)).reshape(B, 1)          # (B, 1) f32

        # Mask carried with S on the sublane axis, broadcast along lanes (H).
        mask3 = mask.astype(x.dtype).reshape(B, S, 1)                 # (B, S, 1)

        grid = (pl.cdiv(B, bt), pl.cdiv(S, st))
        vmem_limit = int(max(budget, _vmem_need_bytes(bt, st, H, itemsize)))

        kernel = functools.partial(_masked_mean_pool_kernel,
                                   seq_len=S, seq_block=st)

        out = pl.pallas_call(
            kernel,
            out_shape=jax.ShapeDtypeStruct((B, H), x.dtype),
            grid=grid,
            in_specs=[
                pl.BlockSpec((bt, st, H), lambda b, s: (b, s, 0)),
                pl.BlockSpec((bt, st, 1), lambda b, s: (b, s, 0)),
                pl.BlockSpec((bt, 1), lambda b, s: (b, 0)),
            ],
            out_specs=pl.BlockSpec((bt, H), lambda b, s: (b, 0)),
            scratch_shapes=[pltpu.VMEM((bt, H), jnp.float32)],
            compiler_params=pltpu.CompilerParams(
                dimension_semantics=("parallel", "arbitrary"),
                vmem_limit_bytes=vmem_limit,
            ),
        )(x, mask3, inv)

        return out


def _reference_mean_pool(x, mask):
    xf = x.astype(jnp.float32)
    m = mask.astype(jnp.float32)[..., None]
    summed = jnp.sum(xf * m, axis=1)
    counts = jnp.maximum(jnp.sum(m, axis=1), 1.0)
    return summed / counts


if __name__ == "__main__":
    key = jax.random.PRNGKey(0)
    B, S, H = 16, 300, 256

    kx, _ = jax.random.split(key)
    # bf16 inputs: native-dtype DMA (half the HBM bytes of f32); f32 accumulation
    # happens inside the kernel.
    x = jax.random.normal(kx, (B, S, H), dtype=jnp.bfloat16)
    # Deterministic per-row valid lengths, including a 0-length row to exercise
    # the max(count, 1) clamp.
    lengths = jnp.array(
        [0, 1, 7, 37, 64, 100, 128, 150, 177, 200, 222, 256, 280, 299, 300, 300],
        dtype=jnp.int32)
    mask = (jnp.arange(S)[None, :] < lengths[:, None]).astype(jnp.float32)

    pooler = PallasMeanPooler(name="mean_pool", output_dim=H)
    ref = _reference_mean_pool(x, mask)

    # (a) Forced multi-step S reduction with a ragged last tile (grid = (2, 3),
    #     300 = 128 + 128 + 44): exercises init/accumulate/finalize and the
    #     in-kernel iota masking (no wrapper-side padding of x).
    out_tiled = jax.block_until_ready(pooler(x, mask, block_s=128))
    # (b) Default tiling: full-extent S block, single reduction step.
    out_full = jax.block_until_ready(pooler(x, mask))

    for out in (out_tiled, out_full):
        assert out.shape == (B, H)
        assert out.dtype == x.dtype
        err = jnp.max(jnp.abs(out.astype(jnp.float32) - ref))
        assert jnp.allclose(out.astype(jnp.float32), ref, atol=1e-2, rtol=1e-2), (
            f"mismatch vs reference, max abs err = {err}")

    print("KERNEL_OK")
</pallas_src>

<mosaic_0001>
module attributes {stable_mosaic.version = 11 : i64} {
  func.func @_masked_mean_pool_kernel(%arg0: i32, %arg1: i32, %arg2: memref<8x128x256xbf16, #tpu.memory_space<vmem>>, %arg3: memref<8x128x1xbf16, #tpu.memory_space<vmem>>, %arg4: memref<8x1xf32, #tpu.memory_space<vmem>>, %arg5: memref<8x256xbf16, #tpu.memory_space<vmem>>, %arg6: memref<8x256xf32, #tpu.memory_space<vmem>>) attributes {dimension_semantics = [#tpu.dimension_semantics<parallel>, #tpu.dimension_semantics<arbitrary>], iteration_bounds = array<i64: 2, 3>, scalar_prefetch = 0 : i64, scratch_operands = 1 : i64, tpu.core_type = #tpu.core_type<tc>, window_params = [{transform_indices = @transform_0, window_bounds = array<i64: 8, 128, 256>}, {transform_indices = @transform_1, window_bounds = array<i64: 8, 128, 1>}, {transform_indices = @transform_2, window_bounds = array<i64: 8, 1>}, {transform_indices = @transform_3, window_bounds = array<i64: 8, 256>}]} {
    %c0_i32 = arith.constant 0 : i32
    %0 = arith.cmpi eq, %arg1, %c0_i32 : i32
    %1 = arith.extui %0 : i1 to i32
    %c0_i32_0 = arith.constant 0 : i32
    %2 = arith.cmpi ne, %1, %c0_i32_0 : i32
    scf.if %2 {
      %cst_12 = arith.constant 0.000000e+00 : f32
      %26 = vector.broadcast %cst_12 : f32 to vector<8x256xf32>
      %c0_13 = arith.constant 0 : index
      %c0_14 = arith.constant 0 : index
      %27 = vector.load %arg6[%c0_13, %c0_14] : memref<8x256xf32, #tpu.memory_space<vmem>>, vector<8x256xf32>
      tpu.vector_store %arg6[%c0_13, %c0_14], %26 {strides = array<i32>} : memref<8x256xf32, #tpu.memory_space<vmem>>, vector<8x256xf32>,
    } else {
    }
    %c0 = arith.constant 0 : index
    %c0_1 = arith.constant 0 : index
    %c0_2 = arith.constant 0 : index
    %3 = vector.load %arg2[%c0, %c0_1, %c0_2] : memref<8x128x256xbf16, #tpu.memory_space<vmem>>, vector<8x128x256xbf16>
    %4 = arith.extf %3 : vector<8x128x256xbf16> to vector<8x128x256xf32>
    %c0_3 = arith.constant 0 : index
    %c0_4 = arith.constant 0 : index
    %c0_5 = arith.constant 0 : index
    %5 = vector.load %arg3[%c0_3, %c0_4, %c0_5] : memref<8x128x1xbf16, #tpu.memory_space<vmem>>, vector<8x128x1xbf16>
    %6 = arith.extf %5 : vector<8x128x1xbf16> to vector<8x128x1xf32>
    %7 = vector.broadcast %6 : vector<8x128x1xf32> to vector<8x128x256xf32>
    %8 = arith.mulf %4, %7 : vector<8x128x256xf32>
    %c128_i32 = arith.constant 128 : i32
    %9 = arith.muli %arg1, %c128_i32 : i32
    %10 = tpu.iota {dimensions = array<i32: 1>} : vector<1x128x1xi32>
    %11 = vector.broadcast %9 : i32 to vector<1x128x1xi32>
    %12 = arith.addi %11, %10 : vector<1x128x1xi32>
    %c300_i32 = arith.constant 300 : i32
    %13 = vector.broadcast %c300_i32 : i32 to vector<1x128x1xi32>
    %14 = arith.cmpi slt, %12, %13 : vector<1x128x1xi32>
    %cst = arith.constant 0.000000e+00 : f32
    %15 = vector.shape_cast %14 : vector<1x128x1xi1> to vector<1x128x1xi1>
    %16 = vector.broadcast %15 : vector<1x128x1xi1> to vector<8x128x256xi1>
    %17 = vector.broadcast %cst : f32 to vector<8x128x256xf32>
    %18 = arith.select %16, %8, %17 : vector<8x128x256xi1>, vector<8x128x256xf32>
    %c0_6 = arith.constant 0 : index
    %c0_7 = arith.constant 0 : index
    %19 = vector.load %arg6[%c0_6, %c0_7] : memref<8x256xf32, #tpu.memory_space<vmem>>, vector<8x256xf32>
    %cst_8 = arith.constant dense<0.000000e+00> : vector<8x256xf32>
    %20 = vector.multi_reduction <add>, %18, %cst_8 [1] : vector<8x128x256xf32> to vector<8x256xf32>
    %21 = arith.addf %19, %20 : vector<8x256xf32>
    %c0_9 = arith.constant 0 : index
    %c0_10 = arith.constant 0 : index
    %22 = vector.load %arg6[%c0_9, %c0_10] : memref<8x256xf32, #tpu.memory_space<vmem>>, vector<8x256xf32>
    tpu.vector_store %arg6[%c0_9, %c0_10], %21 {strides = array<i32>} : memref<8x256xf32, #tpu.memory_space<vmem>>, vector<8x256xf32>,
    %c2_i32 = arith.constant 2 : i32
    %23 = arith.cmpi eq, %arg1, %c2_i32 : i32
    %24 = arith.extui %23 : i1 to i32
    %c0_i32_11 = arith.constant 0 : i32
    %25 = arith.cmpi ne, %24, %c0_i32_11 : i32
    scf.if %25 {
      %c0_12 = arith.constant 0 : index
      %c0_13 = arith.constant 0 : index
      %26 = vector.load %arg6[%c0_12, %c0_13] : memref<8x256xf32, #tpu.memory_space<vmem>>, vector<8x256xf32>
      %c0_14 = arith.constant 0 : index
      %c0_15 = arith.constant 0 : index
      %27 = vector.load %arg4[%c0_14, %c0_15] : memref<8x1xf32, #tpu.memory_space<vmem>>, vector<8x1xf32>
      %28 = vector.broadcast %27 : vector<8x1xf32> to vector<8x256xf32>
      %29 = arith.mulf %26, %28 : vector<8x256xf32>
      %30 = arith.truncf %29 : vector<8x256xf32> to vector<8x256xbf16>
      %c0_16 = arith.constant 0 : index
      %c0_17 = arith.constant 0 : index
      %31 = vector.load %arg5[%c0_16, %c0_17] : memref<8x256xbf16, #tpu.memory_space<vmem>>, vector<8x256xbf16>
      tpu.vector_store %arg5[%c0_16, %c0_17], %30 {strides = array<i32>} : memref<8x256xbf16, #tpu.memory_space<vmem>>, vector<8x256xbf16>,
    } else {
    }
    return
  }
  func.func @transform_0(%arg0: i32, %arg1: i32) -> (i32, i32, i32) {
    %c0_i32 = arith.constant 0 : i32
    %c0_i32_0 = arith.constant 0 : i32
    return %arg0, %arg1, %c0_i32 : i32, i32, i32
  }
  func.func @transform_1(%arg0: i32, %arg1: i32) -> (i32, i32, i32) {
    %c0_i32 = arith.constant 0 : i32
    %c0_i32_0 = arith.constant 0 : i32
    return %arg0, %arg1, %c0_i32 : i32, i32, i32
  }
  func.func @transform_2(%arg0: i32, %arg1: i32) -> (i32, i32) {
    %c0_i32 = arith.constant 0 : i32
    %c0_i32_0 = arith.constant 0 : i32
    return %arg0, %c0_i32 : i32, i32
  }
  func.func @transform_3(%arg0: i32, %arg1: i32) -> (i32, i32) {
    %c0_i32 = arith.constant 0 : i32
    %c0_i32_0 = arith.constant 0 : i32
    return %arg0, %c0_i32 : i32, i32
  }
}

</mosaic_0001>

<llo_original>
// kernel: tpu_custom_call.1
$region0: #{tpu_custom_call.1}
  #allocation0 [shape = 'u32[]', space=smem, size = 0x4, offset = 0x4, fixed_abs, tag = 'smem constant byte address 0x4 - core index']
  #allocation1 [shape = 'u32[144,128]{1,0:T(1,128)}', space=vmem, size = 0x12000, scoped, tag = 'internal scratch']
  #allocation2 [shape = 'f32[8,256]{1,0:T(8,128)}', space=vmem, size = 0x2000, scoped, tag = 'scratch operand']
  %s0 = inlined_call_operand.vmem [shape: bf16[16,300,256], index: 0, kind: input, shape index: {}]
  %s1 = inlined_call_operand.vmem [shape: bf16[16,300,1], index: 1, kind: input, shape index: {}]
  %s2 = inlined_call_operand.vmem [shape: f32[16,1], index: 2, kind: input, shape index: {}]
  %s3 = inlined_call_operand.hbm [shape: bf16[16,256], index: 3, kind: output, shape index: {}]
  %s4 = sld [smem:[#allocation0]]
  $region167: #{tpu_custom_call.1} parent=0
    _
  %s6 = ssub.s32 1, %s4
  %s7 = scalar_select 0, %s6, %s4
  $region1: #{tpu_custom_call.1} parent=0
    #allocation3 [shape = 'u8[1048576]{0}', space=vmem, size = 0x100000, scoped, tag = 'input window, operand 0']
    #allocation4 [shape = 'u8[524288]{0}', space=vmem, size = 0x80000, scoped, tag = 'input window, operand 1']
    #allocation5 [shape = 'u8[8192]{0}', space=vmem, size = 0x2000, scoped, tag = 'output window, operand 0']
    #allocation6 [shape = 's32[2]{0}', space=sflag, size = 0x8, scoped, tag = 'scoped memory for tpu_custom_call.1']
    %8 = vsyncpa [#allocation6], 0
    %s9 = scalar_lea.sflag [#allocation6], 1
    %10 = vsyncpa %s9, 0
    loop: start=0, step=1, limit=8
    $region2: #{tpu_custom_call.1} parent=1 // loop_pre_header
      _
    $region3: #{tpu_custom_call.1} parent=1 // loop_header
      %s12 = sphi 0, %s16
      %p13 = scmp.ge.s32.totalorder %s12, 8
      %s19 = sphi 0, %s31
      %s20 = sphi 0, %s27
      %s21 = sphi 0, %s19
      %s22 = sphi 0, %s20
      %s23 = sphi 0, %s21
      %s24 = sphi 0, %s22
      %s36 = sphi 0, %s38
      %s39 = sphi 0, %s36
      %s40 = sphi 0, %s39
      %s56 = sphi 0, %s40
      %s64 = sphi 0, %s66
      %s67 = sphi 0, %s64
      %s68 = sphi 0, %s67
      %s84 = sphi 0, %s68
      %s90 = sphi 0, %s92
      %s93 = sphi 0, %s90
      %s94 = sphi 0, %s93
      %s110 = sphi 0, %s94
      %s116 = sphi 0, %s118
      %s119 = sphi 0, %s116
      %s120 = sphi 0, %s119
      %s136 = sphi 0, %s120
    $region4: #{tpu_custom_call.1} parent=1 // loop_header_branch
      %15 = sbr.rel (%p13) target = $region8
    $region5: #{tpu_custom_call.1} parent=1 // loop_body
      %s17 = ssub.s32 %s12, 1
      %s18 = ssub.s32 %s12, 2
      %s25 = sadd.s32 1, %s20
      %p26 = scmp.ge.s32.totalorder %s25, 3
      %s27 = scalar_select %p26, 0, %s25
      %s28 = sadd.s32 1, %s19
      %s29 = scalar_select %p26, %s28, %s19
      %p30 = scmp.ge.s32.totalorder %s29, 2
      %s31 = scalar_select %p30, 0, %s29
      %s32 = ssub.s32 %s19, %s31
      %s33 = ssub.s32 %s20, %s27
      %s34 = sor.u32 %s32, %s33
      %p35 = scmp.eq.s32.totalorder %s34, 0
      %s37 = sadd.s32 %s36, 1
      %s38 = scalar_select %p35, %s36, %s37
      %p41 = pneg %p35
      %p42 = scmp.eq.s32.totalorder %s12, 5
      %p43 = por %p41, %p42
      %p44 = scmp.ne.s32.totalorder %s36, %s39
      %p45 = scmp.eq.s32.totalorder %s12, 0
      %p46 = por %p44, %p45
      %p47 = scmp.ne.s32.totalorder %s36, %s39
      %p48 = scmp.eq.s32.totalorder %s17, 5
      %p49 = por %p47, %p48
      %p50 = scmp.ne.s32.totalorder %s39, %s40
      %p51 = scmp.eq.s32.totalorder %s17, 0
      %p52 = por %p50, %p51
      %p53 = scmp.ne.s32.totalorder %s39, %s40
      %p54 = scmp.eq.s32.totalorder %s18, 5
      %p55 = por %p53, %p54
      %p57 = scmp.ne.s32.totalorder %s40, %s56
      %p58 = scmp.eq.s32.totalorder %s18, 0
      %p59 = por %p57, %p58
      %s60 = ssub.s32 %s19, %s31
      %s61 = ssub.s32 %s20, %s27
      %s62 = sor.u32 %s60, %s61
      %p63 = scmp.eq.s32.totalorder %s62, 0
      %s65 = sadd.s32 %s64, 1
      %s66 = scalar_select %p63, %s64, %s65
      %p69 = pneg %p63
      %p70 = scmp.eq.s32.totalorder %s12, 5
      %p71 = por %p69, %p70
      %p72 = scmp.ne.s32.totalorder %s64, %s67
      %p73 = scmp.eq.s32.totalorder %s12, 0
      %p74 = por %p72, %p73
      %p75 = scmp.ne.s32.totalorder %s64, %s67
      %p76 = scmp.eq.s32.totalorder %s17, 5
      %p77 = por %p75, %p76
      %p78 = scmp.ne.s32.totalorder %s67, %s68
      %p79 = scmp.eq.s32.totalorder %s17, 0
      %p80 = por %p78, %p79
      %p81 = scmp.ne.s32.totalorder %s67, %s68
      %p82 = scmp.eq.s32.totalorder %s18, 5
      %p83 = por %p81, %p82
      %p85 = scmp.ne.s32.totalorder %s68, %s84
      %p86 = scmp.eq.s32.totalorder %s18, 0
      %p87 = por %p85, %p86
      %s88 = ssub.s32 %s19, %s31
      %p89 = scmp.eq.s32.totalorder %s88, 0
      %s91 = sadd.s32 %s90, 1
      %s92 = scalar_select %p89, %s90, %s91
      %p95 = pneg %p89
      %p96 = scmp.eq.s32.totalorder %s12, 5
      %p97 = por %p95, %p96
      %p98 = scmp.ne.s32.totalorder %s90, %s93
      %p99 = scmp.eq.s32.totalorder %s12, 0
      %p100 = por %p98, %p99
      %p101 = scmp.ne.s32.totalorder %s90, %s93
      %p102 = scmp.eq.s32.totalorder %s17, 5
      %p103 = por %p101, %p102
      %p104 = scmp.ne.s32.totalorder %s93, %s94
      %p105 = scmp.eq.s32.totalorder %s17, 0
      %p106 = por %p104, %p105
      %p107 = scmp.ne.s32.totalorder %s93, %s94
      %p108 = scmp.eq.s32.totalorder %s18, 5
      %p109 = por %p107, %p108
      %p111 = scmp.ne.s32.totalorder %s94, %s110
      %p112 = scmp.eq.s32.totalorder %s18, 0
      %p113 = por %p111, %p112
      %s114 = ssub.s32 %s19, %s31
      %p115 = scmp.eq.s32.totalorder %s114, 0
      %s117 = sadd.s32 %s116, 1
      %s118 = scalar_select %p115, %s116, %s117
      %p121 = pneg %p115
      %p122 = scmp.eq.s32.totalorder %s12, 5
      %p123 = por %p121, %p122
      %p124 = scmp.ne.s32.totalorder %s116, %s119
      %p125 = scmp.eq.s32.totalorder %s12, 0
      %p126 = por %p124, %p125
      %p127 = scmp.ne.s32.totalorder %s116, %s119
      %p128 = scmp.eq.s32.totalorder %s17, 5
      %p129 = por %p127, %p128
      %p130 = scmp.ne.s32.totalorder %s119, %s120
      %p131 = scmp.eq.s32.totalorder %s17, 0
      %p132 = por %p130, %p131
      %p133 = scmp.ne.s32.totalorder %s119, %s120
      %p134 = scmp.eq.s32.totalorder %s18, 5
      %p135 = por %p133, %p134
      %p137 = scmp.ne.s32.totalorder %s120, %s136
      %p138 = scmp.eq.s32.totalorder %s18, 0
      %p139 = por %p137, %p138
      %p140 = scmp.le.s32.totalorder 1, %s12
      %p141 = scmp.lt.s32.totalorder %s12, 7
      %p142 = pnand %p140, %p141
      %p143 = pneg %p142
      // Predicated region
      $region9: #{tpu_custom_call.1} parent=5 // pred_check
        _
      $region10: #{tpu_custom_call.1} parent=5 // pred_check_branch
        %145 = sbr.rel (%p142) target = $region12
      $region11: #{tpu_custom_call.1} parent=5 // pred_region
        %s146 = ssub.s32 %s12, 1
      $region12: #{tpu_custom_call.1} parent=5 // pred_fallthru
        _
      %p147 = scmp.lt.s32.totalorder %s12, 6
      // Predicated region
      $region13: #{tpu_custom_call.1} parent=5 // pred_check
        %p148 = pneg %p147
      $region14: #{tpu_custom_call.1} parent=5 // pred_check_branch
        %150 = sbr.rel (%p148) target = $region16
      $region15: #{tpu_custom_call.1} parent=5 // pred_region
        // Predicated region
        $region17: #{tpu_custom_call.1} parent=15 // pred_check
          %p151 = pneg %p46
        $region18: #{tpu_custom_call.1} parent=15 // pred_check_branch
          %153 = sbr.rel (%p151) target = $region20
        $region19: #{tpu_custom_call.1} parent=15 // pred_region
          %s154 = sand.u32 %s36, 1
          %s155 = sand.u32 %s36, 1
          %s156 = smul.addr %s155, 1024
          %s157 = scalar_lea.vmem [#allocation3], %s156
          %s158 = smul.u32 8, %s19
          %s159 = smul.u32 16, %s20
          %s160 = ssub.s32 38, %s159
          %p161 = scmp.lt.s32.totalorder %s160, 16
          %s162 = scalar_select %p161, %s160, 16
          %s163 = smul.u32 512, %s162
          %s164 = smul.u32 %s163, 2
          %p165 = scmp.ne.s32.totalorder 0, %s164
          %s166 = smul.addr %s159, 2
          %s167 = smul.addr %s158, 76
          %s168 = sadd.s32 %s166, %s167
          %s169 = smul.addr %s168, 4
          %s170 = scalar_lea.vmem %s0, %s169
          // Predicated region
          $region21: #{tpu_custom_call.1} parent=19 // pred_check
            %p171 = pneg %p165
          $region22: #{tpu_custom_call.1} parent=19 // pred_check_branch
            %173 = sbr.rel (%p171) target = $region24
          $region23: #{tpu_custom_call.1} parent=19 // pred_region
            // Predicated region
            $region25: #{tpu_custom_call.1} parent=23 // pred_check
              _
            $region26: #{tpu_custom_call.1} parent=23 // pred_check_branch
              %175 = sbr.rel (0) target = $region28
            $region27: #{tpu_custom_call.1} parent=23 // pred_region
              // Predicated region
              $region47: #{tpu_custom_call.1} parent=27 // pred_check
                _
              $region48: #{tpu_custom_call.1} parent=27 // pred_check_branch
                %364 = sbr.rel (0) target = $region50
              $region49: #{tpu_custom_call.1} parent=27 // pred_region
                %s365 = sshrl.u32 %s162, 3
                // While loop
                $region51: #{tpu_custom_call.1} parent=49 // loop_pre_header
                  _
                $region52: #{tpu_custom_call.1} parent=49 // loop_header
                  %s367 = sphi 0, %s369
                  %p368 = scmp.ge.s32.totalorder %s367, %s365
                  %s372 = sphi 0, %s505
                  %s373 = sphi %s170, %s508
                  %s374 = sphi %s157, %s509
                $region53: #{tpu_custom_call.1} parent=49 // loop_header_branch
                  %371 = sbr.rel (%p368) target = $region57
                $region54: #{tpu_custom_call.1} parent=49 // loop_body
                  %v375 = vld [vmem:[%s373] sm:$0xff]
                  %376 = vst [vmem:[%s374] sm:$0xff] %v375
                  %v377 = vld [vmem:[%s373 + $0x8] sm:$0xff]
                  %378 = vst [vmem:[%s374 + $0x8] sm:$0xff] %v377
                  %v379 = vld [vmem:[%s373 + $0x10] sm:$0xff]
                  %380 = vst [vmem:[%s374 + $0x10] sm:$0xff] %v379
                  %v381 = vld [vmem:[%s373 + $0x18] sm:$0xff]
                  %382 = vst [vmem:[%s374 + $0x18] sm:$0xff] %v381
                  %v383 = vld [vmem:[%s373 + $0x20] sm:$0xff]
                  %384 = vst [vmem:[%s374 + $0x20] sm:$0xff] %v383
                  %v385 = vld [vmem:[%s373 + $0x28] sm:$0xff]
                  %386 = vst [vmem:[%s374 + $0x28] sm:$0xff] %v385
                  %v387 = vld [vmem:[%s373 + $0x30] sm:$0xff]
                  %388 = vst [vmem:[%s374 + $0x30] sm:$0xff] %v387
                  %v389 = vld [vmem:[%s373 + $0x38] sm:$0xff]
                  %390 = vst [vmem:[%s374 + $0x38] sm:$0xff] %v389
                  %v391 = vld [vmem:[%s373 + $0x130] sm:$0xff]
                  %392 = vst [vmem:[%s374 + $0x80] sm:$0xff] %v391
                  %v393 = vld [vmem:[%s373 + $0x138] sm:$0xff]
                  %394 = vst [vmem:[%s374 + $0x88] sm:$0xff] %v393
                  %v395 = vld [vmem:[%s373 + $0x140] sm:$0xff]
                  %396 = vst [vmem:[%s374 + $0x90] sm:$0xff] %v395
                  %v397 = vld [vmem:[%s373 + $0x148] sm:$0xff]
                  %398 = vst [vmem:[%s374 + $0x98] sm:$0xff] %v397
                  %v399 = vld [vmem:[%s373 + $0x150] sm:$0xff]
                  %400 = vst [vmem:[%s374 + $0xa0] sm:$0xff] %v399
                  %v401 = vld [vmem:[%s373 + $0x158] sm:$0xff]
                  %402 = vst [vmem:[%s374 + $0xa8] sm:$0xff] %v401
                  %v403 = vld [vmem:[%s373 + $0x160] sm:$0xff]
                  %404 = vst [vmem:[%s374 + $0xb0] sm:$0xff] %v403
                  %v405 = vld [vmem:[%s373 + $0x168] sm:$0xff]
                  %406 = vst [vmem:[%s374 + $0xb8] sm:$0xff] %v405
                  %v407 = vld [vmem:[%s373 + $0x260] sm:$0xff]
                  %408 = vst [vmem:[%s374 + $0x100] sm:$0xff] %v407
                  %v409 = vld [vmem:[%s373 + $0x268] sm:$0xff]
                  %410 = vst [vmem:[%s374 + $0x108] sm:$0xff] %v409
                  %v411 = vld [vmem:[%s373 + $0x270] sm:$0xff]
                  %412 = vst [vmem:[%s374 + $0x110] sm:$0xff] %v411
                  %v413 = vld [vmem:[%s373 + $0x278] sm:$0xff]
                  %414 = vst [vmem:[%s374 + $0x118] sm:$0xff] %v413
                  %v415 = vld [vmem:[%s373 + $0x280] sm:$0xff]
                  %416 = vst [vmem:[%s374 + $0x120] sm:$0xff] %v415
                  %v417 = vld [vmem:[%s373 + $0x288] sm:$0xff]
                  %418 = vst [vmem:[%s374 + $0x128] sm:$0xff] %v417
                  %v419 = vld [vmem:[%s373 + $0x290] sm:$0xff]
                  %420 = vst [vmem:[%s374 + $0x130] sm:$0xff] %v419
                  %v421 = vld [vmem:[%s373 + $0x298] sm:$0xff]
                  %422 = vst [vmem:[%s374 + $0x138] sm:$0xff] %v421
                  %v423 = vld [vmem:[%s373 + $0x390] sm:$0xff]
                  %424 = vst [vmem:[%s374 + $0x180] sm:$0xff] %v423
                  %v425 = vld [vmem:[%s373 + $0x398] sm:$0xff]
                  %426 = vst [vmem:[%s374 + $0x188] sm:$0xff] %v425
                  %v427 = vld [vmem:[%s373 + $0x3a0] sm:$0xff]
                  %428 = vst [vmem:[%s374 + $0x190] sm:$0xff] %v427
                  %v429 = vld [vmem:[%s373 + $0x3a8] sm:$0xff]
                  %430 = vst [vmem:[%s374 + $0x198] sm:$0xff] %v429
                  %v431 = vld [vmem:[%s373 + $0x3b0] sm:$0xff]
                  %432 = vst [vmem:[%s374 + $0x1a0] sm:$0xff] %v431
                  %v433 = vld [vmem:[%s373 + $0x3b8] sm:$0xff]
                  %434 = vst [vmem:[%s374 + $0x1a8] sm:$0xff] %v433
                  %v435 = vld [vmem:[%s373 + $0x3c0] sm:$0xff]
                  %436 = vst [vmem:[%s374 + $0x1b0] sm:$0xff] %v435
                  %v437 = vld [vmem:[%s373 + $0x3c8] sm:$0xff]
                  %438 = vst [vmem:[%s374 + $0x1b8] sm:$0xff] %v437
                  %v439 = vld [vmem:[%s373 + $0x4c0] sm:$0xff]
                  %440 = vst [vmem:[%s374 + $0x200] sm:$0xff] %v439
                  %v441 = vld [vmem:[%s373 + $0x4c8] sm:$0xff]
                  %442 = vst [vmem:[%s374 + $0x208] sm:$0xff] %v441
                  %v443 = vld [vmem:[%s373 + $0x4d0] sm:$0xff]
                  %444 = vst [vmem:[%s374 + $0x210] sm:$0xff] %v443
                  %v445 = vld [vmem:[%s373 + $0x4d8] sm:$0xff]
                  %446 = vst [vmem:[%s374 + $0x218] sm:$0xff] %v445
                  %v447 = vld [vmem:[%s373 + $0x4e0] sm:$0xff]
                  %448 = vst [vmem:[%s374 + $0x220] sm:$0xff] %v447
                  %v449 = vld [vmem:[%s373 + $0x4e8] sm:$0xff]
                  %450 = vst [vmem:[%s374 + $0x228] sm:$0xff] %v449
                  %v451 = vld [vmem:[%s373 + $0x4f0] sm:$0xff]
                  %452 = vst [vmem:[%s374 + $0x230] sm:$0xff] %v451
                  %v453 = vld [vmem:[%s373 + $0x4f8] sm:$0xff]
                  %454 = vst [vmem:[%s374 + $0x238] sm:$0xff] %v453
                  %v455 = vld [vmem:[%s373 + $0x5f0] sm:$0xff]
                  %456 = vst [vmem:[%s374 + $0x280] sm:$0xff] %v455
                  %v457 = vld [vmem:[%s373 + $0x5f8] sm:$0xff]
                  %458 = vst [vmem:[%s374 + $0x288] sm:$0xff] %v457
                  %v459 = vld [vmem:[%s373 + $0x600] sm:$0xff]
                  %460 = vst [vmem:[%s374 + $0x290] sm:$0xff] %v459
                  %v461 = vld [vmem:[%s373 + $0x608] sm:$0xff]
                  %462 = vst [vmem:[%s374 + $0x298] sm:$0xff] %v461
                  %v463 = vld [vmem:[%s373 + $0x610] sm:$0xff]
                  %464 = vst [vmem:[%s374 + $0x2a0] sm:$0xff] %v463
                  %v465 = vld [vmem:[%s373 + $0x618] sm:$0xff]
                  %466 = vst [vmem:[%s374 + $0x2a8] sm:$0xff] %v465
                  %v467 = vld [vmem:[%s373 + $0x620] sm:$0xff]
                  %468 = vst [vmem:[%s374 + $0x2b0] sm:$0xff] %v467
                  %v469 = vld [vmem:[%s373 + $0x628] sm:$0xff]
                  %470 = vst [vmem:[%s374 + $0x2b8] sm:$0xff] %v469
                  %v471 = vld [vmem:[%s373 + $0x720] sm:$0xff]
                  %472 = vst [vmem:[%s374 + $0x300] sm:$0xff] %v471
                  %v473 = vld [vmem:[%s373 + $0x728] sm:$0xff]
                  %474 = vst [vmem:[%s374 + $0x308] sm:$0xff] %v473
                  %v475 = vld [vmem:[%s373 + $0x730] sm:$0xff]
                  %476 = vst [vmem:[%s374 + $0x310] sm:$0xff] %v475
                  %v477 = vld [vmem:[%s373 + $0x738] sm:$0xff]
                  %478 = vst [vmem:[%s374 + $0x318] sm:$0xff] %v477
                  %v479 = vld [vmem:[%s373 + $0x740] sm:$0xff]
                  %480 = vst [vmem:[%s374 + $0x320] sm:$0xff] %v479
                  %v481 = vld [vmem:[%s373 + $0x748] sm:$0xff]
                  %482 = vst [vmem:[%s374 + $0x328] sm:$0xff] %v481
                  %v483 = vld [vmem:[%s373 + $0x750] sm:$0xff]
                  %484 = vst [vmem:[%s374 + $0x330] sm:$0xff] %v483
                  %v485 = vld [vmem:[%s373 + $0x758] sm:$0xff]
                  %486 = vst [vmem:[%s374 + $0x338] sm:$0xff] %v485
                  %v487 = vld [vmem:[%s373 + $0x850] sm:$0xff]
                  %488 = vst [vmem:[%s374 + $0x380] sm:$0xff] %v487
                  %v489 = vld [vmem:[%s373 + $0x858] sm:$0xff]
                  %490 = vst [vmem:[%s374 + $0x388] sm:$0xff] %v489
                  %v491 = vld [vmem:[%s373 + $0x860] sm:$0xff]
                  %492 = vst [vmem:[%s374 + $0x390] sm:$0xff] %v491
                  %v493 = vld [vmem:[%s373 + $0x868] sm:$0xff]
                  %494 = vst [vmem:[%s374 + $0x398] sm:$0xff] %v493
                  %v495 = vld [vmem:[%s373 + $0x870] sm:$0xff]
                  %496 = vst [vmem:[%s374 + $0x3a0] sm:$0xff] %v495
                  %v497 = vld [vmem:[%s373 + $0x878] sm:$0xff]
                  %498 = vst [vmem:[%s374 + $0x3a8] sm:$0xff] %v497
                  %v499 = vld [vmem:[%s373 + $0x880] sm:$0xff]
                  %500 = vst [vmem:[%s374 + $0x3b0] sm:$0xff] %v499
                  %v501 = vld [vmem:[%s373 + $0x888] sm:$0xff]
                  %502 = vst [vmem:[%s374 + $0x3b8] sm:$0xff] %v501
                  %s503 = sadd.s32 1, %s372
                  %p504 = scmp.ge.s32.totalorder %s503, %s365
                  %s505 = scalar_select %p504, 0, %s503
                  %s506 = smul.u32 %s505, 64
                  %s507 = smul.u32 %s505, 64
                  %s508 = scalar_lea.vmem %s170, %s506
                  %s509 = scalar_lea.vmem %s157, %s507 [#allocation3]
                $region55: #{tpu_custom_call.1} parent=49 // loop_footer
                  %s369 = sadd.s32 %s367, 1
                $region56: #{tpu_custom_call.1} parent=49 // loop_footer_branch
                  %366 = sbr.rel target = $region52
                $region57: #{tpu_custom_call.1} parent=49 // loop_exit
                  _
                %s510 = sshrl.u32 %s162, 3
                %s511 = sand.u32 %s162, 7
                %s512 = smul.u32 %s510, 8
                %s513 = smul.u32 8, %s512
                %s514 = scalar_lea.vmem %s170, %s513
                %s515 = smul.u32 8, %s512
                %s516 = scalar_lea.vmem %s157, %s515 [#allocation3]
                // While loop
                $region58: #{tpu_custom_call.1} parent=49 // loop_pre_header
                  _
                $region59: #{tpu_custom_call.1} parent=49 // loop_header
                  %s518 = sphi 0, %s520
                  %p519 = scmp.ge.s32.totalorder %s518, %s511
                  %s523 = sphi 0, %s544
                  %s524 = sphi %s514, %s547
                  %s525 = sphi %s516, %s548
                $region60: #{tpu_custom_call.1} parent=49 // loop_header_branch
                  %522 = sbr.rel (%p519) target = $region64
                $region61: #{tpu_custom_call.1} parent=49 // loop_body
                  %v526 = vld [vmem:[%s524] sm:$0xff]
                  %527 = vst [vmem:[%s525] sm:$0xff] %v526
                  %v528 = vld [vmem:[%s524 + $0x130] sm:$0xff]
                  %529 = vst [vmem:[%s525 + $0x80] sm:$0xff] %v528
                  %v530 = vld [vmem:[%s524 + $0x260] sm:$0xff]
                  %531 = vst [vmem:[%s525 + $0x100] sm:$0xff] %v530
                  %v532 = vld [vmem:[%s524 + $0x390] sm:$0xff]
                  %533 = vst [vmem:[%s525 + $0x180] sm:$0xff] %v532
                  %v534 = vld [vmem:[%s524 + $0x4c0] sm:$0xff]
                  %535 = vst [vmem:[%s525 + $0x200] sm:$0xff] %v534
                  %v536 = vld [vmem:[%s524 + $0x5f0] sm:$0xff]
                  %537 = vst [vmem:[%s525 + $0x280] sm:$0xff] %v536
                  %v538 = vld [vmem:[%s524 + $0x720] sm:$0xff]
                  %539 = vst [vmem:[%s525 + $0x300] sm:$0xff] %v538
                  %v540 = vld [vmem:[%s524 + $0x850] sm:$0xff]
                  %541 = vst [vmem:[%s525 + $0x380] sm:$0xff] %v540
                  %s542 = sadd.s32 1, %s523
                  %p543 = scmp.ge.s32.totalorder %s542, %s511
                  %s544 = scalar_select %p543, 0, %s542
                  %s545 = smul.u32 %s544, 8
                  %s546 = smul.u32 %s544, 8
                  %s547 = scalar_lea.vmem %s514, %s545
                  %s548 = scalar_lea.vmem %s516, %s546 [#allocation3]
                $region62: #{tpu_custom_call.1} parent=49 // loop_footer
                  %s520 = sadd.s32 %s518, 1
                $region63: #{tpu_custom_call.1} parent=49 // loop_footer_branch
                  %517 = sbr.rel target = $region59
                $region64: #{tpu_custom_call.1} parent=49 // loop_exit
                  _
              $region50: #{tpu_custom_call.1} parent=27 // pred_fallthru
                _
              // Predicated region
              $region65: #{tpu_custom_call.1} parent=27 // pred_check
                _
              $region66: #{tpu_custom_call.1} parent=27 // pred_check_branch
                %550 = sbr.rel target = $region68
              $region67: #{tpu_custom_call.1} parent=27 // pred_region
                _
              $region68: #{tpu_custom_call.1} parent=27 // pred_fallthru
                _
            $region28: #{tpu_custom_call.1} parent=23 // pred_fallthru
              _
            // Predicated region
            $region29: #{tpu_custom_call.1} parent=23 // pred_check
              _
            $region30: #{tpu_custom_call.1} parent=23 // pred_check_branch
              %177 = sbr.rel target = $region32
            $region31: #{tpu_custom_call.1} parent=23 // pred_region
              %s179 = sshrl.u32 %s162, 3
              // While loop
              $region33: #{tpu_custom_call.1} parent=31 // loop_pre_header
                _
              $region34: #{tpu_custom_call.1} parent=31 // loop_header
                %s181 = sphi 0, %s183
                %p182 = scmp.ge.s32.totalorder %s181, %s179
                %s186 = sphi 0, %s319
                %s187 = sphi %s170, %s322
                %s188 = sphi %s157, %s323
              $region35: #{tpu_custom_call.1} parent=31 // loop_header_branch
                %185 = sbr.rel (%p182) target = $region39
              $region36: #{tpu_custom_call.1} parent=31 // loop_body
                %v189 = vld [vmem:[%s187] sm:$0xff]
                %190 = vst [vmem:[%s188] sm:$0xff] %v189
                %v191 = vld [vmem:[%s187 + $0x8] sm:$0xff]
                %192 = vst [vmem:[%s188 + $0x8] sm:$0xff] %v191
                %v193 = vld [vmem:[%s187 + $0x10] sm:$0xff]
                %194 = vst [vmem:[%s188 + $0x10] sm:$0xff] %v193
                %v195 = vld [vmem:[%s187 + $0x18] sm:$0xff]
                %196 = vst [vmem:[%s188 + $0x18] sm:$0xff] %v195
                %v197 = vld [vmem:[%s187 + $0x20] sm:$0xff]
                %198 = vst [vmem:[%s188 + $0x20] sm:$0xff] %v197
                %v199 = vld [vmem:[%s187 + $0x28] sm:$0xff]
                %200 = vst [vmem:[%s188 + $0x28] sm:$0xff] %v199
                %v201 = vld [vmem:[%s187 + $0x30] sm:$0xff]
                %202 = vst [vmem:[%s188 + $0x30] sm:$0xff] %v201
                %v203 = vld [vmem:[%s187 + $0x38] sm:$0xff]
                %204 = vst [vmem:[%s188 + $0x38] sm:$0xff] %v203
                %v205 = vld [vmem:[%s187 + $0x130] sm:$0xff]
                %206 = vst [vmem:[%s188 + $0x80] sm:$0xff] %v205
                %v207 = vld [vmem:[%s187 + $0x138] sm:$0xff]
                %208 = vst [vmem:[%s188 + $0x88] sm:$0xff] %v207
                %v209 = vld [vmem:[%s187 + $0x140] sm:$0xff]
                %210 = vst [vmem:[%s188 + $0x90] sm:$0xff] %v209
                %v211 = vld [vmem:[%s187 + $0x148] sm:$0xff]
                %212 = vst [vmem:[%s188 + $0x98] sm:$0xff] %v211
                %v213 = vld [vmem:[%s187 + $0x150] sm:$0xff]
                %214 = vst [vmem:[%s188 + $0xa0] sm:$0xff] %v213
                %v215 = vld [vmem:[%s187 + $0x158] sm:$0xff]
                %216 = vst [vmem:[%s188 + $0xa8] sm:$0xff] %v215
                %v217 = vld [vmem:[%s187 + $0x160] sm:$0xff]
                %218 = vst [vmem:[%s188 + $0xb0] sm:$0xff] %v217
                %v219 = vld [vmem:[%s187 + $0x168] sm:$0xff]
                %220 = vst [vmem:[%s188 + $0xb8] sm:$0xff] %v219
                %v221 = vld [vmem:[%s187 + $0x260] sm:$0xff]
                %222 = vst [vmem:[%s188 + $0x100] sm:$0xff] %v221
                %v223 = vld [vmem:[%s187 + $0x268] sm:$0xff]
                %224 = vst [vmem:[%s188 + $0x108] sm:$0xff] %v223
                %v225 = vld [vmem:[%s187 + $0x270] sm:$0xff]
                %226 = vst [vmem:[%s188 + $0x110] sm:$0xff] %v225
                %v227 = vld [vmem:[%s187 + $0x278] sm:$0xff]
                %228 = vst [vmem:[%s188 + $0x118] sm:$0xff] %v227
                %v229 = vld [vmem:[%s187 + $0x280] sm:$0xff]
                %230 = vst [vmem:[%s188 + $0x120] sm:$0xff] %v229
                %v231 = vld [vmem:[%s187 + $0x288] sm:$0xff]
                %232 = vst [vmem:[%s188 + $0x128] sm:$0xff] %v231
                %v233 = vld [vmem:[%s187 + $0x290] sm:$0xff]
                %234 = vst [vmem:[%s188 + $0x130] sm:$0xff] %v233
                %v235 = vld [vmem:[%s187 + $0x298] sm:$0xff]
                %236 = vst [vmem:[%s188 + $0x138] sm:$0xff] %v235
                %v237 = vld [vmem:[%s187 + $0x390] sm:$0xff]
                %238 = vst [vmem:[%s188 + $0x180] sm:$0xff] %v237
                %v239 = vld [vmem:[%s187 + $0x398] sm:$0xff]
                %240 = vst [vmem:[%s188 + $0x188] sm:$0xff] %v239
                %v241 = vld [vmem:[%s187 + $0x3a0] sm:$0xff]
                %242 = vst [vmem:[%s188 + $0x190] sm:$0xff] %v241
                %v243 = vld [vmem:[%s187 + $0x3a8] sm:$0xff]
                %244 = vst [vmem:[%s188 + $0x198] sm:$0xff] %v243
                %v245 = vld [vmem:[%s187 + $0x3b0] sm:$0xff]
                %246 = vst [vmem:[%s188 + $0x1a0] sm:$0xff] %v245
                %v247 = vld [vmem:[%s187 + $0x3b8] sm:$0xff]
                %248 = vst [vmem:[%s188 + $0x1a8] sm:$0xff] %v247
                %v249 = vld [vmem:[%s187 + $0x3c0] sm:$0xff]
                %250 = vst [vmem:[%s188 + $0x1b0] sm:$0xff] %v249
                %v251 = vld [vmem:[%s187 + $0x3c8] sm:$0xff]
                %252 = vst [vmem:[%s188 + $0x1b8] sm:$0xff] %v251
                %v253 = vld [vmem:[%s187 + $0x4c0] sm:$0xff]
                %254 = vst [vmem:[%s188 + $0x200] sm:$0xff] %v253
                %v255 = vld [vmem:[%s187 + $0x4c8] sm:$0xff]
                %256 = vst [vmem:[%s188 + $0x208] sm:$0xff] %v255
                %v257 = vld [vmem:[%s187 + $0x4d0] sm:$0xff]
                %258 = vst [vmem:[%s188 + $0x210] sm:$0xff] %v257
                %v259 = vld [vmem:[%s187 + $0x4d8] sm:$0xff]
                %260 = vst [vmem:[%s188 + $0x218] sm:$0xff] %v259
                %v261 = vld [vmem:[%s187 + $0x4e0] sm:$0xff]
                %262 = vst [vmem:[%s188 + $0x220] sm:$0xff] %v261
                %v263 = vld [vmem:[%s187 + $0x4e8] sm:$0xff]
                %264 = vst [vmem:[%s188 + $0x228] sm:$0xff] %v263
                %v265 = vld [vmem:[%s187 + $0x4f0] sm:$0xff]
                %266 = vst [vmem:[%s188 + $0x230] sm:$0xff] %v265
                %v267 = vld [vmem:[%s187 + $0x4f8] sm:$0xff]
                %268 = vst [vmem:[%s188 + $0x238] sm:$0xff] %v267
                %v269 = vld [vmem:[%s187 + $0x5f0] sm:$0xff]
                %270 = vst [vmem:[%s188 + $0x280] sm:$0xff] %v269
                %v271 = vld [vmem:[%s187 + $0x5f8] sm:$0xff]
                %272 = vst [vmem:[%s188 + $0x288] sm:$0xff] %v271
                %v273 = vld [vmem:[%s187 + $0x600] sm:$0xff]
                %274 = vst [vmem:[%s188 + $0x290] sm:$0xff] %v273
                %v275 = vld [vmem:[%s187 + $0x608] sm:$0xff]
                %276 = vst [vmem:[%s188 + $0x298] sm:$0xff] %v275
                %v277 = vld [vmem:[%s187 + $0x610] sm:$0xff]
                %278 = vst [vmem:[%s188 + $0x2a0] sm:$0xff] %v277
                %v279 = vld [vmem:[%s187 + $0x618] sm:$0xff]
                %280 = vst [vmem:[%s188 + $0x2a8] sm:$0xff] %v279
                %v281 = vld [vmem:[%s187 + $0x620] sm:$0xff]
                %282 = vst [vmem:[%s188 + $0x2b0] sm:$0xff] %v281
                %v283 = vld [vmem:[%s187 + $0x628] sm:$0xff]
                %284 = vst [vmem:[%s188 + $0x2b8] sm:$0xff] %v283
                %v285 = vld [vmem:[%s187 + $0x720] sm:$0xff]
                %286 = vst [vmem:[%s188 + $0x300] sm:$0xff] %v285
                %v287 = vld [vmem:[%s187 + $0x728] sm:$0xff]
                %288 = vst [vmem:[%s188 + $0x308] sm:$0xff] %v287
                %v289 = vld [vmem:[%s187 + $0x730] sm:$0xff]
                %290 = vst [vmem:[%s188 + $0x310] sm:$0xff] %v289
                %v291 = vld [vmem:[%s187 + $0x738] sm:$0xff]
                %292 = vst [vmem:[%s188 + $0x318] sm:$0xff] %v291
                %v293 = vld [vmem:[%s187 + $0x740] sm:$0xff]
                %294 = vst [vmem:[%s188 + $0x320] sm:$0xff] %v293
                %v295 = vld [vmem:[%s187 + $0x748] sm:$0xff]
                %296 = vst [vmem:[%s188 + $0x328] sm:$0xff] %v295
                %v297 = vld [vmem:[%s187 + $0x750] sm:$0xff]
                %298 = vst [vmem:[%s188 + $0x330] sm:$0xff] %v297
                %v299 = vld [vmem:[%s187 + $0x758] sm:$0xff]
                %300 = vst [vmem:[%s188 + $0x338] sm:$0xff] %v299
                %v301 = vld [vmem:[%s187 + $0x850] sm:$0xff]
                %302 = vst [vmem:[%s188 + $0x380] sm:$0xff] %v301
                %v303 = vld [vmem:[%s187 + $0x858] sm:$0xff]
                %304 = vst [vmem:[%s188 + $0x388] sm:$0xff] %v303
                %v305 = vld [vmem:[%s187 + $0x860] sm:$0xff]
                %306 = vst [vmem:[%s188 + $0x390] sm:$0xff] %v305
                %v307 = vld [vmem:[%s187 + $0x868] sm:$0xff]
                %308 = vst [vmem:[%s188 + $0x398] sm:$0xff] %v307
                %v309 = vld [vmem:[%s187 + $0x870] sm:$0xff]
                %310 = vst [vmem:[%s188 + $0x3a0] sm:$0xff] %v309
                %v311 = vld [vmem:[%s187 + $0x878] sm:$0xff]
                %312 = vst [vmem:[%s188 + $0x3a8] sm:$0xff] %v311
                %v313 = vld [vmem:[%s187 + $0x880] sm:$0xff]
                %314 = vst [vmem:[%s188 + $0x3b0] sm:$0xff] %v313
                %v315 = vld [vmem:[%s187 + $0x888] sm:$0xff]
                %316 = vst [vmem:[%s188 + $0x3b8] sm:$0xff] %v315
                %s317 = sadd.s32 1, %s186
                %p318 = scmp.ge.s32.totalorder %s317, %s179
                %s319 = scalar_select %p318, 0, %s317
                %s320 = smul.u32 %s319, 64
                %s321 = smul.u32 %s319, 64
                %s322 = scalar_lea.vmem %s170, %s320
                %s323 = scalar_lea.vmem %s157, %s321 [#allocation3]
              $region37: #{tpu_custom_call.1} parent=31 // loop_footer
                %s183 = sadd.s32 %s181, 1
              $region38: #{tpu_custom_call.1} parent=31 // loop_footer_branch
                %180 = sbr.rel target = $region34
              $region39: #{tpu_custom_call.1} parent=31 // loop_exit
                _
              %s324 = sshrl.u32 %s162, 3
              %s325 = sand.u32 %s162, 7
              %s326 = smul.u32 %s324, 8
              %s327 = smul.u32 8, %s326
              %s328 = scalar_lea.vmem %s170, %s327
              %s329 = smul.u32 8, %s326
              %s330 = scalar_lea.vmem %s157, %s329 [#allocation3]
              // While loop
              $region40: #{tpu_custom_call.1} parent=31 // loop_pre_header
                _
              $region41: #{tpu_custom_call.1} parent=31 // loop_header
                %s332 = sphi 0, %s334
                %p333 = scmp.ge.s32.totalorder %s332, %s325
                %s337 = sphi 0, %s358
                %s338 = sphi %s328, %s361
                %s339 = sphi %s330, %s362
              $region42: #{tpu_custom_call.1} parent=31 // loop_header_branch
                %336 = sbr.rel (%p333) target = $region46
              $region43: #{tpu_custom_call.1} parent=31 // loop_body
                %v340 = vld [vmem:[%s338] sm:$0xff]
                %341 = vst [vmem:[%s339] sm:$0xff] %v340
                %v342 = vld [vmem:[%s338 + $0x130] sm:$0xff]
                %343 = vst [vmem:[%s339 + $0x80] sm:$0xff] %v342
                %v344 = vld [vmem:[%s338 + $0x260] sm:$0xff]
                %345 = vst [vmem:[%s339 + $0x100] sm:$0xff] %v344
                %v346 = vld [vmem:[%s338 + $0x390] sm:$0xff]
                %347 = vst [vmem:[%s339 + $0x180] sm:$0xff] %v346
                %v348 = vld [vmem:[%s338 + $0x4c0] sm:$0xff]
                %349 = vst [vmem:[%s339 + $0x200] sm:$0xff] %v348
                %v350 = vld [vmem:[%s338 + $0x5f0] sm:$0xff]
                %351 = vst [vmem:[%s339 + $0x280] sm:$0xff] %v350
                %v352 = vld [vmem:[%s338 + $0x720] sm:$0xff]
                %353 = vst [vmem:[%s339 + $0x300] sm:$0xff] %v352
                %v354 = vld [vmem:[%s338 + $0x850] sm:$0xff]
                %355 = vst [vmem:[%s339 + $0x380] sm:$0xff] %v354
                %s356 = sadd.s32 1, %s337
                %p357 = scmp.ge.s32.totalorder %s356, %s325
                %s358 = scalar_select %p357, 0, %s356
                %s359 = smul.u32 %s358, 8
                %s360 = smul.u32 %s358, 8
                %s361 = scalar_lea.vmem %s328, %s359
                %s362 = scalar_lea.vmem %s330, %s360 [#allocation3]
              $region44: #{tpu_custom_call.1} parent=31 // loop_footer
                %s334 = sadd.s32 %s332, 1
              $region45: #{tpu_custom_call.1} parent=31 // loop_footer_branch
                %331 = sbr.rel target = $region41
              $region46: #{tpu_custom_call.1} parent=31 // loop_exit
                _
            $region32: #{tpu_custom_call.1} parent=23 // pred_fallthru
              _
          $region24: #{tpu_custom_call.1} parent=19 // pred_fallthru
            _
          %551 = vnop
        $region20: #{tpu_custom_call.1} parent=15 // pred_fallthru
          _
        // Predicated region
        $region69: #{tpu_custom_call.1} parent=15 // pred_check
          %p552 = pneg %p74
        $region70: #{tpu_custom_call.1} parent=15 // pred_check_branch
          %554 = sbr.rel (%p552) target = $region72
        $region71: #{tpu_custom_call.1} parent=15 // pred_region
          %s555 = sand.u32 %s64, 1
          %s556 = sand.u32 %s64, 1
          %s557 = smul.addr %s556, 512
          %s558 = scalar_lea.vmem [#allocation4], %s557
          %s559 = smul.u32 8, %s19
          %s560 = smul.u32 16, %s20
          %s561 = ssub.s32 38, %s560
          %p562 = scmp.lt.s32.totalorder %s561, 16
          %s563 = scalar_select %p562, %s561, 16
          %s564 = smul.u32 512, %s563
          %p565 = scmp.ne.s32.totalorder 0, %s564
          %s566 = smul.addr %s559, 38
          %s567 = sadd.s32 %s560, %s566
          %s568 = smul.addr %s567, 4
          %s569 = scalar_lea.vmem %s1, %s568
          // Predicated region
          $region73: #{tpu_custom_call.1} parent=71 // pred_check
            %p570 = pneg %p565
          $region74: #{tpu_custom_call.1} parent=71 // pred_check_branch
            %572 = sbr.rel (%p570) target = $region76
          $region75: #{tpu_custom_call.1} parent=71 // pred_region
            // Predicated region
            $region77: #{tpu_custom_call.1} parent=75 // pred_check
              _
            $region78: #{tpu_custom_call.1} parent=75 // pred_check_branch
              %574 = sbr.rel target = $region80
            $region79: #{tpu_custom_call.1} parent=75 // pred_region
              // Predicated region
              $region99: #{tpu_custom_call.1} parent=79 // pred_check
                _
              $region100: #{tpu_custom_call.1} parent=79 // pred_check_branch
                %763 = sbr.rel (0) target = $region102
              $region101: #{tpu_custom_call.1} parent=79 // pred_region
                %s764 = sshrl.u32 %s563, 4
                // While loop
                $region103: #{tpu_custom_call.1} parent=101 // loop_pre_header
                  _
                $region104: #{tpu_custom_call.1} parent=101 // loop_header
                  %s766 = sphi 0, %s768
                  %p767 = scmp.ge.s32.totalorder %s766, %s764
                  %s771 = sphi 0, %s776
                  %s772 = sphi %s569, %s779
                  %s773 = sphi %s558, %s780
                $region105: #{tpu_custom_call.1} parent=101 // loop_header_branch
                  %770 = sbr.rel (%p767) target = $region109
                $region106: #{tpu_custom_call.1} parent=101 // loop_body
                  %s774 = sadd.s32 1, %s771
                  %p775 = scmp.ge.s32.totalorder %s774, %s764
                  %s776 = scalar_select %p775, 0, %s774
                  %s777 = smul.u32 %s776, 64
                  %s778 = smul.u32 %s776, 64
                  %s779 = scalar_lea.vmem %s569, %s777
                  %s780 = scalar_lea.vmem %s558, %s778 [#allocation4]
                $region107: #{tpu_custom_call.1} parent=101 // loop_footer
                  %s768 = sadd.s32 %s766, 1
                $region108: #{tpu_custom_call.1} parent=101 // loop_footer_branch
                  %765 = sbr.rel target = $region104
                $region109: #{tpu_custom_call.1} parent=101 // loop_exit
                  _
                %s781 = sshrl.u32 %s563, 4
                %s782 = sand.u32 %s563, 15
                %s783 = smul.u32 %s781, 16
                %s784 = smul.u32 4, %s783
                %s785 = scalar_lea.vmem %s569, %s784
                %s786 = smul.u32 4, %s783
                %s787 = scalar_lea.vmem %s558, %s786 [#allocation4]
                // While loop
                $region110: #{tpu_custom_call.1} parent=101 // loop_pre_header
                  _
                $region111: #{tpu_custom_call.1} parent=101 // loop_header
                  %s789 = sphi 0, %s791
                  %p790 = scmp.ge.s32.totalorder %s789, %s782
                  %s794 = sphi 0, %s799
                  %s795 = sphi %s785, %s802
                  %s796 = sphi %s787, %s803
                $region112: #{tpu_custom_call.1} parent=101 // loop_header_branch
                  %793 = sbr.rel (%p790) target = $region116
                $region113: #{tpu_custom_call.1} parent=101 // loop_body
                  %s797 = sadd.s32 1, %s794
                  %p798 = scmp.ge.s32.totalorder %s797, %s782
                  %s799 = scalar_select %p798, 0, %s797
                  %s800 = smul.u32 %s799, 4
                  %s801 = smul.u32 %s799, 4
                  %s802 = scalar_lea.vmem %s785, %s800
                  %s803 = scalar_lea.vmem %s787, %s801 [#allocation4]
                $region114: #{tpu_custom_call.1} parent=101 // loop_footer
                  %s791 = sadd.s32 %s789, 1
                $region115: #{tpu_custom_call.1} parent=101 // loop_footer_branch
                  %788 = sbr.rel target = $region111
                $region116: #{tpu_custom_call.1} parent=101 // loop_exit
                  _
                %s805 = sshrl.u32 %s563, 3
                // While loop
                $region117: #{tpu_custom_call.1} parent=101 // loop_pre_header
                  _
                $region118: #{tpu_custom_call.1} parent=101 // loop_header
                  %s807 = sphi 0, %s809
                  %p808 = scmp.ge.s32.totalorder %s807, %s805
                  %s812 = sphi 0, %s945
                  %s813 = sphi %s569, %s948
                  %s814 = sphi %s558, %s949
                $region119: #{tpu_custom_call.1} parent=101 // loop_header_branch
                  %811 = sbr.rel (%p808) target = $region123
                $region120: #{tpu_custom_call.1} parent=101 // loop_body
                  %v815 = vld [vmem:[%s813] sm:$0xf]
                  %816 = vst [vmem:[%s814] sm:$0xf] %v815
                  %v817 = vld [vmem:[%s813 + $0x4] sm:$0xf]
                  %818 = vst [vmem:[%s814 + $0x4] sm:$0xf] %v817
                  %v819 = vld [vmem:[%s813 + $0x8] sm:$0xf]
                  %820 = vst [vmem:[%s814 + $0x8] sm:$0xf] %v819
                  %v821 = vld [vmem:[%s813 + $0xc] sm:$0xf]
                  %822 = vst [vmem:[%s814 + $0xc] sm:$0xf] %v821
                  %v823 = vld [vmem:[%s813 + $0x10] sm:$0xf]
                  %824 = vst [vmem:[%s814 + $0x10] sm:$0xf] %v823
                  %v825 = vld [vmem:[%s813 + $0x14] sm:$0xf]
                  %826 = vst [vmem:[%s814 + $0x14] sm:$0xf] %v825
                  %v827 = vld [vmem:[%s813 + $0x18] sm:$0xf]
                  %828 = vst [vmem:[%s814 + $0x18] sm:$0xf] %v827
                  %v829 = vld [vmem:[%s813 + $0x1c] sm:$0xf]
                  %830 = vst [vmem:[%s814 + $0x1c] sm:$0xf] %v829
                  %v831 = vld [vmem:[%s813 + $0x98] sm:$0xf]
                  %832 = vst [vmem:[%s814 + $0x40] sm:$0xf] %v831
                  %v833 = vld [vmem:[%s813 + $0x9c] sm:$0xf]
                  %834 = vst [vmem:[%s814 + $0x44] sm:$0xf] %v833
                  %v835 = vld [vmem:[%s813 + $0xa0] sm:$0xf]
                  %836 = vst [vmem:[%s814 + $0x48] sm:$0xf] %v835
                  %v837 = vld [vmem:[%s813 + $0xa4] sm:$0xf]
                  %838 = vst [vmem:[%s814 + $0x4c] sm:$0xf] %v837
                  %v839 = vld [vmem:[%s813 + $0xa8] sm:$0xf]
                  %840 = vst [vmem:[%s814 + $0x50] sm:$0xf] %v839
                  %v841 = vld [vmem:[%s813 + $0xac] sm:$0xf]
                  %842 = vst [vmem:[%s814 + $0x54] sm:$0xf] %v841
                  %v843 = vld [vmem:[%s813 + $0xb0] sm:$0xf]
                  %844 = vst [vmem:[%s814 + $0x58] sm:$0xf] %v843
                  %v845 = vld [vmem:[%s813 + $0xb4] sm:$0xf]
                  %846 = vst [vmem:[%s814 + $0x5c] sm:$0xf] %v845
                  %v847 = vld [vmem:[%s813 + $0x130] sm:$0xf]
                  %848 = vst [vmem:[%s814 + $0x80] sm:$0xf] %v847
                  %v849 = vld [vmem:[%s813 + $0x134] sm:$0xf]
                  %850 = vst [vmem:[%s814 + $0x84] sm:$0xf] %v849
                  %v851 = vld [vmem:[%s813 + $0x138] sm:$0xf]
                  %852 = vst [vmem:[%s814 + $0x88] sm:$0xf] %v851
                  %v853 = vld [vmem:[%s813 + $0x13c] sm:$0xf]
                  %854 = vst [vmem:[%s814 + $0x8c] sm:$0xf] %v853
                  %v855 = vld [vmem:[%s813 + $0x140] sm:$0xf]
                  %856 = vst [vmem:[%s814 + $0x90] sm:$0xf] %v855
                  %v857 = vld [vmem:[%s813 + $0x144] sm:$0xf]
                  %858 = vst [vmem:[%s814 + $0x94] sm:$0xf] %v857
                  %v859 = vld [vmem:[%s813 + $0x148] sm:$0xf]
                  %860 = vst [vmem:[%s814 + $0x98] sm:$0xf] %v859
                  %v861 = vld [vmem:[%s813 + $0x14c] sm:$0xf]
                  %862 = vst [vmem:[%s814 + $0x9c] sm:$0xf] %v861
                  %v863 = vld [vmem:[%s813 + $0x1c8] sm:$0xf]
                  %864 = vst [vmem:[%s814 + $0xc0] sm:$0xf] %v863
                  %v865 = vld [vmem:[%s813 + $0x1cc] sm:$0xf]
                  %866 = vst [vmem:[%s814 + $0xc4] sm:$0xf] %v865
                  %v867 = vld [vmem:[%s813 + $0x1d0] sm:$0xf]
                  %868 = vst [vmem:[%s814 + $0xc8] sm:$0xf] %v867
                  %v869 = vld [vmem:[%s813 + $0x1d4] sm:$0xf]
                  %870 = vst [vmem:[%s814 + $0xcc] sm:$0xf] %v869
                  %v871 = vld [vmem:[%s813 + $0x1d8] sm:$0xf]
                  %872 = vst [vmem:[%s814 + $0xd0] sm:$0xf] %v871
                  %v873 = vld [vmem:[%s813 + $0x1dc] sm:$0xf]
                  %874 = vst [vmem:[%s814 + $0xd4] sm:$0xf] %v873
                  %v875 = vld [vmem:[%s813 + $0x1e0] sm:$0xf]
                  %876 = vst [vmem:[%s814 + $0xd8] sm:$0xf] %v875
                  %v877 = vld [vmem:[%s813 + $0x1e4] sm:$0xf]
                  %878 = vst [vmem:[%s814 + $0xdc] sm:$0xf] %v877
                  %v879 = vld [vmem:[%s813 + $0x260] sm:$0xf]
                  %880 = vst [vmem:[%s814 + $0x100] sm:$0xf] %v879
                  %v881 = vld [vmem:[%s813 + $0x264] sm:$0xf]
                  %882 = vst [vmem:[%s814 + $0x104] sm:$0xf] %v881
                  %v883 = vld [vmem:[%s813 + $0x268] sm:$0xf]
                  %884 = vst [vmem:[%s814 + $0x108] sm:$0xf] %v883
                  %v885 = vld [vmem:[%s813 + $0x26c] sm:$0xf]
                  %886 = vst [vmem:[%s814 + $0x10c] sm:$0xf] %v885
                  %v887 = vld [vmem:[%s813 + $0x270] sm:$0xf]
                  %888 = vst [vmem:[%s814 + $0x110] sm:$0xf] %v887
                  %v889 = vld [vmem:[%s813 + $0x274] sm:$0xf]
                  %890 = vst [vmem:[%s814 + $0x114] sm:$0xf] %v889
                  %v891 = vld [vmem:[%s813 + $0x278] sm:$0xf]
                  %892 = vst [vmem:[%s814 + $0x118] sm:$0xf] %v891
                  %v893 = vld [vmem:[%s813 + $0x27c] sm:$0xf]
                  %894 = vst [vmem:[%s814 + $0x11c] sm:$0xf] %v893
                  %v895 = vld [vmem:[%s813 + $0x2f8] sm:$0xf]
                  %896 = vst [vmem:[%s814 + $0x140] sm:$0xf] %v895
                  %v897 = vld [vmem:[%s813 + $0x2fc] sm:$0xf]
                  %898 = vst [vmem:[%s814 + $0x144] sm:$0xf] %v897
                  %v899 = vld [vmem:[%s813 + $0x300] sm:$0xf]
                  %900 = vst [vmem:[%s814 + $0x148] sm:$0xf] %v899
                  %v901 = vld [vmem:[%s813 + $0x304] sm:$0xf]
                  %902 = vst [vmem:[%s814 + $0x14c] sm:$0xf] %v901
                  %v903 = vld [vmem:[%s813 + $0x308] sm:$0xf]
                  %904 = vst [vmem:[%s814 + $0x150] sm:$0xf] %v903
                  %v905 = vld [vmem:[%s813 + $0x30c] sm:$0xf]
                  %906 = vst [vmem:[%s814 + $0x154] sm:$0xf] %v905
                  %v907 = vld [vmem:[%s813 + $0x310] sm:$0xf]
                  %908 = vst [vmem:[%s814 + $0x158] sm:$0xf] %v907
                  %v909 = vld [vmem:[%s813 + $0x314] sm:$0xf]
                  %910 = vst [vmem:[%s814 + $0x15c] sm:$0xf] %v909
                  %v911 = vld [vmem:[%s813 + $0x390] sm:$0xf]
                  %912 = vst [vmem:[%s814 + $0x180] sm:$0xf] %v911
                  %v913 = vld [vmem:[%s813 + $0x394] sm:$0xf]
                  %914 = vst [vmem:[%s814 + $0x184] sm:$0xf] %v913
                  %v915 = vld [vmem:[%s813 + $0x398] sm:$0xf]
                  %916 = vst [vmem:[%s814 + $0x188] sm:$0xf] %v915
                  %v917 = vld [vmem:[%s813 + $0x39c] sm:$0xf]
                  %918 = vst [vmem:[%s814 + $0x18c] sm:$0xf] %v917
                  %v919 = vld [vmem:[%s813 + $0x3a0] sm:$0xf]
                  %920 = vst [vmem:[%s814 + $0x190] sm:$0xf] %v919
                  %v921 = vld [vmem:[%s813 + $0x3a4] sm:$0xf]
                  %922 = vst [vmem:[%s814 + $0x194] sm:$0xf] %v921
                  %v923 = vld [vmem:[%s813 + $0x3a8] sm:$0xf]
                  %924 = vst [vmem:[%s814 + $0x198] sm:$0xf] %v923
                  %v925 = vld [vmem:[%s813 + $0x3ac] sm:$0xf]
                  %926 = vst [vmem:[%s814 + $0x19c] sm:$0xf] %v925
                  %v927 = vld [vmem:[%s813 + $0x428] sm:$0xf]
                  %928 = vst [vmem:[%s814 + $0x1c0] sm:$0xf] %v927
                  %v929 = vld [vmem:[%s813 + $0x42c] sm:$0xf]
                  %930 = vst [vmem:[%s814 + $0x1c4] sm:$0xf] %v929
                  %v931 = vld [vmem:[%s813 + $0x430] sm:$0xf]
                  %932 = vst [vmem:[%s814 + $0x1c8] sm:$0xf] %v931
                  %v933 = vld [vmem:[%s813 + $0x434] sm:$0xf]
                  %934 = vst [vmem:[%s814 + $0x1cc] sm:$0xf] %v933
                  %v935 = vld [vmem:[%s813 + $0x438] sm:$0xf]
                  %936 = vst [vmem:[%s814 + $0x1d0] sm:$0xf] %v935
                  %v937 = vld [vmem:[%s813 + $0x43c] sm:$0xf]
                  %938 = vst [vmem:[%s814 + $0x1d4] sm:$0xf] %v937
                  %v939 = vld [vmem:[%s813 + $0x440] sm:$0xf]
                  %940 = vst [vmem:[%s814 + $0x1d8] sm:$0xf] %v939
                  %v941 = vld [vmem:[%s813 + $0x444] sm:$0xf]
                  %942 = vst [vmem:[%s814 + $0x1dc] sm:$0xf] %v941
                  %s943 = sadd.s32 1, %s812
                  %p944 = scmp.ge.s32.totalorder %s943, %s805
                  %s945 = scalar_select %p944, 0, %s943
                  %s946 = smul.u32 %s945, 32
                  %s947 = smul.u32 %s945, 32
                  %s948 = scalar_lea.vmem %s569, %s946
                  %s949 = scalar_lea.vmem %s558, %s947 [#allocation4]
                $region121: #{tpu_custom_call.1} parent=101 // loop_footer
                  %s809 = sadd.s32 %s807, 1
                $region122: #{tpu_custom_call.1} parent=101 // loop_footer_branch
                  %806 = sbr.rel target = $region118
                $region123: #{tpu_custom_call.1} parent=101 // loop_exit
                  _
                %s950 = sshrl.u32 %s563, 3
                %s951 = sand.u32 %s563, 7
                %s952 = smul.u32 %s950, 8
                %s953 = smul.u32 4, %s952
                %s954 = scalar_lea.vmem %s569, %s953
                %s955 = smul.u32 4, %s952
                %s956 = scalar_lea.vmem %s558, %s955 [#allocation4]
                // While loop
                $region124: #{tpu_custom_call.1} parent=101 // loop_pre_header
                  _
                $region125: #{tpu_custom_call.1} parent=101 // loop_header
                  %s958 = sphi 0, %s960
                  %p959 = scmp.ge.s32.totalorder %s958, %s951
                  %s963 = sphi 0, %s984
                  %s964 = sphi %s954, %s987
                  %s965 = sphi %s956, %s988
                $region126: #{tpu_custom_call.1} parent=101 // loop_header_branch
                  %962 = sbr.rel (%p959) target = $region130
                $region127: #{tpu_custom_call.1} parent=101 // loop_body
                  %v966 = vld [vmem:[%s964] sm:$0xf]
                  %967 = vst [vmem:[%s965] sm:$0xf] %v966
                  %v968 = vld [vmem:[%s964 + $0x98] sm:$0xf]
                  %969 = vst [vmem:[%s965 + $0x40] sm:$0xf] %v968
                  %v970 = vld [vmem:[%s964 + $0x130] sm:$0xf]
                  %971 = vst [vmem:[%s965 + $0x80] sm:$0xf] %v970
                  %v972 = vld [vmem:[%s964 + $0x1c8] sm:$0xf]
                  %973 = vst [vmem:[%s965 + $0xc0] sm:$0xf] %v972
                  %v974 = vld [vmem:[%s964 + $0x260] sm:$0xf]
                  %975 = vst [vmem:[%s965 + $0x100] sm:$0xf] %v974
                  %v976 = vld [vmem:[%s964 + $0x2f8] sm:$0xf]
                  %977 = vst [vmem:[%s965 + $0x140] sm:$0xf] %v976
                  %v978 = vld [vmem:[%s964 + $0x390] sm:$0xf]
                  %979 = vst [vmem:[%s965 + $0x180] sm:$0xf] %v978
                  %v980 = vld [vmem:[%s964 + $0x428] sm:$0xf]
                  %981 = vst [vmem:[%s965 + $0x1c0] sm:$0xf] %v980
                  %s982 = sadd.s32 1, %s963
                  %p983 = scmp.ge.s32.totalorder %s982, %s951
                  %s984 = scalar_select %p983, 0, %s982
                  %s985 = smul.u32 %s984, 4
                  %s986 = smul.u32 %s984, 4
                  %s987 = scalar_lea.vmem %s954, %s985
                  %s988 = scalar_lea.vmem %s956, %s986 [#allocation4]
                $region128: #{tpu_custom_call.1} parent=101 // loop_footer
                  %s960 = sadd.s32 %s958, 1
                $region129: #{tpu_custom_call.1} parent=101 // loop_footer_branch
                  %957 = sbr.rel target = $region125
                $region130: #{tpu_custom_call.1} parent=101 // loop_exit
                  _
              $region102: #{tpu_custom_call.1} parent=79 // pred_fallthru
                _
            $region80: #{tpu_custom_call.1} parent=75 // pred_fallthru
              _
            // Predicated region
            $region81: #{tpu_custom_call.1} parent=75 // pred_check
              _
            $region82: #{tpu_custom_call.1} parent=75 // pred_check_branch
              %576 = sbr.rel (0) target = $region84
            $region83: #{tpu_custom_call.1} parent=75 // pred_region
              %s578 = sshrl.u32 %s563, 3
              // While loop
              $region85: #{tpu_custom_call.1} parent=83 // loop_pre_header
                _
              $region86: #{tpu_custom_call.1} parent=83 // loop_header
                %s580 = sphi 0, %s582
                %p581 = scmp.ge.s32.totalorder %s580, %s578
                %s585 = sphi 0, %s718
                %s586 = sphi %s569, %s721
                %s587 = sphi %s558, %s722
              $region87: #{tpu_custom_call.1} parent=83 // loop_header_branch
                %584 = sbr.rel (%p581) target = $region91
              $region88: #{tpu_custom_call.1} parent=83 // loop_body
                %v588 = vld [vmem:[%s586] sm:$0xf]
                %589 = vst [vmem:[%s587] sm:$0xf] %v588
                %v590 = vld [vmem:[%s586 + $0x4] sm:$0xf]
                %591 = vst [vmem:[%s587 + $0x4] sm:$0xf] %v590
                %v592 = vld [vmem:[%s586 + $0x8] sm:$0xf]
                %593 = vst [vmem:[%s587 + $0x8] sm:$0xf] %v592
                %v594 = vld [vmem:[%s586 + $0xc] sm:$0xf]
                %595 = vst [vmem:[%s587 + $0xc] sm:$0xf] %v594
                %v596 = vld [vmem:[%s586 + $0x10] sm:$0xf]
                %597 = vst [vmem:[%s587 + $0x10] sm:$0xf] %v596
                %v598 = vld [vmem:[%s586 + $0x14] sm:$0xf]
                %599 = vst [vmem:[%s587 + $0x14] sm:$0xf] %v598
                %v600 = vld [vmem:[%s586 + $0x18] sm:$0xf]
                %601 = vst [vmem:[%s587 + $0x18] sm:$0xf] %v600
                %v602 = vld [vmem:[%s586 + $0x1c] sm:$0xf]
                %603 = vst [vmem:[%s587 + $0x1c] sm:$0xf] %v602
                %v604 = vld [vmem:[%s586 + $0x98] sm:$0xf]
                %605 = vst [vmem:[%s587 + $0x40] sm:$0xf] %v604
                %v606 = vld [vmem:[%s586 + $0x9c] sm:$0xf]
                %607 = vst [vmem:[%s587 + $0x44] sm:$0xf] %v606
                %v608 = vld [vmem:[%s586 + $0xa0] sm:$0xf]
                %609 = vst [vmem:[%s587 + $0x48] sm:$0xf] %v608
                %v610 = vld [vmem:[%s586 + $0xa4] sm:$0xf]
                %611 = vst [vmem:[%s587 + $0x4c] sm:$0xf] %v610
                %v612 = vld [vmem:[%s586 + $0xa8] sm:$0xf]
                %613 = vst [vmem:[%s587 + $0x50] sm:$0xf] %v612
                %v614 = vld [vmem:[%s586 + $0xac] sm:$0xf]
                %615 = vst [vmem:[%s587 + $0x54] sm:$0xf] %v614
                %v616 = vld [vmem:[%s586 + $0xb0] sm:$0xf]
                %617 = vst [vmem:[%s587 + $0x58] sm:$0xf] %v616
                %v618 = vld [vmem:[%s586 + $0xb4] sm:$0xf]
                %619 = vst [vmem:[%s587 + $0x5c] sm:$0xf] %v618
                %v620 = vld [vmem:[%s586 + $0x130] sm:$0xf]
                %621 = vst [vmem:[%s587 + $0x80] sm:$0xf] %v620
                %v622 = vld [vmem:[%s586 + $0x134] sm:$0xf]
                %623 = vst [vmem:[%s587 + $0x84] sm:$0xf] %v622
                %v624 = vld [vmem:[%s586 + $0x138] sm:$0xf]
                %625 = vst [vmem:[%s587 + $0x88] sm:$0xf] %v624
                %v626 = vld [vmem:[%s586 + $0x13c] sm:$0xf]
                %627 = vst [vmem:[%s587 + $0x8c] sm:$0xf] %v626
                %v628 = vld [vmem:[%s586 + $0x140] sm:$0xf]
                %629 = vst [vmem:[%s587 + $0x90] sm:$0xf] %v628
                %v630 = vld [vmem:[%s586 + $0x144] sm:$0xf]
                %631 = vst [vmem:[%s587 + $0x94] sm:$0xf] %v630
                %v632 = vld [vmem:[%s586 + $0x148] sm:$0xf]
                %633 = vst [vmem:[%s587 + $0x98] sm:$0xf] %v632
                %v634 = vld [vmem:[%s586 + $0x14c] sm:$0xf]
                %635 = vst [vmem:[%s587 + $0x9c] sm:$0xf] %v634
                %v636 = vld [vmem:[%s586 + $0x1c8] sm:$0xf]
                %637 = vst [vmem:[%s587 + $0xc0] sm:$0xf] %v636
                %v638 = vld [vmem:[%s586 + $0x1cc] sm:$0xf]
                %639 = vst [vmem:[%s587 + $0xc4] sm:$0xf] %v638
                %v640 = vld [vmem:[%s586 + $0x1d0] sm:$0xf]
                %641 = vst [vmem:[%s587 + $0xc8] sm:$0xf] %v640
                %v642 = vld [vmem:[%s586 + $0x1d4] sm:$0xf]
                %643 = vst [vmem:[%s587 + $0xcc] sm:$0xf] %v642
                %v644 = vld [vmem:[%s586 + $0x1d8] sm:$0xf]
                %645 = vst [vmem:[%s587 + $0xd0] sm:$0xf] %v644
                %v646 = vld [vmem:[%s586 + $0x1dc] sm:$0xf]
                %647 = vst [vmem:[%s587 + $0xd4] sm:$0xf] %v646
                %v648 = vld [vmem:[%s586 + $0x1e0] sm:$0xf]
                %649 = vst [vmem:[%s587 + $0xd8] sm:$0xf] %v648
                %v650 = vld [vmem:[%s586 + $0x1e4] sm:$0xf]
                %651 = vst [vmem:[%s587 + $0xdc] sm:$0xf] %v650
                %v652 = vld [vmem:[%s586 + $0x260] sm:$0xf]
                %653 = vst [vmem:[%s587 + $0x100] sm:$0xf] %v652
                %v654 = vld [vmem:[%s586 + $0x264] sm:$0xf]
                %655 = vst [vmem:[%s587 + $0x104] sm:$0xf] %v654
                %v656 = vld [vmem:[%s586 + $0x268] sm:$0xf]
                %657 = vst [vmem:[%s587 + $0x108] sm:$0xf] %v656
                %v658 = vld [vmem:[%s586 + $0x26c] sm:$0xf]
                %659 = vst [vmem:[%s587 + $0x10c] sm:$0xf] %v658
                %v660 = vld [vmem:[%s586 + $0x270] sm:$0xf]
                %661 = vst [vmem:[%s587 + $0x110] sm:$0xf] %v660
                %v662 = vld [vmem:[%s586 + $0x274] sm:$0xf]
                %663 = vst [vmem:[%s587 + $0x114] sm:$0xf] %v662
                %v664 = vld [vmem:[%s586 + $0x278] sm:$0xf]
                %665 = vst [vmem:[%s587 + $0x118] sm:$0xf] %v664
                %v666 = vld [vmem:[%s586 + $0x27c] sm:$0xf]
                %667 = vst [vmem:[%s587 + $0x11c] sm:$0xf] %v666
                %v668 = vld [vmem:[%s586 + $0x2f8] sm:$0xf]
                %669 = vst [vmem:[%s587 + $0x140] sm:$0xf] %v668
                %v670 = vld [vmem:[%s586 + $0x2fc] sm:$0xf]
                %671 = vst [vmem:[%s587 + $0x144] sm:$0xf] %v670
                %v672 = vld [vmem:[%s586 + $0x300] sm:$0xf]
                %673 = vst [vmem:[%s587 + $0x148] sm:$0xf] %v672
                %v674 = vld [vmem:[%s586 + $0x304] sm:$0xf]
                %675 = vst [vmem:[%s587 + $0x14c] sm:$0xf] %v674
                %v676 = vld [vmem:[%s586 + $0x308] sm:$0xf]
                %677 = vst [vmem:[%s587 + $0x150] sm:$0xf] %v676
                %v678 = vld [vmem:[%s586 + $0x30c] sm:$0xf]
                %679 = vst [vmem:[%s587 + $0x154] sm:$0xf] %v678
                %v680 = vld [vmem:[%s586 + $0x310] sm:$0xf]
                %681 = vst [vmem:[%s587 + $0x158] sm:$0xf] %v680
                %v682 = vld [vmem:[%s586 + $0x314] sm:$0xf]
                %683 = vst [vmem:[%s587 + $0x15c] sm:$0xf] %v682
                %v684 = vld [vmem:[%s586 + $0x390] sm:$0xf]
                %685 = vst [vmem:[%s587 + $0x180] sm:$0xf] %v684
                %v686 = vld [vmem:[%s586 + $0x394] sm:$0xf]
                %687 = vst [vmem:[%s587 + $0x184] sm:$0xf] %v686
                %v688 = vld [vmem:[%s586 + $0x398] sm:$0xf]
                %689 = vst [vmem:[%s587 + $0x188] sm:$0xf] %v688
                %v690 = vld [vmem:[%s586 + $0x39c] sm:$0xf]
                %691 = vst [vmem:[%s587 + $0x18c] sm:$0xf] %v690
                %v692 = vld [vmem:[%s586 + $0x3a0] sm:$0xf]
                %693 = vst [vmem:[%s587 + $0x190] sm:$0xf] %v692
                %v694 = vld [vmem:[%s586 + $0x3a4] sm:$0xf]
                %695 = vst [vmem:[%s587 + $0x194] sm:$0xf] %v694
                %v696 = vld [vmem:[%s586 + $0x3a8] sm:$0xf]
                %697 = vst [vmem:[%s587 + $0x198] sm:$0xf] %v696
                %v698 = vld [vmem:[%s586 + $0x3ac] sm:$0xf]
                %699 = vst [vmem:[%s587 + $0x19c] sm:$0xf] %v698
                %v700 = vld [vmem:[%s586 + $0x428] sm:$0xf]
                %701 = vst [vmem:[%s587 + $0x1c0] sm:$0xf] %v700
                %v702 = vld [vmem:[%s586 + $0x42c] sm:$0xf]
                %703 = vst [vmem:[%s587 + $0x1c4] sm:$0xf] %v702
                %v704 = vld [vmem:[%s586 + $0x430] sm:$0xf]
                %705 = vst [vmem:[%s587 + $0x1c8] sm:$0xf] %v704
                %v706 = vld [vmem:[%s586 + $0x434] sm:$0xf]
                %707 = vst [vmem:[%s587 + $0x1cc] sm:$0xf] %v706
                %v708 = vld [vmem:[%s586 + $0x438] sm:$0xf]
                %709 = vst [vmem:[%s587 + $0x1d0] sm:$0xf] %v708
                %v710 = vld [vmem:[%s586 + $0x43c] sm:$0xf]
                %711 = vst [vmem:[%s587 + $0x1d4] sm:$0xf] %v710
                %v712 = vld [vmem:[%s586 + $0x440] sm:$0xf]
                %713 = vst [vmem:[%s587 + $0x1d8] sm:$0xf] %v712
                %v714 = vld [vmem:[%s586 + $0x444] sm:$0xf]
                %715 = vst [vmem:[%s587 + $0x1dc] sm:$0xf] %v714
                %s716 = sadd.s32 1, %s585
                %p717 = scmp.ge.s32.totalorder %s716, %s578
                %s718 = scalar_select %p717, 0, %s716
                %s719 = smul.u32 %s718, 32
                %s720 = smul.u32 %s718, 32
                %s721 = scalar_lea.vmem %s569, %s719
                %s722 = scalar_lea.vmem %s558, %s720 [#allocation4]
              $region89: #{tpu_custom_call.1} parent=83 // loop_footer
                %s582 = sadd.s32 %s580, 1
              $region90: #{tpu_custom_call.1} parent=83 // loop_footer_branch
                %579 = sbr.rel target = $region86
              $region91: #{tpu_custom_call.1} parent=83 // loop_exit
                _
              %s723 = sshrl.u32 %s563, 3
              %s724 = sand.u32 %s563, 7
              %s725 = smul.u32 %s723, 8
              %s726 = smul.u32 4, %s725
              %s727 = scalar_lea.vmem %s569, %s726
              %s728 = smul.u32 4, %s725
              %s729 = scalar_lea.vmem %s558, %s728 [#allocation4]
              // While loop
              $region92: #{tpu_custom_call.1} parent=83 // loop_pre_header
                _
              $region93: #{tpu_custom_call.1} parent=83 // loop_header
                %s731 = sphi 0, %s733
                %p732 = scmp.ge.s32.totalorder %s731, %s724
                %s736 = sphi 0, %s757
                %s737 = sphi %s727, %s760
                %s738 = sphi %s729, %s761
              $region94: #{tpu_custom_call.1} parent=83 // loop_header_branch
                %735 = sbr.rel (%p732) target = $region98
              $region95: #{tpu_custom_call.1} parent=83 // loop_body
                %v739 = vld [vmem:[%s737] sm:$0xf]
                %740 = vst [vmem:[%s738] sm:$0xf] %v739
                %v741 = vld [vmem:[%s737 + $0x98] sm:$0xf]
                %742 = vst [vmem:[%s738 + $0x40] sm:$0xf] %v741
                %v743 = vld [vmem:[%s737 + $0x130] sm:$0xf]
                %744 = vst [vmem:[%s738 + $0x80] sm:$0xf] %v743
                %v745 = vld [vmem:[%s737 + $0x1c8] sm:$0xf]
                %746 = vst [vmem:[%s738 + $0xc0] sm:$0xf] %v745
                %v747 = vld [vmem:[%s737 + $0x260] sm:$0xf]
                %748 = vst [vmem:[%s738 + $0x100] sm:$0xf] %v747
                %v749 = vld [vmem:[%s737 + $0x2f8] sm:$0xf]
                %750 = vst [vmem:[%s738 + $0x140] sm:$0xf] %v749
                %v751 = vld [vmem:[%s737 + $0x390] sm:$0xf]
                %752 = vst [vmem:[%s738 + $0x180] sm:$0xf] %v751
                %v753 = vld [vmem:[%s737 + $0x428] sm:$0xf]
                %754 = vst [vmem:[%s738 + $0x1c0] sm:$0xf] %v753
                %s755 = sadd.s32 1, %s736
                %p756 = scmp.ge.s32.totalorder %s755, %s724
                %s757 = scalar_select %p756, 0, %s755
                %s758 = smul.u32 %s757, 4
                %s759 = smul.u32 %s757, 4
                %s760 = scalar_lea.vmem %s727, %s758
                %s761 = scalar_lea.vmem %s729, %s759 [#allocation4]
              $region96: #{tpu_custom_call.1} parent=83 // loop_footer
                %s733 = sadd.s32 %s731, 1
              $region97: #{tpu_custom_call.1} parent=83 // loop_footer_branch
                %730 = sbr.rel target = $region93
              $region98: #{tpu_custom_call.1} parent=83 // loop_exit
                _
            $region84: #{tpu_custom_call.1} parent=75 // pred_fallthru
              _
          $region76: #{tpu_custom_call.1} parent=71 // pred_fallthru
            _
          %989 = vnop
        $region72: #{tpu_custom_call.1} parent=15 // pred_fallthru
          _
        // Predicated region
        $region131: #{tpu_custom_call.1} parent=15 // pred_check
          %p990 = pneg %p100
        $region132: #{tpu_custom_call.1} parent=15 // pred_check_branch
          %992 = sbr.rel (%p990) target = $region134
        $region133: #{tpu_custom_call.1} parent=15 // pred_region
          %p993 = scmp.lt.s32.totalorder %s19, 1
          %s994 = scalar_select %p993, %s19, 1
          %s995 = smul.addr %s994, 8
          %s996 = scalar_lea.vmem %s2, %s995
        $region134: #{tpu_custom_call.1} parent=15 // pred_fallthru
          _
      $region16: #{tpu_custom_call.1} parent=5 // pred_fallthru
        _
      %p997 = scmp.le.s32.totalorder 1, %s12
      %p998 = scmp.lt.s32.totalorder %s12, 7
      %p999 = pnand %p997, %p998
      %p1000 = pneg %p999
      // Predicated region
      $region135: #{tpu_custom_call.1} parent=5 // pred_check
        _
      $region136: #{tpu_custom_call.1} parent=5 // pred_check_branch
        %1002 = sbr.rel (%p999) target = $region138
      $region137: #{tpu_custom_call.1} parent=5 // pred_region
        %s1003 = ssub.s32 %s12, 1
        %s1004 = sand.u32 %s39, 1
        %s1005 = sand.u32 %s39, 1
        %s1006 = smul.addr %s1005, 1024
        %s1007 = scalar_lea.vmem [#allocation3], %s1006
        // Predicated region
        $region139: #{tpu_custom_call.1} parent=137 // pred_check
          %p1008 = pneg %p52
        $region140: #{tpu_custom_call.1} parent=137 // pred_check_branch
          %1010 = sbr.rel (%p1008) target = $region142
        $region141: #{tpu_custom_call.1} parent=137 // pred_region
          _
        $region142: #{tpu_custom_call.1} parent=137 // pred_fallthru
          _
        %s1011 = sand.u32 %s67, 1
        %s1012 = sand.u32 %s67, 1
        %s1013 = smul.addr %s1012, 512
        %s1014 = scalar_lea.vmem [#allocation4], %s1013
        // Predicated region
        $region143: #{tpu_custom_call.1} parent=137 // pred_check
          %p1015 = pneg %p80
        $region144: #{tpu_custom_call.1} parent=137 // pred_check_branch
          %1017 = sbr.rel (%p1015) target = $region146
        $region145: #{tpu_custom_call.1} parent=137 // pred_region
          _
        $region146: #{tpu_custom_call.1} parent=137 // pred_fallthru
          _
        %s1018 = sand.u32 %s39, 1
        %s1019 = sand.u32 %s39, 1
        %s1020 = smul.addr %s1019, 1024
        %s1021 = scalar_lea.vmem [#allocation3], %s1020
        %p1022 = pneg %p52
        %p1023 = pneg %p49
        %s1024 = sand.u32 %s67, 1
        %s1025 = sand.u32 %s67, 1
        %s1026 = smul.addr %s1025, 512
        %s1027 = scalar_lea.vmem [#allocation4], %s1026
        %p1028 = pneg %p80
        %p1029 = pneg %p77
        %p1030 = scmp.lt.s32.totalorder %s21, 1
        %s1031 = scalar_select %p1030, %s21, 1
        %s1032 = smul.addr %s1031, 8
        %s1033 = scalar_lea.vmem %s2, %s1032
        %p1034 = pneg %p106
        %p1035 = pneg %p103
        %p1036 = pneg %p132
        %p1037 = pneg %p129
        %s1038 = sand.u32 %s119, 1
        %s1039 = scalar_lea.sflag [#allocation6], %s1038
        %s1040 = sand.u32 %s119, 1
        %s1041 = smul.addr %s1040, 8
        %s1042 = scalar_lea.vmem [#allocation5], %s1041
        %s1043 = smul.u32 8, %s21
        %s1044 = smul.u32 16, %s22
        %s1045 = ssub.s32 38, %s1044
        %p1046 = scmp.lt.s32.totalorder %s1045, 16
        %s1047 = scalar_select %p1046, %s1045, 16
        %s1048 = smul.u32 512, %s1047
        %s1049 = smul.u32 %s1048, 2
        %s1050 = smul.u32 8, %s21
        %s1051 = smul.u32 16, %s22
        %s1052 = ssub.s32 38, %s1051
        %p1053 = scmp.lt.s32.totalorder %s1052, 16
        %s1054 = scalar_select %p1053, %s1052, 16
        %s1055 = smul.u32 512, %s1054
        %p1056 = scmp.lt.s32.totalorder %s21, 1
        %s1057 = scalar_select %p1056, %s21, 1
        %s1058 = smul.addr %s1057, 8
        %s1059 = scalar_lea.vmem %s2, %s1058
        %p1060 = scmp.eq.s32.totalorder %s22, 0
        // Predicated region
        $region147: #{tpu_custom_call.1} parent=137 // pred_check
          %p1061 = pneg %p1060
        $region148: #{tpu_custom_call.1} parent=137 // pred_check_branch
          %1063 = sbr.rel (%p1061) target = $region150
        $region149: #{tpu_custom_call.1} parent=137 // pred_region
          %1064 = vst [vmem:[#allocation2] sm:$0xff] 0.0
          %1065 = vst [vmem:[#allocation2 + $0x8] sm:$0xff] 0.0
        $region150: #{tpu_custom_call.1} parent=137 // pred_fallthru
          _
        %v1066 = vld [vmem:[%s1007] sm:$0xff]
        %v1067 = vld [vmem:[%s1007 + $0x8] sm:$0xff]
        %v1068 = vld [vmem:[%s1007 + $0x10] sm:$0xff]
        %v1069 = vld [vmem:[%s1007 + $0x18] sm:$0xff]
        %v1070 = vld [vmem:[%s1007 + $0x20] sm:$0xff]
        %v1071 = vld [vmem:[%s1007 + $0x28] sm:$0xff]
        %v1072 = vld [vmem:[%s1007 + $0x30] sm:$0xff]
        %v1073 = vld [vmem:[%s1007 + $0x38] sm:$0xff]
        %v1074 = vld [vmem:[%s1007 + $0x40] sm:$0xff]
        %v1075 = vld [vmem:[%s1007 + $0x48] sm:$0xff]
        %v1076 = vld [vmem:[%s1007 + $0x50] sm:$0xff]
        %v1077 = vld [vmem:[%s1007 + $0x58] sm:$0xff]
        %v1078 = vld [vmem:[%s1007 + $0x60] sm:$0xff]
        %v1079 = vld [vmem:[%s1007 + $0x68] sm:$0xff]
        %v1080 = vld [vmem:[%s1007 + $0x70] sm:$0xff]
        %v1081 = vld [vmem:[%s1007 + $0x78] sm:$0xff]
        %v1082 = vld [vmem:[%s1007 + $0x80] sm:$0xff]
        %v1083 = vld [vmem:[%s1007 + $0x88] sm:$0xff]
        %v1084 = vld [vmem:[%s1007 + $0x90] sm:$0xff]
        %v1085 = vld [vmem:[%s1007 + $0x98] sm:$0xff]
        %v1086 = vld [vmem:[%s1007 + $0xa0] sm:$0xff]
        %v1087 = vld [vmem:[%s1007 + $0xa8] sm:$0xff]
        %v1088 = vld [vmem:[%s1007 + $0xb0] sm:$0xff]
        %v1089 = vld [vmem:[%s1007 + $0xb8] sm:$0xff]
        %v1090 = vld [vmem:[%s1007 + $0xc0] sm:$0xff]
        %v1091 = vld [vmem:[%s1007 + $0xc8] sm:$0xff]
        %v1092 = vld [vmem:[%s1007 + $0xd0] sm:$0xff]
        %v1093 = vld [vmem:[%s1007 + $0xd8] sm:$0xff]
        %v1094 = vld [vmem:[%s1007 + $0xe0] sm:$0xff]
        %v1095 = vld [vmem:[%s1007 + $0xe8] sm:$0xff]
        %v1096 = vld [vmem:[%s1007 + $0xf0] sm:$0xff]
        %v1097 = vld [vmem:[%s1007 + $0xf8] sm:$0xff]
        %v1098 = vld [vmem:[%s1007 + $0x100] sm:$0xff]
        %v1099 = vld [vmem:[%s1007 + $0x108] sm:$0xff]
        %v1100 = vld [vmem:[%s1007 + $0x110] sm:$0xff]
        %v1101 = vld [vmem:[%s1007 + $0x118] sm:$0xff]
        %v1102 = vld [vmem:[%s1007 + $0x120] sm:$0xff]
        %v1103 = vld [vmem:[%s1007 + $0x128] sm:$0xff]
        %v1104 = vld [vmem:[%s1007 + $0x130] sm:$0xff]
        %v1105 = vld [vmem:[%s1007 + $0x138] sm:$0xff]
        %v1106 = vld [vmem:[%s1007 + $0x140] sm:$0xff]
        %v1107 = vld [vmem:[%s1007 + $0x148] sm:$0xff]
        %v1108 = vld [vmem:[%s1007 + $0x150] sm:$0xff]
        %v1109 = vld [vmem:[%s1007 + $0x158] sm:$0xff]
        %v1110 = vld [vmem:[%s1007 + $0x160] sm:$0xff]
        %v1111 = vld [vmem:[%s1007 + $0x168] sm:$0xff]
        %v1112 = vld [vmem:[%s1007 + $0x170] sm:$0xff]
        %v1113 = vld [vmem:[%s1007 + $0x178] sm:$0xff]
        %v1114 = vld [vmem:[%s1007 + $0x180] sm:$0xff]
        %v1115 = vld [vmem:[%s1007 + $0x188] sm:$0xff]
        %v1116 = vld [vmem:[%s1007 + $0x190] sm:$0xff]
        %v1117 = vld [vmem:[%s1007 + $0x198] sm:$0xff]
        %v1118 = vld [vmem:[%s1007 + $0x1a0] sm:$0xff]
        %v1119 = vld [vmem:[%s1007 + $0x1a8] sm:$0xff]
        %v1120 = vld [vmem:[%s1007 + $0x1b0] sm:$0xff]
        %v1121 = vld [vmem:[%s1007 + $0x1b8] sm:$0xff]
        %v1122 = vld [vmem:[%s1007 + $0x1c0] sm:$0xff]
        %v1123 = vld [vmem:[%s1007 + $0x1c8] sm:$0xff]
        %v1124 = vld [vmem:[%s1007 + $0x1d0] sm:$0xff]
        %v1125 = vld [vmem:[%s1007 + $0x1d8] sm:$0xff]
        %v1126 = vld [vmem:[%s1007 + $0x1e0] sm:$0xff]
        %v1127 = vld [vmem:[%s1007 + $0x1e8] sm:$0xff]
        %v1128 = vld [vmem:[%s1007 + $0x1f0] sm:$0xff]
        %v1129 = vld [vmem:[%s1007 + $0x1f8] sm:$0xff]
        %v1130 = vld [vmem:[%s1007 + $0x200] sm:$0xff]
        %v1131 = vld [vmem:[%s1007 + $0x208] sm:$0xff]
        %v1132 = vld [vmem:[%s1007 + $0x210] sm:$0xff]
        %v1133 = vld [vmem:[%s1007 + $0x218] sm:$0xff]
        %v1134 = vld [vmem:[%s1007 + $0x220] sm:$0xff]
        %v1135 = vld [vmem:[%s1007 + $0x228] sm:$0xff]
        %v1136 = vld [vmem:[%s1007 + $0x230] sm:$0xff]
        %v1137 = vld [vmem:[%s1007 + $0x238] sm:$0xff]
        %v1138 = vld [vmem:[%s1007 + $0x240] sm:$0xff]
        %v1139 = vld [vmem:[%s1007 + $0x248] sm:$0xff]
        %v1140 = vld [vmem:[%s1007 + $0x250] sm:$0xff]
        %v1141 = vld [vmem:[%s1007 + $0x258] sm:$0xff]
        %v1142 = vld [vmem:[%s1007 + $0x260] sm:$0xff]
        %v1143 = vld [vmem:[%s1007 + $0x268] sm:$0xff]
        %v1144 = vld [vmem:[%s1007 + $0x270] sm:$0xff]
        %v1145 = vld [vmem:[%s1007 + $0x278] sm:$0xff]
        %v1146 = vld [vmem:[%s1007 + $0x280] sm:$0xff]
        %v1147 = vld [vmem:[%s1007 + $0x288] sm:$0xff]
        %v1148 = vld [vmem:[%s1007 + $0x290] sm:$0xff]
        %v1149 = vld [vmem:[%s1007 + $0x298] sm:$0xff]
        %v1150 = vld [vmem:[%s1007 + $0x2a0] sm:$0xff]
        %v1151 = vld [vmem:[%s1007 + $0x2a8] sm:$0xff]
        %v1152 = vld [vmem:[%s1007 + $0x2b0] sm:$0xff]
        %v1153 = vld [vmem:[%s1007 + $0x2b8] sm:$0xff]
        %v1154 = vld [vmem:[%s1007 + $0x2c0] sm:$0xff]
        %v1155 = vld [vmem:[%s1007 + $0x2c8] sm:$0xff]
        %v1156 = vld [vmem:[%s1007 + $0x2d0] sm:$0xff]
        %v1157 = vld [vmem:[%s1007 + $0x2d8] sm:$0xff]
        %v1158 = vld [vmem:[%s1007 + $0x2e0] sm:$0xff]
        %v1159 = vld [vmem:[%s1007 + $0x2e8] sm:$0xff]
        %v1160 = vld [vmem:[%s1007 + $0x2f0] sm:$0xff]
        %v1161 = vld [vmem:[%s1007 + $0x2f8] sm:$0xff]
        %v1162 = vld [vmem:[%s1007 + $0x300] sm:$0xff]
        %v1163 = vld [vmem:[%s1007 + $0x308] sm:$0xff]
        %v1164 = vld [vmem:[%s1007 + $0x310] sm:$0xff]
        %v1165 = vld [vmem:[%s1007 + $0x318] sm:$0xff]
        %v1166 = vld [vmem:[%s1007 + $0x320] sm:$0xff]
        %v1167 = vld [vmem:[%s1007 + $0x328] sm:$0xff]
        %v1168 = vld [vmem:[%s1007 + $0x330] sm:$0xff]
        %v1169 = vld [vmem:[%s1007 + $0x338] sm:$0xff]
        %v1170 = vld [vmem:[%s1007 + $0x340] sm:$0xff]
        %v1171 = vld [vmem:[%s1007 + $0x348] sm:$0xff]
        %v1172 = vld [vmem:[%s1007 + $0x350] sm:$0xff]
        %v1173 = vld [vmem:[%s1007 + $0x358] sm:$0xff]
        %v1174 = vld [vmem:[%s1007 + $0x360] sm:$0xff]
        %v1175 = vld [vmem:[%s1007 + $0x368] sm:$0xff]
        %v1176 = vld [vmem:[%s1007 + $0x370] sm:$0xff]
        %v1177 = vld [vmem:[%s1007 + $0x378] sm:$0xff]
        %v1178 = vld [vmem:[%s1007 + $0x380] sm:$0xff]
        %v1179 = vld [vmem:[%s1007 + $0x388] sm:$0xff]
        %v1180 = vld [vmem:[%s1007 + $0x390] sm:$0xff]
        %v1181 = vld [vmem:[%s1007 + $0x398] sm:$0xff]
        %v1182 = vld [vmem:[%s1007 + $0x3a0] sm:$0xff]
        %v1183 = vld [vmem:[%s1007 + $0x3a8] sm:$0xff]
        %v1184 = vld [vmem:[%s1007 + $0x3b0] sm:$0xff]
        %v1185 = vld [vmem:[%s1007 + $0x3b8] sm:$0xff]
        %v1186 = vld [vmem:[%s1007 + $0x3c0] sm:$0xff]
        %v1187 = vld [vmem:[%s1007 + $0x3c8] sm:$0xff]
        %v1188 = vld [vmem:[%s1007 + $0x3d0] sm:$0xff]
        %v1189 = vld [vmem:[%s1007 + $0x3d8] sm:$0xff]
        %v1190 = vld [vmem:[%s1007 + $0x3e0] sm:$0xff]
        %v1191 = vld [vmem:[%s1007 + $0x3e8] sm:$0xff]
        %v1192 = vld [vmem:[%s1007 + $0x3f0] sm:$0xff]
        %v1193 = vld [vmem:[%s1007 + $0x3f8] sm:$0xff]
        %v1194 = vunpack.c.l.bf16 %v1066
        %v1195 = vunpack.c.h.bf16 %v1066
        %v1196 = vunpack.c.l.bf16 %v1067
        %v1197 = vunpack.c.h.bf16 %v1067
        %v1198 = vunpack.c.l.bf16 %v1068
        %v1199 = vunpack.c.h.bf16 %v1068
        %v1200 = vunpack.c.l.bf16 %v1069
        %v1201 = vunpack.c.h.bf16 %v1069
        %v1202 = vunpack.c.l.bf16 %v1070
        %v1203 = vunpack.c.h.bf16 %v1070
        %v1204 = vunpack.c.l.bf16 %v1071
        %v1205 = vunpack.c.h.bf16 %v1071
        %v1206 = vunpack.c.l.bf16 %v1072
        %v1207 = vunpack.c.h.bf16 %v1072
        %v1208 = vunpack.c.l.bf16 %v1073
        %v1209 = vunpack.c.h.bf16 %v1073
        %v1210 = vunpack.c.l.bf16 %v1074
        %v1211 = vunpack.c.h.bf16 %v1074
        %v1212 = vunpack.c.l.bf16 %v1075
        %v1213 = vunpack.c.h.bf16 %v1075
        %v1214 = vunpack.c.l.bf16 %v1076
        %v1215 = vunpack.c.h.bf16 %v1076
        %v1216 = vunpack.c.l.bf16 %v1077
        %v1217 = vunpack.c.h.bf16 %v1077
        %v1218 = vunpack.c.l.bf16 %v1078
        %v1219 = vunpack.c.h.bf16 %v1078
        %v1220 = vunpack.c.l.bf16 %v1079
        %v1221 = vunpack.c.h.bf16 %v1079
        %v1222 = vunpack.c.l.bf16 %v1080
        %v1223 = vunpack.c.h.bf16 %v1080
        %v1224 = vunpack.c.l.bf16 %v1081
        %v1225 = vunpack.c.h.bf16 %v1081
        %v1226 = vunpack.c.l.bf16 %v1082
        %v1227 = vunpack.c.h.bf16 %v1082
        %v1228 = vunpack.c.l.bf16 %v1083
        %v1229 = vunpack.c.h.bf16 %v1083
        %v1230 = vunpack.c.l.bf16 %v1084
        %v1231 = vunpack.c.h.bf16 %v1084
        %v1232 = vunpack.c.l.bf16 %v1085
        %v1233 = vunpack.c.h.bf16 %v1085
        %v1234 = vunpack.c.l.bf16 %v1086
        %v1235 = vunpack.c.h.bf16 %v1086
        %v1236 = vunpack.c.l.bf16 %v1087
        %v1237 = vunpack.c.h.bf16 %v1087
        %v1238 = vunpack.c.l.bf16 %v1088
        %v1239 = vunpack.c.h.bf16 %v1088
        %v1240 = vunpack.c.l.bf16 %v1089
        %v1241 = vunpack.c.h.bf16 %v1089
        %v1242 = vunpack.c.l.bf16 %v1090
        %v1243 = vunpack.c.h.bf16 %v1090
        %v1244 = vunpack.c.l.bf16 %v1091
        %v1245 = vunpack.c.h.bf16 %v1091
        %v1246 = vunpack.c.l.bf16 %v1092
        %v1247 = vunpack.c.h.bf16 %v1092
        %v1248 = vunpack.c.l.bf16 %v1093
        %v1249 = vunpack.c.h.bf16 %v1093
        %v1250 = vunpack.c.l.bf16 %v1094
        %v1251 = vunpack.c.h.bf16 %v1094
        %v1252 = vunpack.c.l.bf16 %v1095
        %v1253 = vunpack.c.h.bf16 %v1095
        %v1254 = vunpack.c.l.bf16 %v1096
        %v1255 = vunpack.c.h.bf16 %v1096
        %v1256 = vunpack.c.l.bf16 %v1097
        %v1257 = vunpack.c.h.bf16 %v1097
        %v1258 = vunpack.c.l.bf16 %v1098
        %v1259 = vunpack.c.h.bf16 %v1098
        %v1260 = vunpack.c.l.bf16 %v1099
        %v1261 = vunpack.c.h.bf16 %v1099
        %v1262 = vunpack.c.l.bf16 %v1100
        %v1263 = vunpack.c.h.bf16 %v1100
        %v1264 = vunpack.c.l.bf16 %v1101
        %v1265 = vunpack.c.h.bf16 %v1101
        %v1266 = vunpack.c.l.bf16 %v1102
        %v1267 = vunpack.c.h.bf16 %v1102
        %v1268 = vunpack.c.l.bf16 %v1103
        %v1269 = vunpack.c.h.bf16 %v1103
        %v1270 = vunpack.c.l.bf16 %v1104
        %v1271 = vunpack.c.h.bf16 %v1104
        %v1272 = vunpack.c.l.bf16 %v1105
        %v1273 = vunpack.c.h.bf16 %v1105
        %v1274 = vunpack.c.l.bf16 %v1106
        %v1275 = vunpack.c.h.bf16 %v1106
        %v1276 = vunpack.c.l.bf16 %v1107
        %v1277 = vunpack.c.h.bf16 %v1107
        %v1278 = vunpack.c.l.bf16 %v1108
        %v1279 = vunpack.c.h.bf16 %v1108
        %v1280 = vunpack.c.l.bf16 %v1109
        %v1281 = vunpack.c.h.bf16 %v1109
        %v1282 = vunpack.c.l.bf16 %v1110
        %v1283 = vunpack.c.h.bf16 %v1110
        %v1284 = vunpack.c.l.bf16 %v1111
        %v1285 = vunpack.c.h.bf16 %v1111
        %v1286 = vunpack.c.l.bf16 %v1112
        %v1287 = vunpack.c.h.bf16 %v1112
        %v1288 = vunpack.c.l.bf16 %v1113
        %v1289 = vunpack.c.h.bf16 %v1113
        %v1290 = vunpack.c.l.bf16 %v1114
        %v1291 = vunpack.c.h.bf16 %v1114
        %v1292 = vunpack.c.l.bf16 %v1115
        %v1293 = vunpack.c.h.bf16 %v1115
        %v1294 = vunpack.c.l.bf16 %v1116
        %v1295 = vunpack.c.h.bf16 %v1116
        %v1296 = vunpack.c.l.bf16 %v1117
        %v1297 = vunpack.c.h.bf16 %v1117
        %v1298 = vunpack.c.l.bf16 %v1118
        %v1299 = vunpack.c.h.bf16 %v1118
        %v1300 = vunpack.c.l.bf16 %v1119
        %v1301 = vunpack.c.h.bf16 %v1119
        %v1302 = vunpack.c.l.bf16 %v1120
        %v1303 = vunpack.c.h.bf16 %v1120
        %v1304 = vunpack.c.l.bf16 %v1121
        %v1305 = vunpack.c.h.bf16 %v1121
        %v1306 = vunpack.c.l.bf16 %v1122
        %v1307 = vunpack.c.h.bf16 %v1122
        %v1308 = vunpack.c.l.bf16 %v1123
        %v1309 = vunpack.c.h.bf16 %v1123
        %v1310 = vunpack.c.l.bf16 %v1124
        %v1311 = vunpack.c.h.bf16 %v1124
        %v1312 = vunpack.c.l.bf16 %v1125
        %v1313 = vunpack.c.h.bf16 %v1125
        %v1314 = vunpack.c.l.bf16 %v1126
        %v1315 = vunpack.c.h.bf16 %v1126
        %v1316 = vunpack.c.l.bf16 %v1127
        %v1317 = vunpack.c.h.bf16 %v1127
        %v1318 = vunpack.c.l.bf16 %v1128
        %v1319 = vunpack.c.h.bf16 %v1128
        %v1320 = vunpack.c.l.bf16 %v1129
        %v1321 = vunpack.c.h.bf16 %v1129
        %v1322 = vunpack.c.l.bf16 %v1130
        %v1323 = vunpack.c.h.bf16 %v1130
        %v1324 = vunpack.c.l.bf16 %v1131
        %v1325 = vunpack.c.h.bf16 %v1131
        %v1326 = vunpack.c.l.bf16 %v1132
        %v1327 = vunpack.c.h.bf16 %v1132
        %v1328 = vunpack.c.l.bf16 %v1133
        %v1329 = vunpack.c.h.bf16 %v1133
        %v1330 = vunpack.c.l.bf16 %v1134
        %v1331 = vunpack.c.h.bf16 %v1134
        %v1332 = vunpack.c.l.bf16 %v1135
        %v1333 = vunpack.c.h.bf16 %v1135
        %v1334 = vunpack.c.l.bf16 %v1136
        %v1335 = vunpack.c.h.bf16 %v1136
        %v1336 = vunpack.c.l.bf16 %v1137
        %v1337 = vunpack.c.h.bf16 %v1137
        %v1338 = vunpack.c.l.bf16 %v1138
        %v1339 = vunpack.c.h.bf16 %v1138
        %v1340 = vunpack.c.l.bf16 %v1139
        %v1341 = vunpack.c.h.bf16 %v1139
        %v1342 = vunpack.c.l.bf16 %v1140
        %v1343 = vunpack.c.h.bf16 %v1140
        %v1344 = vunpack.c.l.bf16 %v1141
        %v1345 = vunpack.c.h.bf16 %v1141
        %v1346 = vunpack.c.l.bf16 %v1142
        %v1347 = vunpack.c.h.bf16 %v1142
        %v1348 = vunpack.c.l.bf16 %v1143
        %v1349 = vunpack.c.h.bf16 %v1143
        %v1350 = vunpack.c.l.bf16 %v1144
        %v1351 = vunpack.c.h.bf16 %v1144
        %v1352 = vunpack.c.l.bf16 %v1145
        %v1353 = vunpack.c.h.bf16 %v1145
        %v1354 = vunpack.c.l.bf16 %v1146
        %v1355 = vunpack.c.h.bf16 %v1146
        %v1356 = vunpack.c.l.bf16 %v1147
        %v1357 = vunpack.c.h.bf16 %v1147
        %v1358 = vunpack.c.l.bf16 %v1148
        %v1359 = vunpack.c.h.bf16 %v1148
        %v1360 = vunpack.c.l.bf16 %v1149
        %v1361 = vunpack.c.h.bf16 %v1149
        %v1362 = vunpack.c.l.bf16 %v1150
        %v1363 = vunpack.c.h.bf16 %v1150
        %v1364 = vunpack.c.l.bf16 %v1151
        %v1365 = vunpack.c.h.bf16 %v1151
        %v1366 = vunpack.c.l.bf16 %v1152
        %v1367 = vunpack.c.h.bf16 %v1152
        %v1368 = vunpack.c.l.bf16 %v1153
        %v1369 = vunpack.c.h.bf16 %v1153
        %v1370 = vunpack.c.l.bf16 %v1154
        %v1371 = vunpack.c.h.bf16 %v1154
        %v1372 = vunpack.c.l.bf16 %v1155
        %v1373 = vunpack.c.h.bf16 %v1155
        %v1374 = vunpack.c.l.bf16 %v1156
        %v1375 = vunpack.c.h.bf16 %v1156
        %v1376 = vunpack.c.l.bf16 %v1157
        %v1377 = vunpack.c.h.bf16 %v1157
        %v1378 = vunpack.c.l.bf16 %v1158
        %v1379 = vunpack.c.h.bf16 %v1158
        %v1380 = vunpack.c.l.bf16 %v1159
        %v1381 = vunpack.c.h.bf16 %v1159
        %v1382 = vunpack.c.l.bf16 %v1160
        %v1383 = vunpack.c.h.bf16 %v1160
        %v1384 = vunpack.c.l.bf16 %v1161
        %v1385 = vunpack.c.h.bf16 %v1161
        %v1386 = vunpack.c.l.bf16 %v1162
        %v1387 = vunpack.c.h.bf16 %v1162
        %v1388 = vunpack.c.l.bf16 %v1163
        %v1389 = vunpack.c.h.bf16 %v1163
        %v1390 = vunpack.c.l.bf16 %v1164
        %v1391 = vunpack.c.h.bf16 %v1164
        %v1392 = vunpack.c.l.bf16 %v1165
        %v1393 = vunpack.c.h.bf16 %v1165
        %v1394 = vunpack.c.l.bf16 %v1166
        %v1395 = vunpack.c.h.bf16 %v1166
        %v1396 = vunpack.c.l.bf16 %v1167
        %v1397 = vunpack.c.h.bf16 %v1167
        %v1398 = vunpack.c.l.bf16 %v1168
        %v1399 = vunpack.c.h.bf16 %v1168
        %v1400 = vunpack.c.l.bf16 %v1169
        %v1401 = vunpack.c.h.bf16 %v1169
        %v1402 = vunpack.c.l.bf16 %v1170
        %v1403 = vunpack.c.h.bf16 %v1170
        %v1404 = vunpack.c.l.bf16 %v1171
        %v1405 = vunpack.c.h.bf16 %v1171
        %v1406 = vunpack.c.l.bf16 %v1172
        %v1407 = vunpack.c.h.bf16 %v1172
        %v1408 = vunpack.c.l.bf16 %v1173
        %v1409 = vunpack.c.h.bf16 %v1173
        %v1410 = vunpack.c.l.bf16 %v1174
        %v1411 = vunpack.c.h.bf16 %v1174
        %v1412 = vunpack.c.l.bf16 %v1175
        %v1413 = vunpack.c.h.bf16 %v1175
        %v1414 = vunpack.c.l.bf16 %v1176
        %v1415 = vunpack.c.h.bf16 %v1176
        %v1416 = vunpack.c.l.bf16 %v1177
        %v1417 = vunpack.c.h.bf16 %v1177
        %v1418 = vunpack.c.l.bf16 %v1178
        %v1419 = vunpack.c.h.bf16 %v1178
        %v1420 = vunpack.c.l.bf16 %v1179
        %v1421 = vunpack.c.h.bf16 %v1179
        %v1422 = vunpack.c.l.bf16 %v1180
        %v1423 = vunpack.c.h.bf16 %v1180
        %v1424 = vunpack.c.l.bf16 %v1181
        %v1425 = vunpack.c.h.bf16 %v1181
        %v1426 = vunpack.c.l.bf16 %v1182
        %v1427 = vunpack.c.h.bf16 %v1182
        %v1428 = vunpack.c.l.bf16 %v1183
        %v1429 = vunpack.c.h.bf16 %v1183
        %v1430 = vunpack.c.l.bf16 %v1184
        %v1431 = vunpack.c.h.bf16 %v1184
        %v1432 = vunpack.c.l.bf16 %v1185
        %v1433 = vunpack.c.h.bf16 %v1185
        %v1434 = vunpack.c.l.bf16 %v1186
        %v1435 = vunpack.c.h.bf16 %v1186
        %v1436 = vunpack.c.l.bf16 %v1187
        %v1437 = vunpack.c.h.bf16 %v1187
        %v1438 = vunpack.c.l.bf16 %v1188
        %v1439 = vunpack.c.h.bf16 %v1188
        %v1440 = vunpack.c.l.bf16 %v1189
        %v1441 = vunpack.c.h.bf16 %v1189
        %v1442 = vunpack.c.l.bf16 %v1190
        %v1443 = vunpack.c.h.bf16 %v1190
        %v1444 = vunpack.c.l.bf16 %v1191
        %v1445 = vunpack.c.h.bf16 %v1191
        %v1446 = vunpack.c.l.bf16 %v1192
        %v1447 = vunpack.c.h.bf16 %v1192
        %v1448 = vunpack.c.l.bf16 %v1193
        %v1449 = vunpack.c.h.bf16 %v1193
        %v1450 = vld [vmem:[%s1014] sm:$0xf]
        %v1451 = vld [vmem:[%s1014 + $0x4] sm:$0xf]
        %v1452 = vld [vmem:[%s1014 + $0x8] sm:$0xf]
        %v1453 = vld [vmem:[%s1014 + $0xc] sm:$0xf]
        %v1454 = vld [vmem:[%s1014 + $0x10] sm:$0xf]
        %v1455 = vld [vmem:[%s1014 + $0x14] sm:$0xf]
        %v1456 = vld [vmem:[%s1014 + $0x18] sm:$0xf]
        %v1457 = vld [vmem:[%s1014 + $0x1c] sm:$0xf]
        %v1458 = vld [vmem:[%s1014 + $0x20] sm:$0xf]
        %v1459 = vld [vmem:[%s1014 + $0x24] sm:$0xf]
        %v1460 = vld [vmem:[%s1014 + $0x28] sm:$0xf]
        %v1461 = vld [vmem:[%s1014 + $0x2c] sm:$0xf]
        %v1462 = vld [vmem:[%s1014 + $0x30] sm:$0xf]
        %v1463 = vld [vmem:[%s1014 + $0x34] sm:$0xf]
        %v1464 = vld [vmem:[%s1014 + $0x38] sm:$0xf]
        %v1465 = vld [vmem:[%s1014 + $0x3c] sm:$0xf]
        %v1466 = vld [vmem:[%s1014 + $0x40] sm:$0xf]
        %v1467 = vld [vmem:[%s1014 + $0x44] sm:$0xf]
        %v1468 = vld [vmem:[%s1014 + $0x48] sm:$0xf]
        %v1469 = vld [vmem:[%s1014 + $0x4c] sm:$0xf]
        %v1470 = vld [vmem:[%s1014 + $0x50] sm:$0xf]
        %v1471 = vld [vmem:[%s1014 + $0x54] sm:$0xf]
        %v1472 = vld [vmem:[%s1014 + $0x58] sm:$0xf]
        %v1473 = vld [vmem:[%s1014 + $0x5c] sm:$0xf]
        %v1474 = vld [vmem:[%s1014 + $0x60] sm:$0xf]
        %v1475 = vld [vmem:[%s1014 + $0x64] sm:$0xf]
        %v1476 = vld [vmem:[%s1014 + $0x68] sm:$0xf]
        %v1477 = vld [vmem:[%s1014 + $0x6c] sm:$0xf]
        %v1478 = vld [vmem:[%s1014 + $0x70] sm:$0xf]
        %v1479 = vld [vmem:[%s1014 + $0x74] sm:$0xf]
        %v1480 = vld [vmem:[%s1014 + $0x78] sm:$0xf]
        %v1481 = vld [vmem:[%s1014 + $0x7c] sm:$0xf]
        %v1482 = vld [vmem:[%s1014 + $0x80] sm:$0xf]
        %v1483 = vld [vmem:[%s1014 + $0x84] sm:$0xf]
        %v1484 = vld [vmem:[%s1014 + $0x88] sm:$0xf]
        %v1485 = vld [vmem:[%s1014 + $0x8c] sm:$0xf]
        %v1486 = vld [vmem:[%s1014 + $0x90] sm:$0xf]
        %v1487 = vld [vmem:[%s1014 + $0x94] sm:$0xf]
        %v1488 = vld [vmem:[%s1014 + $0x98] sm:$0xf]
        %v1489 = vld [vmem:[%s1014 + $0x9c] sm:$0xf]
        %v1490 = vld [vmem:[%s1014 + $0xa0] sm:$0xf]
        %v1491 = vld [vmem:[%s1014 + $0xa4] sm:$0xf]
        %v1492 = vld [vmem:[%s1014 + $0xa8] sm:$0xf]
        %v1493 = vld [vmem:[%s1014 + $0xac] sm:$0xf]
        %v1494 = vld [vmem:[%s1014 + $0xb0] sm:$0xf]
        %v1495 = vld [vmem:[%s1014 + $0xb4] sm:$0xf]
        %v1496 = vld [vmem:[%s1014 + $0xb8] sm:$0xf]
        %v1497 = vld [vmem:[%s1014 + $0xbc] sm:$0xf]
        %v1498 = vld [vmem:[%s1014 + $0xc0] sm:$0xf]
        %v1499 = vld [vmem:[%s1014 + $0xc4] sm:$0xf]
        %v1500 = vld [vmem:[%s1014 + $0xc8] sm:$0xf]
        %v1501 = vld [vmem:[%s1014 + $0xcc] sm:$0xf]
        %v1502 = vld [vmem:[%s1014 + $0xd0] sm:$0xf]
        %v1503 = vld [vmem:[%s1014 + $0xd4] sm:$0xf]
        %v1504 = vld [vmem:[%s1014 + $0xd8] sm:$0xf]
        %v1505 = vld [vmem:[%s1014 + $0xdc] sm:$0xf]
        %v1506 = vld [vmem:[%s1014 + $0xe0] sm:$0xf]
        %v1507 = vld [vmem:[%s1014 + $0xe4] sm:$0xf]
        %v1508 = vld [vmem:[%s1014 + $0xe8] sm:$0xf]
        %v1509 = vld [vmem:[%s1014 + $0xec] sm:$0xf]
        %v1510 = vld [vmem:[%s1014 + $0xf0] sm:$0xf]
        %v1511 = vld [vmem:[%s1014 + $0xf4] sm:$0xf]
        %v1512 = vld [vmem:[%s1014 + $0xf8] sm:$0xf]
        %v1513 = vld [vmem:[%s1014 + $0xfc] sm:$0xf]
        %v1514 = vld [vmem:[%s1014 + $0x100] sm:$0xf]
        %v1515 = vld [vmem:[%s1014 + $0x104] sm:$0xf]
        %v1516 = vld [vmem:[%s1014 + $0x108] sm:$0xf]
        %v1517 = vld [vmem:[%s1014 + $0x10c] sm:$0xf]
        %v1518 = vld [vmem:[%s1014 + $0x110] sm:$0xf]
        %v1519 = vld [vmem:[%s1014 + $0x114] sm:$0xf]
        %v1520 = vld [vmem:[%s1014 + $0x118] sm:$0xf]
        %v1521 = vld [vmem:[%s1014 + $0x11c] sm:$0xf]
        %v1522 = vld [vmem:[%s1014 + $0x120] sm:$0xf]
        %v1523 = vld [vmem:[%s1014 + $0x124] sm:$0xf]
        %v1524 = vld [vmem:[%s1014 + $0x128] sm:$0xf]
        %v1525 = vld [vmem:[%s1014 + $0x12c] sm:$0xf]
        %v1526 = vld [vmem:[%s1014 + $0x130] sm:$0xf]
        %v1527 = vld [vmem:[%s1014 + $0x134] sm:$0xf]
        %v1528 = vld [vmem:[%s1014 + $0x138] sm:$0xf]
        %v1529 = vld [vmem:[%s1014 + $0x13c] sm:$0xf]
        %v1530 = vld [vmem:[%s1014 + $0x140] sm:$0xf]
        %v1531 = vld [vmem:[%s1014 + $0x144] sm:$0xf]
        %v1532 = vld [vmem:[%s1014 + $0x148] sm:$0xf]
        %v1533 = vld [vmem:[%s1014 + $0x14c] sm:$0xf]
        %v1534 = vld [vmem:[%s1014 + $0x150] sm:$0xf]
        %v1535 = vld [vmem:[%s1014 + $0x154] sm:$0xf]
        %v1536 = vld [vmem:[%s1014 + $0x158] sm:$0xf]
        %v1537 = vld [vmem:[%s1014 + $0x15c] sm:$0xf]
        %v1538 = vld [vmem:[%s1014 + $0x160] sm:$0xf]
        %v1539 = vld [vmem:[%s1014 + $0x164] sm:$0xf]
        %v1540 = vld [vmem:[%s1014 + $0x168] sm:$0xf]
        %v1541 = vld [vmem:[%s1014 + $0x16c] sm:$0xf]
        %v1542 = vld [vmem:[%s1014 + $0x170] sm:$0xf]
        %v1543 = vld [vmem:[%s1014 + $0x174] sm:$0xf]
        %v1544 = vld [vmem:[%s1014 + $0x178] sm:$0xf]
        %v1545 = vld [vmem:[%s1014 + $0x17c] sm:$0xf]
        %v1546 = vld [vmem:[%s1014 + $0x180] sm:$0xf]
        %v1547 = vld [vmem:[%s1014 + $0x184] sm:$0xf]
        %v1548 = vld [vmem:[%s1014 + $0x188] sm:$0xf]
        %v1549 = vld [vmem:[%s1014 + $0x18c] sm:$0xf]
        %v1550 = vld [vmem:[%s1014 + $0x190] sm:$0xf]
        %v1551 = vld [vmem:[%s1014 + $0x194] sm:$0xf]
        %v1552 = vld [vmem:[%s1014 + $0x198] sm:$0xf]
        %v1553 = vld [vmem:[%s1014 + $0x19c] sm:$0xf]
        %v1554 = vld [vmem:[%s1014 + $0x1a0] sm:$0xf]
        %v1555 = vld [vmem:[%s1014 + $0x1a4] sm:$0xf]
        %v1556 = vld [vmem:[%s1014 + $0x1a8] sm:$0xf]
        %v1557 = vld [vmem:[%s1014 + $0x1ac] sm:$0xf]
        %v1558 = vld [vmem:[%s1014 + $0x1b0] sm:$0xf]
        %v1559 = vld [vmem:[%s1014 + $0x1b4] sm:$0xf]
        %v1560 = vld [vmem:[%s1014 + $0x1b8] sm:$0xf]
        %v1561 = vld [vmem:[%s1014 + $0x1bc] sm:$0xf]
        %v1562 = vld [vmem:[%s1014 + $0x1c0] sm:$0xf]
        %v1563 = vld [vmem:[%s1014 + $0x1c4] sm:$0xf]
        %v1564 = vld [vmem:[%s1014 + $0x1c8] sm:$0xf]
        %v1565 = vld [vmem:[%s1014 + $0x1cc] sm:$0xf]
        %v1566 = vld [vmem:[%s1014 + $0x1d0] sm:$0xf]
        %v1567 = vld [vmem:[%s1014 + $0x1d4] sm:$0xf]
        %v1568 = vld [vmem:[%s1014 + $0x1d8] sm:$0xf]
        %v1569 = vld [vmem:[%s1014 + $0x1dc] sm:$0xf]
        %v1570 = vld [vmem:[%s1014 + $0x1e0] sm:$0xf]
        %v1571 = vld [vmem:[%s1014 + $0x1e4] sm:$0xf]
        %v1572 = vld [vmem:[%s1014 + $0x1e8] sm:$0xf]
        %v1573 = vld [vmem:[%s1014 + $0x1ec] sm:$0xf]
        %v1574 = vld [vmem:[%s1014 + $0x1f0] sm:$0xf]
        %v1575 = vld [vmem:[%s1014 + $0x1f4] sm:$0xf]
        %v1576 = vld [vmem:[%s1014 + $0x1f8] sm:$0xf]
        %v1577 = vld [vmem:[%s1014 + $0x1fc] sm:$0xf]
        %v1578 = vunpack.c.l.bf16 %v1450
        %v1579 = vunpack.c.l.bf16 %v1451
        %v1580 = vunpack.c.l.bf16 %v1452
        %v1581 = vunpack.c.l.bf16 %v1453
        %v1582 = vunpack.c.l.bf16 %v1454
        %v1583 = vunpack.c.l.bf16 %v1455
        %v1584 = vunpack.c.l.bf16 %v1456
        %v1585 = vunpack.c.l.bf16 %v1457
        %v1586 = vunpack.c.l.bf16 %v1458
        %v1587 = vunpack.c.l.bf16 %v1459
        %v1588 = vunpack.c.l.bf16 %v1460
        %v1589 = vunpack.c.l.bf16 %v1461
        %v1590 = vunpack.c.l.bf16 %v1462
        %v1591 = vunpack.c.l.bf16 %v1463
        %v1592 = vunpack.c.l.bf16 %v1464
        %v1593 = vunpack.c.l.bf16 %v1465
        %v1594 = vunpack.c.l.bf16 %v1466
        %v1595 = vunpack.c.l.bf16 %v1467
        %v1596 = vunpack.c.l.bf16 %v1468
        %v1597 = vunpack.c.l.bf16 %v1469
        %v1598 = vunpack.c.l.bf16 %v1470
        %v1599 = vunpack.c.l.bf16 %v1471
        %v1600 = vunpack.c.l.bf16 %v1472
        %v1601 = vunpack.c.l.bf16 %v1473
        %v1602 = vunpack.c.l.bf16 %v1474
        %v1603 = vunpack.c.l.bf16 %v1475
        %v1604 = vunpack.c.l.bf16 %v1476
        %v1605 = vunpack.c.l.bf16 %v1477
        %v1606 = vunpack.c.l.bf16 %v1478
        %v1607 = vunpack.c.l.bf16 %v1479
        %v1608 = vunpack.c.l.bf16 %v1480
        %v1609 = vunpack.c.l.bf16 %v1481
        %v1610 = vunpack.c.l.bf16 %v1482
        %v1611 = vunpack.c.l.bf16 %v1483
        %v1612 = vunpack.c.l.bf16 %v1484
        %v1613 = vunpack.c.l.bf16 %v1485
        %v1614 = vunpack.c.l.bf16 %v1486
        %v1615 = vunpack.c.l.bf16 %v1487
        %v1616 = vunpack.c.l.bf16 %v1488
        %v1617 = vunpack.c.l.bf16 %v1489
        %v1618 = vunpack.c.l.bf16 %v1490
        %v1619 = vunpack.c.l.bf16 %v1491
        %v1620 = vunpack.c.l.bf16 %v1492
        %v1621 = vunpack.c.l.bf16 %v1493
        %v1622 = vunpack.c.l.bf16 %v1494
        %v1623 = vunpack.c.l.bf16 %v1495
        %v1624 = vunpack.c.l.bf16 %v1496
        %v1625 = vunpack.c.l.bf16 %v1497
        %v1626 = vunpack.c.l.bf16 %v1498
        %v1627 = vunpack.c.l.bf16 %v1499
        %v1628 = vunpack.c.l.bf16 %v1500
        %v1629 = vunpack.c.l.bf16 %v1501
        %v1630 = vunpack.c.l.bf16 %v1502
        %v1631 = vunpack.c.l.bf16 %v1503
        %v1632 = vunpack.c.l.bf16 %v1504
        %v1633 = vunpack.c.l.bf16 %v1505
        %v1634 = vunpack.c.l.bf16 %v1506
        %v1635 = vunpack.c.l.bf16 %v1507
        %v1636 = vunpack.c.l.bf16 %v1508
        %v1637 = vunpack.c.l.bf16 %v1509
        %v1638 = vunpack.c.l.bf16 %v1510
        %v1639 = vunpack.c.l.bf16 %v1511
        %v1640 = vunpack.c.l.bf16 %v1512
        %v1641 = vunpack.c.l.bf16 %v1513
        %v1642 = vunpack.c.l.bf16 %v1514
        %v1643 = vunpack.c.l.bf16 %v1515
        %v1644 = vunpack.c.l.bf16 %v1516
        %v1645 = vunpack.c.l.bf16 %v1517
        %v1646 = vunpack.c.l.bf16 %v1518
        %v1647 = vunpack.c.l.bf16 %v1519
        %v1648 = vunpack.c.l.bf16 %v1520
        %v1649 = vunpack.c.l.bf16 %v1521
        %v1650 = vunpack.c.l.bf16 %v1522
        %v1651 = vunpack.c.l.bf16 %v1523
        %v1652 = vunpack.c.l.bf16 %v1524
        %v1653 = vunpack.c.l.bf16 %v1525
        %v1654 = vunpack.c.l.bf16 %v1526
        %v1655 = vunpack.c.l.bf16 %v1527
        %v1656 = vunpack.c.l.bf16 %v1528
        %v1657 = vunpack.c.l.bf16 %v1529
        %v1658 = vunpack.c.l.bf16 %v1530
        %v1659 = vunpack.c.l.bf16 %v1531
        %v1660 = vunpack.c.l.bf16 %v1532
        %v1661 = vunpack.c.l.bf16 %v1533
        %v1662 = vunpack.c.l.bf16 %v1534
        %v1663 = vunpack.c.l.bf16 %v1535
        %v1664 = vunpack.c.l.bf16 %v1536
        %v1665 = vunpack.c.l.bf16 %v1537
        %v1666 = vunpack.c.l.bf16 %v1538
        %v1667 = vunpack.c.l.bf16 %v1539
        %v1668 = vunpack.c.l.bf16 %v1540
        %v1669 = vunpack.c.l.bf16 %v1541
        %v1670 = vunpack.c.l.bf16 %v1542
        %v1671 = vunpack.c.l.bf16 %v1543
        %v1672 = vunpack.c.l.bf16 %v1544
        %v1673 = vunpack.c.l.bf16 %v1545
        %v1674 = vunpack.c.l.bf16 %v1546
        %v1675 = vunpack.c.l.bf16 %v1547
        %v1676 = vunpack.c.l.bf16 %v1548
        %v1677 = vunpack.c.l.bf16 %v1549
        %v1678 = vunpack.c.l.bf16 %v1550
        %v1679 = vunpack.c.l.bf16 %v1551
        %v1680 = vunpack.c.l.bf16 %v1552
        %v1681 = vunpack.c.l.bf16 %v1553
        %v1682 = vunpack.c.l.bf16 %v1554
        %v1683 = vunpack.c.l.bf16 %v1555
        %v1684 = vunpack.c.l.bf16 %v1556
        %v1685 = vunpack.c.l.bf16 %v1557
        %v1686 = vunpack.c.l.bf16 %v1558
        %v1687 = vunpack.c.l.bf16 %v1559
        %v1688 = vunpack.c.l.bf16 %v1560
        %v1689 = vunpack.c.l.bf16 %v1561
        %v1690 = vunpack.c.l.bf16 %v1562
        %v1691 = vunpack.c.l.bf16 %v1563
        %v1692 = vunpack.c.l.bf16 %v1564
        %v1693 = vunpack.c.l.bf16 %v1565
        %v1694 = vunpack.c.l.bf16 %v1566
        %v1695 = vunpack.c.l.bf16 %v1567
        %v1696 = vunpack.c.l.bf16 %v1568
        %v1697 = vunpack.c.l.bf16 %v1569
        %v1698 = vunpack.c.l.bf16 %v1570
        %v1699 = vunpack.c.l.bf16 %v1571
        %v1700 = vunpack.c.l.bf16 %v1572
        %v1701 = vunpack.c.l.bf16 %v1573
        %v1702 = vunpack.c.l.bf16 %v1574
        %v1703 = vunpack.c.l.bf16 %v1575
        %v1704 = vunpack.c.l.bf16 %v1576
        %v1705 = vunpack.c.l.bf16 %v1577
        %1707 = vset.pattern.permute.xlu0 0
        %1708 = vperm.xlu0 %1707, %v1578
        %v1709 = vpop.permute.xlu0 %1708
        %1712 = vset.pattern.permute.xlu0 0
        %1713 = vperm.xlu0 %1712, %v1579
        %v1714 = vpop.permute.xlu0 %1713
        %1717 = vset.pattern.permute.xlu0 0
        %1718 = vperm.xlu0 %1717, %v1580
        %v1719 = vpop.permute.xlu0 %1718
        %1722 = vset.pattern.permute.xlu0 0
        %1723 = vperm.xlu0 %1722, %v1581
        %v1724 = vpop.permute.xlu0 %1723
        %1727 = vset.pattern.permute.xlu0 0
        %1728 = vperm.xlu0 %1727, %v1582
        %v1729 = vpop.permute.xlu0 %1728
        %1732 = vset.pattern.permute.xlu0 0
        %1733 = vperm.xlu0 %1732, %v1583
        %v1734 = vpop.permute.xlu0 %1733
        %1737 = vset.pattern.permute.xlu0 0
        %1738 = vperm.xlu0 %1737, %v1584
        %v1739 = vpop.permute.xlu0 %1738
        %1742 = vset.pattern.permute.xlu0 0
        %1743 = vperm.xlu0 %1742, %v1585
        %v1744 = vpop.permute.xlu0 %1743
        %1747 = vset.pattern.permute.xlu0 0
        %1748 = vperm.xlu0 %1747, %v1586
        %v1749 = vpop.permute.xlu0 %1748
        %1752 = vset.pattern.permute.xlu0 0
        %1753 = vperm.xlu0 %1752, %v1587
        %v1754 = vpop.permute.xlu0 %1753
        %1757 = vset.pattern.permute.xlu0 0
        %1758 = vperm.xlu0 %1757, %v1588
        %v1759 = vpop.permute.xlu0 %1758
        %1762 = vset.pattern.permute.xlu0 0
        %1763 = vperm.xlu0 %1762, %v1589
        %v1764 = vpop.permute.xlu0 %1763
        %1767 = vset.pattern.permute.xlu0 0
        %1768 = vperm.xlu0 %1767, %v1590
        %v1769 = vpop.permute.xlu0 %1768
        %1772 = vset.pattern.permute.xlu0 0
        %1773 = vperm.xlu0 %1772, %v1591
        %v1774 = vpop.permute.xlu0 %1773
        %1777 = vset.pattern.permute.xlu0 0
        %1778 = vperm.xlu0 %1777, %v1592
        %v1779 = vpop.permute.xlu0 %1778
        %1782 = vset.pattern.permute.xlu0 0
        %1783 = vperm.xlu0 %1782, %v1593
        %v1784 = vpop.permute.xlu0 %1783
        %1787 = vset.pattern.permute.xlu0 0
        %1788 = vperm.xlu0 %1787, %v1594
        %v1789 = vpop.permute.xlu0 %1788
        %1792 = vset.pattern.permute.xlu0 0
        %1793 = vperm.xlu0 %1792, %v1595
        %v1794 = vpop.permute.xlu0 %1793
        %1797 = vset.pattern.permute.xlu0 0
        %1798 = vperm.xlu0 %1797, %v1596
        %v1799 = vpop.permute.xlu0 %1798
        %1802 = vset.pattern.permute.xlu0 0
        %1803 = vperm.xlu0 %1802, %v1597
        %v1804 = vpop.permute.xlu0 %1803
        %1807 = vset.pattern.permute.xlu0 0
        %1808 = vperm.xlu0 %1807, %v1598
        %v1809 = vpop.permute.xlu0 %1808
        %1812 = vset.pattern.permute.xlu0 0
        %1813 = vperm.xlu0 %1812, %v1599
        %v1814 = vpop.permute.xlu0 %1813
        %1817 = vset.pattern.permute.xlu0 0
        %1818 = vperm.xlu0 %1817, %v1600
        %v1819 = vpop.permute.xlu0 %1818
        %1822 = vset.pattern.permute.xlu0 0
        %1823 = vperm.xlu0 %1822, %v1601
        %v1824 = vpop.permute.xlu0 %1823
        %1827 = vset.pattern.permute.xlu0 0
        %1828 = vperm.xlu0 %1827, %v1602
        %v1829 = vpop.permute.xlu0 %1828
        %1832 = vset.pattern.permute.xlu0 0
        %1833 = vperm.xlu0 %1832, %v1603
        %v1834 = vpop.permute.xlu0 %1833
        %1837 = vset.pattern.permute.xlu0 0
        %1838 = vperm.xlu0 %1837, %v1604
        %v1839 = vpop.permute.xlu0 %1838
        %1842 = vset.pattern.permute.xlu0 0
        %1843 = vperm.xlu0 %1842, %v1605
        %v1844 = vpop.permute.xlu0 %1843
        %1847 = vset.pattern.permute.xlu0 0
        %1848 = vperm.xlu0 %1847, %v1606
        %v1849 = vpop.permute.xlu0 %1848
        %1852 = vset.pattern.permute.xlu0 0
        %1853 = vperm.xlu0 %1852, %v1607
        %v1854 = vpop.permute.xlu0 %1853
        %1857 = vset.pattern.permute.xlu0 0
        %1858 = vperm.xlu0 %1857, %v1608
        %v1859 = vpop.permute.xlu0 %1858
        %1862 = vset.pattern.permute.xlu0 0
        %1863 = vperm.xlu0 %1862, %v1609
        %v1864 = vpop.permute.xlu0 %1863
        %1867 = vset.pattern.permute.xlu0 0
        %1868 = vperm.xlu0 %1867, %v1610
        %v1869 = vpop.permute.xlu0 %1868
        %1872 = vset.pattern.permute.xlu0 0
        %1873 = vperm.xlu0 %1872, %v1611
        %v1874 = vpop.permute.xlu0 %1873
        %1877 = vset.pattern.permute.xlu0 0
        %1878 = vperm.xlu0 %1877, %v1612
        %v1879 = vpop.permute.xlu0 %1878
        %1882 = vset.pattern.permute.xlu0 0
        %1883 = vperm.xlu0 %1882, %v1613
        %v1884 = vpop.permute.xlu0 %1883
        %1887 = vset.pattern.permute.xlu0 0
        %1888 = vperm.xlu0 %1887, %v1614
        %v1889 = vpop.permute.xlu0 %1888
        %1892 = vset.pattern.permute.xlu0 0
        %1893 = vperm.xlu0 %1892, %v1615
        %v1894 = vpop.permute.xlu0 %1893
        %1897 = vset.pattern.permute.xlu0 0
        %1898 = vperm.xlu0 %1897, %v1616
        %v1899 = vpop.permute.xlu0 %1898
        %1902 = vset.pattern.permute.xlu0 0
        %1903 = vperm.xlu0 %1902, %v1617
        %v1904 = vpop.permute.xlu0 %1903
        %1907 = vset.pattern.permute.xlu0 0
        %1908 = vperm.xlu0 %1907, %v1618
        %v1909 = vpop.permute.xlu0 %1908
        %1912 = vset.pattern.permute.xlu0 0
        %1913 = vperm.xlu0 %1912, %v1619
        %v1914 = vpop.permute.xlu0 %1913
        %1917 = vset.pattern.permute.xlu0 0
        %1918 = vperm.xlu0 %1917, %v1620
        %v1919 = vpop.permute.xlu0 %1918
        %1922 = vset.pattern.permute.xlu0 0
        %1923 = vperm.xlu0 %1922, %v1621
        %v1924 = vpop.permute.xlu0 %1923
        %1927 = vset.pattern.permute.xlu0 0
        %1928 = vperm.xlu0 %1927, %v1622
        %v1929 = vpop.permute.xlu0 %1928
        %1932 = vset.pattern.permute.xlu0 0
        %1933 = vperm.xlu0 %1932, %v1623
        %v1934 = vpop.permute.xlu0 %1933
        %1937 = vset.pattern.permute.xlu0 0
        %1938 = vperm.xlu0 %1937, %v1624
        %v1939 = vpop.permute.xlu0 %1938
        %1942 = vset.pattern.permute.xlu0 0
        %1943 = vperm.xlu0 %1942, %v1625
        %v1944 = vpop.permute.xlu0 %1943
        %1947 = vset.pattern.permute.xlu0 0
        %1948 = vperm.xlu0 %1947, %v1626
        %v1949 = vpop.permute.xlu0 %1948
        %1952 = vset.pattern.permute.xlu0 0
        %1953 = vperm.xlu0 %1952, %v1627
        %v1954 = vpop.permute.xlu0 %1953
        %1957 = vset.pattern.permute.xlu0 0
        %1958 = vperm.xlu0 %1957, %v1628
        %v1959 = vpop.permute.xlu0 %1958
        %1962 = vset.pattern.permute.xlu0 0
        %1963 = vperm.xlu0 %1962, %v1629
        %v1964 = vpop.permute.xlu0 %1963
        %1967 = vset.pattern.permute.xlu0 0
        %1968 = vperm.xlu0 %1967, %v1630
        %v1969 = vpop.permute.xlu0 %1968
        %1972 = vset.pattern.permute.xlu0 0
        %1973 = vperm.xlu0 %1972, %v1631
        %v1974 = vpop.permute.xlu0 %1973
        %1977 = vset.pattern.permute.xlu0 0
        %1978 = vperm.xlu0 %1977, %v1632
        %v1979 = vpop.permute.xlu0 %1978
        %1982 = vset.pattern.permute.xlu0 0
        %1983 = vperm.xlu0 %1982, %v1633
        %v1984 = vpop.permute.xlu0 %1983
        %1987 = vset.pattern.permute.xlu0 0
        %1988 = vperm.xlu0 %1987, %v1634
        %v1989 = vpop.permute.xlu0 %1988
        %1992 = vset.pattern.permute.xlu0 0
        %1993 = vperm.xlu0 %1992, %v1635
        %v1994 = vpop.permute.xlu0 %1993
        %1997 = vset.pattern.permute.xlu0 0
        %1998 = vperm.xlu0 %1997, %v1636
        %v1999 = vpop.permute.xlu0 %1998
        %2002 = vset.pattern.permute.xlu0 0
        %2003 = vperm.xlu0 %2002, %v1637
        %v2004 = vpop.permute.xlu0 %2003
        %2007 = vset.pattern.permute.xlu0 0
        %2008 = vperm.xlu0 %2007, %v1638
        %v2009 = vpop.permute.xlu0 %2008
        %2012 = vset.pattern.permute.xlu0 0
        %2013 = vperm.xlu0 %2012, %v1639
        %v2014 = vpop.permute.xlu0 %2013
        %2017 = vset.pattern.permute.xlu0 0
        %2018 = vperm.xlu0 %2017, %v1640
        %v2019 = vpop.permute.xlu0 %2018
        %2022 = vset.pattern.permute.xlu0 0
        %2023 = vperm.xlu0 %2022, %v1641
        %v2024 = vpop.permute.xlu0 %2023
        %2027 = vset.pattern.permute.xlu0 0
        %2028 = vperm.xlu0 %2027, %v1642
        %v2029 = vpop.permute.xlu0 %2028
        %2032 = vset.pattern.permute.xlu0 0
        %2033 = vperm.xlu0 %2032, %v1643
        %v2034 = vpop.permute.xlu0 %2033
        %2037 = vset.pattern.permute.xlu0 0
        %2038 = vperm.xlu0 %2037, %v1644
        %v2039 = vpop.permute.xlu0 %2038
        %2042 = vset.pattern.permute.xlu0 0
        %2043 = vperm.xlu0 %2042, %v1645
        %v2044 = vpop.permute.xlu0 %2043
        %2047 = vset.pattern.permute.xlu0 0
        %2048 = vperm.xlu0 %2047, %v1646
        %v2049 = vpop.permute.xlu0 %2048
        %2052 = vset.pattern.permute.xlu0 0
        %2053 = vperm.xlu0 %2052, %v1647
        %v2054 = vpop.permute.xlu0 %2053
        %2057 = vset.pattern.permute.xlu0 0
        %2058 = vperm.xlu0 %2057, %v1648
        %v2059 = vpop.permute.xlu0 %2058
        %2062 = vset.pattern.permute.xlu0 0
        %2063 = vperm.xlu0 %2062, %v1649
        %v2064 = vpop.permute.xlu0 %2063
        %2067 = vset.pattern.permute.xlu0 0
        %2068 = vperm.xlu0 %2067, %v1650
        %v2069 = vpop.permute.xlu0 %2068
        %2072 = vset.pattern.permute.xlu0 0
        %2073 = vperm.xlu0 %2072, %v1651
        %v2074 = vpop.permute.xlu0 %2073
        %2077 = vset.pattern.permute.xlu0 0
        %2078 = vperm.xlu0 %2077, %v1652
        %v2079 = vpop.permute.xlu0 %2078
        %2082 = vset.pattern.permute.xlu0 0
        %2083 = vperm.xlu0 %2082, %v1653
        %v2084 = vpop.permute.xlu0 %2083
        %2087 = vset.pattern.permute.xlu0 0
        %2088 = vperm.xlu0 %2087, %v1654
        %v2089 = vpop.permute.xlu0 %2088
        %2092 = vset.pattern.permute.xlu0 0
        %2093 = vperm.xlu0 %2092, %v1655
        %v2094 = vpop.permute.xlu0 %2093
        %2097 = vset.pattern.permute.xlu0 0
        %2098 = vperm.xlu0 %2097, %v1656
        %v2099 = vpop.permute.xlu0 %2098
        %2102 = vset.pattern.permute.xlu0 0
        %2103 = vperm.xlu0 %2102, %v1657
        %v2104 = vpop.permute.xlu0 %2103
        %2107 = vset.pattern.permute.xlu0 0
        %2108 = vperm.xlu0 %2107, %v1658
        %v2109 = vpop.permute.xlu0 %2108
        %2112 = vset.pattern.permute.xlu0 0
        %2113 = vperm.xlu0 %2112, %v1659
        %v2114 = vpop.permute.xlu0 %2113
        %2117 = vset.pattern.permute.xlu0 0
        %2118 = vperm.xlu0 %2117, %v1660
        %v2119 = vpop.permute.xlu0 %2118
        %2122 = vset.pattern.permute.xlu0 0
        %2123 = vperm.xlu0 %2122, %v1661
        %v2124 = vpop.permute.xlu0 %2123
        %2127 = vset.pattern.permute.xlu0 0
        %2128 = vperm.xlu0 %2127, %v1662
        %v2129 = vpop.permute.xlu0 %2128
        %2132 = vset.pattern.permute.xlu0 0
        %2133 = vperm.xlu0 %2132, %v1663
        %v2134 = vpop.permute.xlu0 %2133
        %2137 = vset.pattern.permute.xlu0 0
        %2138 = vperm.xlu0 %2137, %v1664
        %v2139 = vpop.permute.xlu0 %2138
        %2142 = vset.pattern.permute.xlu0 0
        %2143 = vperm.xlu0 %2142, %v1665
        %v2144 = vpop.permute.xlu0 %2143
        %2147 = vset.pattern.permute.xlu0 0
        %2148 = vperm.xlu0 %2147, %v1666
        %v2149 = vpop.permute.xlu0 %2148
        %2152 = vset.pattern.permute.xlu0 0
        %2153 = vperm.xlu0 %2152, %v1667
        %v2154 = vpop.permute.xlu0 %2153
        %2157 = vset.pattern.permute.xlu0 0
        %2158 = vperm.xlu0 %2157, %v1668
        %v2159 = vpop.permute.xlu0 %2158
        %2162 = vset.pattern.permute.xlu0 0
        %2163 = vperm.xlu0 %2162, %v1669
        %v2164 = vpop.permute.xlu0 %2163
        %2167 = vset.pattern.permute.xlu0 0
        %2168 = vperm.xlu0 %2167, %v1670
        %v2169 = vpop.permute.xlu0 %2168
        %2172 = vset.pattern.permute.xlu0 0
        %2173 = vperm.xlu0 %2172, %v1671
        %v2174 = vpop.permute.xlu0 %2173
        %2177 = vset.pattern.permute.xlu0 0
        %2178 = vperm.xlu0 %2177, %v1672
        %v2179 = vpop.permute.xlu0 %2178
        %2182 = vset.pattern.permute.xlu0 0
        %2183 = vperm.xlu0 %2182, %v1673
        %v2184 = vpop.permute.xlu0 %2183
        %2187 = vset.pattern.permute.xlu0 0
        %2188 = vperm.xlu0 %2187, %v1674
        %v2189 = vpop.permute.xlu0 %2188
        %2192 = vset.pattern.permute.xlu0 0
        %2193 = vperm.xlu0 %2192, %v1675
        %v2194 = vpop.permute.xlu0 %2193
        %2197 = vset.pattern.permute.xlu0 0
        %2198 = vperm.xlu0 %2197, %v1676
        %v2199 = vpop.permute.xlu0 %2198
        %2202 = vset.pattern.permute.xlu0 0
        %2203 = vperm.xlu0 %2202, %v1677
        %v2204 = vpop.permute.xlu0 %2203
        %2207 = vset.pattern.permute.xlu0 0
        %2208 = vperm.xlu0 %2207, %v1678
        %v2209 = vpop.permute.xlu0 %2208
        %2212 = vset.pattern.permute.xlu0 0
        %2213 = vperm.xlu0 %2212, %v1679
        %v2214 = vpop.permute.xlu0 %2213
        %2217 = vset.pattern.permute.xlu0 0
        %2218 = vperm.xlu0 %2217, %v1680
        %v2219 = vpop.permute.xlu0 %2218
        %2222 = vset.pattern.permute.xlu0 0
        %2223 = vperm.xlu0 %2222, %v1681
        %v2224 = vpop.permute.xlu0 %2223
        %2227 = vset.pattern.permute.xlu0 0
        %2228 = vperm.xlu0 %2227, %v1682
        %v2229 = vpop.permute.xlu0 %2228
        %2232 = vset.pattern.permute.xlu0 0
        %2233 = vperm.xlu0 %2232, %v1683
        %v2234 = vpop.permute.xlu0 %2233
        %2237 = vset.pattern.permute.xlu0 0
        %2238 = vperm.xlu0 %2237, %v1684
        %v2239 = vpop.permute.xlu0 %2238
        %2242 = vset.pattern.permute.xlu0 0
        %2243 = vperm.xlu0 %2242, %v1685
        %v2244 = vpop.permute.xlu0 %2243
        %2247 = vset.pattern.permute.xlu0 0
        %2248 = vperm.xlu0 %2247, %v1686
        %v2249 = vpop.permute.xlu0 %2248
        %2252 = vset.pattern.permute.xlu0 0
        %2253 = vperm.xlu0 %2252, %v1687
        %v2254 = vpop.permute.xlu0 %2253
        %2257 = vset.pattern.permute.xlu0 0
        %2258 = vperm.xlu0 %2257, %v1688
        %v2259 = vpop.permute.xlu0 %2258
        %2262 = vset.pattern.permute.xlu0 0
        %2263 = vperm.xlu0 %2262, %v1689
        %v2264 = vpop.permute.xlu0 %2263
        %2267 = vset.pattern.permute.xlu0 0
        %2268 = vperm.xlu0 %2267, %v1690
        %v2269 = vpop.permute.xlu0 %2268
        %2272 = vset.pattern.permute.xlu0 0
        %2273 = vperm.xlu0 %2272, %v1691
        %v2274 = vpop.permute.xlu0 %2273
        %2277 = vset.pattern.permute.xlu0 0
        %2278 = vperm.xlu0 %2277, %v1692
        %v2279 = vpop.permute.xlu0 %2278
        %2282 = vset.pattern.permute.xlu0 0
        %2283 = vperm.xlu0 %2282, %v1693
        %v2284 = vpop.permute.xlu0 %2283
        %2287 = vset.pattern.permute.xlu0 0
        %2288 = vperm.xlu0 %2287, %v1694
        %v2289 = vpop.permute.xlu0 %2288
        %2292 = vset.pattern.permute.xlu0 0
        %2293 = vperm.xlu0 %2292, %v1695
        %v2294 = vpop.permute.xlu0 %2293
        %2297 = vset.pattern.permute.xlu0 0
        %2298 = vperm.xlu0 %2297, %v1696
        %v2299 = vpop.permute.xlu0 %2298
        %2302 = vset.pattern.permute.xlu0 0
        %2303 = vperm.xlu0 %2302, %v1697
        %v2304 = vpop.permute.xlu0 %2303
        %2307 = vset.pattern.permute.xlu0 0
        %2308 = vperm.xlu0 %2307, %v1698
        %v2309 = vpop.permute.xlu0 %2308
        %2312 = vset.pattern.permute.xlu0 0
        %2313 = vperm.xlu0 %2312, %v1699
        %v2314 = vpop.permute.xlu0 %2313
        %2317 = vset.pattern.permute.xlu0 0
        %2318 = vperm.xlu0 %2317, %v1700
        %v2319 = vpop.permute.xlu0 %2318
        %2322 = vset.pattern.permute.xlu0 0
        %2323 = vperm.xlu0 %2322, %v1701
        %v2324 = vpop.permute.xlu0 %2323
        %2327 = vset.pattern.permute.xlu0 0
        %2328 = vperm.xlu0 %2327, %v1702
        %v2329 = vpop.permute.xlu0 %2328
        %2332 = vset.pattern.permute.xlu0 0
        %2333 = vperm.xlu0 %2332, %v1703
        %v2334 = vpop.permute.xlu0 %2333
        %2337 = vset.pattern.permute.xlu0 0
        %2338 = vperm.xlu0 %2337, %v1704
        %v2339 = vpop.permute.xlu0 %2338
        %2342 = vset.pattern.permute.xlu0 0
        %2343 = vperm.xlu0 %2342, %v1705
        %v2344 = vpop.permute.xlu0 %2343
        %v2346 = vmul.f32 %v1194, %v1709
        %v2347 = vmul.f32 %v1195, %v1709
        %v2348 = vmul.f32 %v1196, %v1714
        %v2349 = vmul.f32 %v1197, %v1714
        %v2350 = vmul.f32 %v1198, %v1719
        %v2351 = vmul.f32 %v1199, %v1719
        %v2352 = vmul.f32 %v1200, %v1724
        %v2353 = vmul.f32 %v1201, %v1724
        %v2354 = vmul.f32 %v1202, %v1729
        %v2355 = vmul.f32 %v1203, %v1729
        %v2356 = vmul.f32 %v1204, %v1734
        %v2357 = vmul.f32 %v1205, %v1734
        %v2358 = vmul.f32 %v1206, %v1739
        %v2359 = vmul.f32 %v1207, %v1739
        %v2360 = vmul.f32 %v1208, %v1744
        %v2361 = vmul.f32 %v1209, %v1744
        %v2362 = vmul.f32 %v1210, %v1749
        %v2363 = vmul.f32 %v1211, %v1749
        %v2364 = vmul.f32 %v1212, %v1754
        %v2365 = vmul.f32 %v1213, %v1754
        %v2366 = vmul.f32 %v1214, %v1759
        %v2367 = vmul.f32 %v1215, %v1759
        %v2368 = vmul.f32 %v1216, %v1764
        %v2369 = vmul.f32 %v1217, %v1764
        %v2370 = vmul.f32 %v1218, %v1769
        %v2371 = vmul.f32 %v1219, %v1769
        %v2372 = vmul.f32 %v1220, %v1774
        %v2373 = vmul.f32 %v1221, %v1774
        %v2374 = vmul.f32 %v1222, %v1779
        %v2375 = vmul.f32 %v1223, %v1779
        %v2376 = vmul.f32 %v1224, %v1784
        %v2377 = vmul.f32 %v1225, %v1784
        %v2378 = vmul.f32 %v1226, %v1789
        %v2379 = vmul.f32 %v1227, %v1789
        %v2380 = vmul.f32 %v1228, %v1794
        %v2381 = vmul.f32 %v1229, %v1794
        %v2382 = vmul.f32 %v1230, %v1799
        %v2383 = vmul.f32 %v1231, %v1799
        %v2384 = vmul.f32 %v1232, %v1804
        %v2385 = vmul.f32 %v1233, %v1804
        %v2386 = vmul.f32 %v1234, %v1809
        %v2387 = vmul.f32 %v1235, %v1809
        %v2388 = vmul.f32 %v1236, %v1814
        %v2389 = vmul.f32 %v1237, %v1814
        %v2390 = vmul.f32 %v1238, %v1819
        %v2391 = vmul.f32 %v1239, %v1819
        %v2392 = vmul.f32 %v1240, %v1824
        %v2393 = vmul.f32 %v1241, %v1824
        %v2394 = vmul.f32 %v1242, %v1829
        %v2395 = vmul.f32 %v1243, %v1829
        %v2396 = vmul.f32 %v1244, %v1834
        %v2397 = vmul.f32 %v1245, %v1834
        %v2398 = vmul.f32 %v1246, %v1839
        %v2399 = vmul.f32 %v1247, %v1839
        %v2400 = vmul.f32 %v1248, %v1844
        %v2401 = vmul.f32 %v1249, %v1844
        %v2402 = vmul.f32 %v1250, %v1849
        %v2403 = vmul.f32 %v1251, %v1849
        %v2404 = vmul.f32 %v1252, %v1854
        %v2405 = vmul.f32 %v1253, %v1854
        %v2406 = vmul.f32 %v1254, %v1859
        %v2407 = vmul.f32 %v1255, %v1859
        %v2408 = vmul.f32 %v1256, %v1864
        %v2409 = vmul.f32 %v1257, %v1864
        %v2410 = vmul.f32 %v1258, %v1869
        %v2411 = vmul.f32 %v1259, %v1869
        %v2412 = vmul.f32 %v1260, %v1874
        %v2413 = vmul.f32 %v1261, %v1874
        %v2414 = vmul.f32 %v1262, %v1879
        %v2415 = vmul.f32 %v1263, %v1879
        %v2416 = vmul.f32 %v1264, %v1884
        %v2417 = vmul.f32 %v1265, %v1884
        %v2418 = vmul.f32 %v1266, %v1889
        %v2419 = vmul.f32 %v1267, %v1889
        %v2420 = vmul.f32 %v1268, %v1894
        %v2421 = vmul.f32 %v1269, %v1894
        %v2422 = vmul.f32 %v1270, %v1899
        %v2423 = vmul.f32 %v1271, %v1899
        %v2424 = vmul.f32 %v1272, %v1904
        %v2425 = vmul.f32 %v1273, %v1904
        %v2426 = vmul.f32 %v1274, %v1909
        %v2427 = vmul.f32 %v1275, %v1909
        %v2428 = vmul.f32 %v1276, %v1914
        %v2429 = vmul.f32 %v1277, %v1914
        %v2430 = vmul.f32 %v1278, %v1919
        %v2431 = vmul.f32 %v1279, %v1919
        %v2432 = vmul.f32 %v1280, %v1924
        %v2433 = vmul.f32 %v1281, %v1924
        %v2434 = vmul.f32 %v1282, %v1929
        %v2435 = vmul.f32 %v1283, %v1929
        %v2436 = vmul.f32 %v1284, %v1934
        %v2437 = vmul.f32 %v1285, %v1934
        %v2438 = vmul.f32 %v1286, %v1939
        %v2439 = vmul.f32 %v1287, %v1939
        %v2440 = vmul.f32 %v1288, %v1944
        %v2441 = vmul.f32 %v1289, %v1944
        %v2442 = vmul.f32 %v1290, %v1949
        %v2443 = vmul.f32 %v1291, %v1949
        %v2444 = vmul.f32 %v1292, %v1954
        %v2445 = vmul.f32 %v1293, %v1954
        %v2446 = vmul.f32 %v1294, %v1959
        %v2447 = vmul.f32 %v1295, %v1959
        %v2448 = vmul.f32 %v1296, %v1964
        %v2449 = vmul.f32 %v1297, %v1964
        %v2450 = vmul.f32 %v1298, %v1969
        %v2451 = vmul.f32 %v1299, %v1969
        %v2452 = vmul.f32 %v1300, %v1974
        %v2453 = vmul.f32 %v1301, %v1974
        %v2454 = vmul.f32 %v1302, %v1979
        %v2455 = vmul.f32 %v1303, %v1979
        %v2456 = vmul.f32 %v1304, %v1984
        %v2457 = vmul.f32 %v1305, %v1984
        %v2458 = vmul.f32 %v1306, %v1989
        %v2459 = vmul.f32 %v1307, %v1989
        %v2460 = vmul.f32 %v1308, %v1994
        %v2461 = vmul.f32 %v1309, %v1994
        %v2462 = vmul.f32 %v1310, %v1999
        %v2463 = vmul.f32 %v1311, %v1999
        %v2464 = vmul.f32 %v1312, %v2004
        %v2465 = vmul.f32 %v1313, %v2004
        %v2466 = vmul.f32 %v1314, %v2009
        %v2467 = vmul.f32 %v1315, %v2009
        %v2468 = vmul.f32 %v1316, %v2014
        %v2469 = vmul.f32 %v1317, %v2014
        %v2470 = vmul.f32 %v1318, %v2019
        %v2471 = vmul.f32 %v1319, %v2019
        %v2472 = vmul.f32 %v1320, %v2024
        %v2473 = vmul.f32 %v1321, %v2024
        %v2474 = vmul.f32 %v1322, %v2029
        %v2475 = vmul.f32 %v1323, %v2029
        %v2476 = vmul.f32 %v1324, %v2034
        %v2477 = vmul.f32 %v1325, %v2034
        %v2478 = vmul.f32 %v1326, %v2039
        %v2479 = vmul.f32 %v1327, %v2039
        %v2480 = vmul.f32 %v1328, %v2044
        %v2481 = vmul.f32 %v1329, %v2044
        %v2482 = vmul.f32 %v1330, %v2049
        %v2483 = vmul.f32 %v1331, %v2049
        %v2484 = vmul.f32 %v1332, %v2054
        %v2485 = vmul.f32 %v1333, %v2054
        %v2486 = vmul.f32 %v1334, %v2059
        %v2487 = vmul.f32 %v1335, %v2059
        %v2488 = vmul.f32 %v1336, %v2064
        %v2489 = vmul.f32 %v1337, %v2064
        %v2490 = vmul.f32 %v1338, %v2069
        %v2491 = vmul.f32 %v1339, %v2069
        %v2492 = vmul.f32 %v1340, %v2074
        %v2493 = vmul.f32 %v1341, %v2074
        %v2494 = vmul.f32 %v1342, %v2079
        %v2495 = vmul.f32 %v1343, %v2079
        %v2496 = vmul.f32 %v1344, %v2084
        %v2497 = vmul.f32 %v1345, %v2084
        %v2498 = vmul.f32 %v1346, %v2089
        %v2499 = vmul.f32 %v1347, %v2089
        %v2500 = vmul.f32 %v1348, %v2094
        %v2501 = vmul.f32 %v1349, %v2094
        %v2502 = vmul.f32 %v1350, %v2099
        %v2503 = vmul.f32 %v1351, %v2099
        %v2504 = vmul.f32 %v1352, %v2104
        %v2505 = vmul.f32 %v1353, %v2104
        %v2506 = vmul.f32 %v1354, %v2109
        %v2507 = vmul.f32 %v1355, %v2109
        %v2508 = vmul.f32 %v1356, %v2114
        %v2509 = vmul.f32 %v1357, %v2114
        %v2510 = vmul.f32 %v1358, %v2119
        %v2511 = vmul.f32 %v1359, %v2119
        %v2512 = vmul.f32 %v1360, %v2124
        %v2513 = vmul.f32 %v1361, %v2124
        %v2514 = vmul.f32 %v1362, %v2129
        %v2515 = vmul.f32 %v1363, %v2129
        %v2516 = vmul.f32 %v1364, %v2134
        %v2517 = vmul.f32 %v1365, %v2134
        %v2518 = vmul.f32 %v1366, %v2139
        %v2519 = vmul.f32 %v1367, %v2139
        %v2520 = vmul.f32 %v1368, %v2144
        %v2521 = vmul.f32 %v1369, %v2144
        %v2522 = vmul.f32 %v1370, %v2149
        %v2523 = vmul.f32 %v1371, %v2149
        %v2524 = vmul.f32 %v1372, %v2154
        %v2525 = vmul.f32 %v1373, %v2154
        %v2526 = vmul.f32 %v1374, %v2159
        %v2527 = vmul.f32 %v1375, %v2159
        %v2528 = vmul.f32 %v1376, %v2164
        %v2529 = vmul.f32 %v1377, %v2164
        %v2530 = vmul.f32 %v1378, %v2169
        %v2531 = vmul.f32 %v1379, %v2169
        %v2532 = vmul.f32 %v1380, %v2174
        %v2533 = vmul.f32 %v1381, %v2174
        %v2534 = vmul.f32 %v1382, %v2179
        %v2535 = vmul.f32 %v1383, %v2179
        %v2536 = vmul.f32 %v1384, %v2184
        %v2537 = vmul.f32 %v1385, %v2184
        %v2538 = vmul.f32 %v1386, %v2189
        %v2539 = vmul.f32 %v1387, %v2189
        %v2540 = vmul.f32 %v1388, %v2194
        %v2541 = vmul.f32 %v1389, %v2194
        %v2542 = vmul.f32 %v1390, %v2199
        %v2543 = vmul.f32 %v1391, %v2199
        %v2544 = vmul.f32 %v1392, %v2204
        %v2545 = vmul.f32 %v1393, %v2204
        %v2546 = vmul.f32 %v1394, %v2209
        %v2547 = vmul.f32 %v1395, %v2209
        %v2548 = vmul.f32 %v1396, %v2214
        %v2549 = vmul.f32 %v1397, %v2214
        %v2550 = vmul.f32 %v1398, %v2219
        %v2551 = vmul.f32 %v1399, %v2219
        %v2552 = vmul.f32 %v1400, %v2224
        %v2553 = vmul.f32 %v1401, %v2224
        %v2554 = vmul.f32 %v1402, %v2229
        %v2555 = vmul.f32 %v1403, %v2229
        %v2556 = vmul.f32 %v1404, %v2234
        %v2557 = vmul.f32 %v1405, %v2234
        %v2558 = vmul.f32 %v1406, %v2239
        %v2559 = vmul.f32 %v1407, %v2239
        %v2560 = vmul.f32 %v1408, %v2244
        %v2561 = vmul.f32 %v1409, %v2244
        %v2562 = vmul.f32 %v1410, %v2249
        %v2563 = vmul.f32 %v1411, %v2249
        %v2564 = vmul.f32 %v1412, %v2254
        %v2565 = vmul.f32 %v1413, %v2254
        %v2566 = vmul.f32 %v1414, %v2259
        %v2567 = vmul.f32 %v1415, %v2259
        %v2568 = vmul.f32 %v1416, %v2264
        %v2569 = vmul.f32 %v1417, %v2264
        %v2570 = vmul.f32 %v1418, %v2269
        %v2571 = vmul.f32 %v1419, %v2269
        %v2572 = vmul.f32 %v1420, %v2274
        %v2573 = vmul.f32 %v1421, %v2274
        %v2574 = vmul.f32 %v1422, %v2279
        %v2575 = vmul.f32 %v1423, %v2279
        %v2576 = vmul.f32 %v1424, %v2284
        %v2577 = vmul.f32 %v1425, %v2284
        %v2578 = vmul.f32 %v1426, %v2289
        %v2579 = vmul.f32 %v1427, %v2289
        %v2580 = vmul.f32 %v1428, %v2294
        %v2581 = vmul.f32 %v1429, %v2294
        %v2582 = vmul.f32 %v1430, %v2299
        %v2583 = vmul.f32 %v1431, %v2299
        %v2584 = vmul.f32 %v1432, %v2304
        %v2585 = vmul.f32 %v1433, %v2304
        %v2586 = vmul.f32 %v1434, %v2309
        %v2587 = vmul.f32 %v1435, %v2309
        %v2588 = vmul.f32 %v1436, %v2314
        %v2589 = vmul.f32 %v1437, %v2314
        %v2590 = vmul.f32 %v1438, %v2319
        %v2591 = vmul.f32 %v1439, %v2319
        %v2592 = vmul.f32 %v1440, %v2324
        %v2593 = vmul.f32 %v1441, %v2324
        %v2594 = vmul.f32 %v1442, %v2329
        %v2595 = vmul.f32 %v1443, %v2329
        %v2596 = vmul.f32 %v1444, %v2334
        %v2597 = vmul.f32 %v1445, %v2334
        %v2598 = vmul.f32 %v1446, %v2339
        %v2599 = vmul.f32 %v1447, %v2339
        %v2600 = vmul.f32 %v1448, %v2344
        %v2601 = vmul.f32 %v1449, %v2344
        %s2602 = smul.u32 %s22, 128
        %v2603 = vlaneseq
        %v2604 = vshrl.u32 %v2603, 7
        %v2605 = vadd.s32 %v2604, 8
        %v2606 = vadd.s32 %v2604, 16
        %v2607 = vadd.s32 %v2604, 24
        %v2608 = vadd.s32 %v2604, 32
        %v2609 = vadd.s32 %v2604, 40
        %v2610 = vadd.s32 %v2604, 48
        %v2611 = vadd.s32 %v2604, 56
        %v2612 = vadd.s32 %v2604, 64
        %v2613 = vadd.s32 %v2604, 72
        %v2614 = vadd.s32 %v2604, 80
        %v2615 = vadd.s32 %v2604, 88
        %v2616 = vadd.s32 %v2604, 96
        %v2617 = vadd.s32 %v2604, 104
        %v2618 = vadd.s32 %v2604, 112
        %v2619 = vadd.s32 %v2604, 120
        %v2620 = vstv %s2602
        %v2621 = vadd.s32 %v2620, %v2604
        %v2622 = vadd.s32 %v2620, %v2605
        %v2623 = vadd.s32 %v2620, %v2606
        %v2624 = vadd.s32 %v2620, %v2607
        %v2625 = vadd.s32 %v2620, %v2608
        %v2626 = vadd.s32 %v2620, %v2609
        %v2627 = vadd.s32 %v2620, %v2610
        %v2628 = vadd.s32 %v2620, %v2611
        %v2629 = vadd.s32 %v2620, %v2612
        %v2630 = vadd.s32 %v2620, %v2613
        %v2631 = vadd.s32 %v2620, %v2614
        %v2632 = vadd.s32 %v2620, %v2615
        %v2633 = vadd.s32 %v2620, %v2616
        %v2634 = vadd.s32 %v2620, %v2617
        %v2635 = vadd.s32 %v2620, %v2618
        %v2636 = vadd.s32 %v2620, %v2619
        %vm2637 = vcmp.lt.s32.totalorder %v2621, 300
        %vm2638 = vcmp.lt.s32.totalorder %v2622, 300
        %vm2639 = vcmp.lt.s32.totalorder %v2623, 300
        %vm2640 = vcmp.lt.s32.totalorder %v2624, 300
        %vm2641 = vcmp.lt.s32.totalorder %v2625, 300
        %vm2642 = vcmp.lt.s32.totalorder %v2626, 300
        %vm2643 = vcmp.lt.s32.totalorder %v2627, 300
        %vm2644 = vcmp.lt.s32.totalorder %v2628, 300
        %vm2645 = vcmp.lt.s32.totalorder %v2629, 300
        %vm2646 = vcmp.lt.s32.totalorder %v2630, 300
        %vm2647 = vcmp.lt.s32.totalorder %v2631, 300
        %vm2648 = vcmp.lt.s32.totalorder %v2632, 300
        %vm2649 = vcmp.lt.s32.totalorder %v2633, 300
        %vm2650 = vcmp.lt.s32.totalorder %v2634, 300
        %vm2651 = vcmp.lt.s32.totalorder %v2635, 300
        %vm2652 = vcmp.lt.s32.totalorder %v2636, 300
        %v2653 = vsel %vm2637, 1, 0
        %v2654 = vsel %vm2638, 1, 0
        %v2655 = vsel %vm2639, 1, 0
        %v2656 = vsel %vm2640, 1, 0
        %v2657 = vsel %vm2641, 1, 0
        %v2658 = vsel %vm2642, 1, 0
        %v2659 = vsel %vm2643, 1, 0
        %v2660 = vsel %vm2644, 1, 0
        %v2661 = vsel %vm2645, 1, 0
        %v2662 = vsel %vm2646, 1, 0
        %v2663 = vsel %vm2647, 1, 0
        %v2664 = vsel %vm2648, 1, 0
        %v2665 = vsel %vm2649, 1, 0
        %v2666 = vsel %vm2650, 1, 0
        %v2667 = vsel %vm2651, 1, 0
        %v2668 = vsel %vm2652, 1, 0
        %vm2669 = vcmp.eq.s32.totalorder %v2653, 1
        %vm2670 = vcmp.eq.s32.totalorder %v2654, 1
        %vm2671 = vcmp.eq.s32.totalorder %v2655, 1
        %vm2672 = vcmp.eq.s32.totalorder %v2656, 1
        %vm2673 = vcmp.eq.s32.totalorder %v2657, 1
        %vm2674 = vcmp.eq.s32.totalorder %v2658, 1
        %vm2675 = vcmp.eq.s32.totalorder %v2659, 1
        %vm2676 = vcmp.eq.s32.totalorder %v2660, 1
        %vm2677 = vcmp.eq.s32.totalorder %v2661, 1
        %vm2678 = vcmp.eq.s32.totalorder %v2662, 1
        %vm2679 = vcmp.eq.s32.totalorder %v2663, 1
        %vm2680 = vcmp.eq.s32.totalorder %v2664, 1
        %vm2681 = vcmp.eq.s32.totalorder %v2665, 1
        %vm2682 = vcmp.eq.s32.totalorder %v2666, 1
        %vm2683 = vcmp.eq.s32.totalorder %v2667, 1
        %vm2684 = vcmp.eq.s32.totalorder %v2668, 1
        %v2685 = vsel %vm2669, %v2346, 0.0
        %v2686 = vsel %vm2669, %v2347, 0.0
        %v2687 = vsel %vm2670, %v2348, 0.0
        %v2688 = vsel %vm2670, %v2349, 0.0
        %v2689 = vsel %vm2671, %v2350, 0.0
        %v2690 = vsel %vm2671, %v2351, 0.0
        %v2691 = vsel %vm2672, %v2352, 0.0
        %v2692 = vsel %vm2672, %v2353, 0.0
        %v2693 = vsel %vm2673, %v2354, 0.0
        %v2694 = vsel %vm2673, %v2355, 0.0
        %v2695 = vsel %vm2674, %v2356, 0.0
        %v2696 = vsel %vm2674, %v2357, 0.0
        %v2697 = vsel %vm2675, %v2358, 0.0
        %v2698 = vsel %vm2675, %v2359, 0.0
        %v2699 = vsel %vm2676, %v2360, 0.0
        %v2700 = vsel %vm2676, %v2361, 0.0
        %v2701 = vsel %vm2677, %v2362, 0.0
        %v2702 = vsel %vm2677, %v2363, 0.0
        %v2703 = vsel %vm2678, %v2364, 0.0
        %v2704 = vsel %vm2678, %v2365, 0.0
        %v2705 = vsel %vm2679, %v2366, 0.0
        %v2706 = vsel %vm2679, %v2367, 0.0
        %v2707 = vsel %vm2680, %v2368, 0.0
        %v2708 = vsel %vm2680, %v2369, 0.0
        %v2709 = vsel %vm2681, %v2370, 0.0
        %v2710 = vsel %vm2681, %v2371, 0.0
        %v2711 = vsel %vm2682, %v2372, 0.0
        %v2712 = vsel %vm2682, %v2373, 0.0
        %v2713 = vsel %vm2683, %v2374, 0.0
        %v2714 = vsel %vm2683, %v2375, 0.0
        %v2715 = vsel %vm2684, %v2376, 0.0
        %v2716 = vsel %vm2684, %v2377, 0.0
        %v2717 = vsel %vm2669, %v2378, 0.0
        %v2718 = vsel %vm2669, %v2379, 0.0
        %v2719 = vsel %vm2670, %v2380, 0.0
        %v2720 = vsel %vm2670, %v2381, 0.0
        %v2721 = vsel %vm2671, %v2382, 0.0
        %v2722 = vsel %vm2671, %v2383, 0.0
        %v2723 = vsel %vm2672, %v2384, 0.0
        %v2724 = vsel %vm2672, %v2385, 0.0
        %v2725 = vsel %vm2673, %v2386, 0.0
        %v2726 = vsel %vm2673, %v2387, 0.0
        %v2727 = vsel %vm2674, %v2388, 0.0
        %v2728 = vsel %vm2674, %v2389, 0.0
        %v2729 = vsel %vm2675, %v2390, 0.0
        %v2730 = vsel %vm2675, %v2391, 0.0
        %v2731 = vsel %vm2676, %v2392, 0.0
        %v2732 = vsel %vm2676, %v2393, 0.0
        %v2733 = vsel %vm2677, %v2394, 0.0
        %v2734 = vsel %vm2677, %v2395, 0.0
        %v2735 = vsel %vm2678, %v2396, 0.0
        %v2736 = vsel %vm2678, %v2397, 0.0
        %v2737 = vsel %vm2679, %v2398, 0.0
        %v2738 = vsel %vm2679, %v2399, 0.0
        %v2739 = vsel %vm2680, %v2400, 0.0
        %v2740 = vsel %vm2680, %v2401, 0.0
        %v2741 = vsel %vm2681, %v2402, 0.0
        %v2742 = vsel %vm2681, %v2403, 0.0
        %v2743 = vsel %vm2682, %v2404, 0.0
        %v2744 = vsel %vm2682, %v2405, 0.0
        %v2745 = vsel %vm2683, %v2406, 0.0
        %v2746 = vsel %vm2683, %v2407, 0.0
        %v2747 = vsel %vm2684, %v2408, 0.0
        %v2748 = vsel %vm2684, %v2409, 0.0
        %v2749 = vsel %vm2669, %v2410, 0.0
        %v2750 = vsel %vm2669, %v2411, 0.0
        %v2751 = vsel %vm2670, %v2412, 0.0
        %v2752 = vsel %vm2670, %v2413, 0.0
        %v2753 = vsel %vm2671, %v2414, 0.0
        %v2754 = vsel %vm2671, %v2415, 0.0
        %v2755 = vsel %vm2672, %v2416, 0.0
        %v2756 = vsel %vm2672, %v2417, 0.0
        %v2757 = vsel %vm2673, %v2418, 0.0
        %v2758 = vsel %vm2673, %v2419, 0.0
        %v2759 = vsel %vm2674, %v2420, 0.0
        %v2760 = vsel %vm2674, %v2421, 0.0
        %v2761 = vsel %vm2675, %v2422, 0.0
        %v2762 = vsel %vm2675, %v2423, 0.0
        %v2763 = vsel %vm2676, %v2424, 0.0
        %v2764 = vsel %vm2676, %v2425, 0.0
        %v2765 = vsel %vm2677, %v2426, 0.0
        %v2766 = vsel %vm2677, %v2427, 0.0
        %v2767 = vsel %vm2678, %v2428, 0.0
        %v2768 = vsel %vm2678, %v2429, 0.0
        %v2769 = vsel %vm2679, %v2430, 0.0
        %v2770 = vsel %vm2679, %v2431, 0.0
        %v2771 = vsel %vm2680, %v2432, 0.0
        %v2772 = vsel %vm2680, %v2433, 0.0
        %v2773 = vsel %vm2681, %v2434, 0.0
        %v2774 = vsel %vm2681, %v2435, 0.0
        %v2775 = vsel %vm2682, %v2436, 0.0
        %v2776 = vsel %vm2682, %v2437, 0.0
        %v2777 = vsel %vm2683, %v2438, 0.0
        %v2778 = vsel %vm2683, %v2439, 0.0
        %v2779 = vsel %vm2684, %v2440, 0.0
        %v2780 = vsel %vm2684, %v2441, 0.0
        %v2781 = vsel %vm2669, %v2442, 0.0
        %v2782 = vsel %vm2669, %v2443, 0.0
        %v2783 = vsel %vm2670, %v2444, 0.0
        %v2784 = vsel %vm2670, %v2445, 0.0
        %v2785 = vsel %vm2671, %v2446, 0.0
        %v2786 = vsel %vm2671, %v2447, 0.0
        %v2787 = vsel %vm2672, %v2448, 0.0
        %v2788 = vsel %vm2672, %v2449, 0.0
        %v2789 = vsel %vm2673, %v2450, 0.0
        %v2790 = vsel %vm2673, %v2451, 0.0
        %v2791 = vsel %vm2674, %v2452, 0.0
        %v2792 = vsel %vm2674, %v2453, 0.0
        %v2793 = vsel %vm2675, %v2454, 0.0
        %v2794 = vsel %vm2675, %v2455, 0.0
        %v2795 = vsel %vm2676, %v2456, 0.0
        %v2796 = vsel %vm2676, %v2457, 0.0
        %v2797 = vsel %vm2677, %v2458, 0.0
        %v2798 = vsel %vm2677, %v2459, 0.0
        %v2799 = vsel %vm2678, %v2460, 0.0
        %v2800 = vsel %vm2678, %v2461, 0.0
        %v2801 = vsel %vm2679, %v2462, 0.0
        %v2802 = vsel %vm2679, %v2463, 0.0
        %v2803 = vsel %vm2680, %v2464, 0.0
        %v2804 = vsel %vm2680, %v2465, 0.0
        %v2805 = vsel %vm2681, %v2466, 0.0
        %v2806 = vsel %vm2681, %v2467, 0.0
        %v2807 = vsel %vm2682, %v2468, 0.0
        %v2808 = vsel %vm2682, %v2469, 0.0
        %v2809 = vsel %vm2683, %v2470, 0.0
        %v2810 = vsel %vm2683, %v2471, 0.0
        %v2811 = vsel %vm2684, %v2472, 0.0
        %v2812 = vsel %vm2684, %v2473, 0.0
        %v2813 = vsel %vm2669, %v2474, 0.0
        %v2814 = vsel %vm2669, %v2475, 0.0
        %v2815 = vsel %vm2670, %v2476, 0.0
        %v2816 = vsel %vm2670, %v2477, 0.0
        %v2817 = vsel %vm2671, %v2478, 0.0
        %v2818 = vsel %vm2671, %v2479, 0.0
        %v2819 = vsel %vm2672, %v2480, 0.0
        %v2820 = vsel %vm2672, %v2481, 0.0
        %v2821 = vsel %vm2673, %v2482, 0.0
        %v2822 = vsel %vm2673, %v2483, 0.0
        %v2823 = vsel %vm2674, %v2484, 0.0
        %v2824 = vsel %vm2674, %v2485, 0.0
        %v2825 = vsel %vm2675, %v2486, 0.0
        %v2826 = vsel %vm2675, %v2487, 0.0
        %v2827 = vsel %vm2676, %v2488, 0.0
        %v2828 = vsel %vm2676, %v2489, 0.0
        %v2829 = vsel %vm2677, %v2490, 0.0
        %v2830 = vsel %vm2677, %v2491, 0.0
        %v2831 = vsel %vm2678, %v2492, 0.0
        %v2832 = vsel %vm2678, %v2493, 0.0
        %v2833 = vsel %vm2679, %v2494, 0.0
        %v2834 = vsel %vm2679, %v2495, 0.0
        %v2835 = vsel %vm2680, %v2496, 0.0
        %v2836 = vsel %vm2680, %v2497, 0.0
        %v2837 = vsel %vm2681, %v2498, 0.0
        %v2838 = vsel %vm2681, %v2499, 0.0
        %v2839 = vsel %vm2682, %v2500, 0.0
        %v2840 = vsel %vm2682, %v2501, 0.0
        %v2841 = vsel %vm2683, %v2502, 0.0
        %v2842 = vsel %vm2683, %v2503, 0.0
        %v2843 = vsel %vm2684, %v2504, 0.0
        %v2844 = vsel %vm2684, %v2505, 0.0
        %v2845 = vsel %vm2669, %v2506, 0.0
        %v2846 = vsel %vm2669, %v2507, 0.0
        %v2847 = vsel %vm2670, %v2508, 0.0
        %v2848 = vsel %vm2670, %v2509, 0.0
        %v2849 = vsel %vm2671, %v2510, 0.0
        %v2850 = vsel %vm2671, %v2511, 0.0
        %v2851 = vsel %vm2672, %v2512, 0.0
        %v2852 = vsel %vm2672, %v2513, 0.0
        %v2853 = vsel %vm2673, %v2514, 0.0
        %v2854 = vsel %vm2673, %v2515, 0.0
        %v2855 = vsel %vm2674, %v2516, 0.0
        %v2856 = vsel %vm2674, %v2517, 0.0
        %v2857 = vsel %vm2675, %v2518, 0.0
        %v2858 = vsel %vm2675, %v2519, 0.0
        %v2859 = vsel %vm2676, %v2520, 0.0
        %v2860 = vsel %vm2676, %v2521, 0.0
        %v2861 = vsel %vm2677, %v2522, 0.0
        %v2862 = vsel %vm2677, %v2523, 0.0
        %v2863 = vsel %vm2678, %v2524, 0.0
        %v2864 = vsel %vm2678, %v2525, 0.0
        %v2865 = vsel %vm2679, %v2526, 0.0
        %v2866 = vsel %vm2679, %v2527, 0.0
        %v2867 = vsel %vm2680, %v2528, 0.0
        %v2868 = vsel %vm2680, %v2529, 0.0
        %v2869 = vsel %vm2681, %v2530, 0.0
        %v2870 = vsel %vm2681, %v2531, 0.0
        %v2871 = vsel %vm2682, %v2532, 0.0
        %v2872 = vsel %vm2682, %v2533, 0.0
        %v2873 = vsel %vm2683, %v2534, 0.0
        %v2874 = vsel %vm2683, %v2535, 0.0
        %v2875 = vsel %vm2684, %v2536, 0.0
        %v2876 = vsel %vm2684, %v2537, 0.0
        %v2877 = vsel %vm2669, %v2538, 0.0
        %v2878 = vsel %vm2669, %v2539, 0.0
        %v2879 = vsel %vm2670, %v2540, 0.0
        %v2880 = vsel %vm2670, %v2541, 0.0
        %v2881 = vsel %vm2671, %v2542, 0.0
        %v2882 = vsel %vm2671, %v2543, 0.0
        %v2883 = vsel %vm2672, %v2544, 0.0
        %v2884 = vsel %vm2672, %v2545, 0.0
        %v2885 = vsel %vm2673, %v2546, 0.0
        %v2886 = vsel %vm2673, %v2547, 0.0
        %v2887 = vsel %vm2674, %v2548, 0.0
        %v2888 = vsel %vm2674, %v2549, 0.0
        %v2889 = vsel %vm2675, %v2550, 0.0
        %v2890 = vsel %vm2675, %v2551, 0.0
        %v2891 = vsel %vm2676, %v2552, 0.0
        %v2892 = vsel %vm2676, %v2553, 0.0
        %v2893 = vsel %vm2677, %v2554, 0.0
        %v2894 = vsel %vm2677, %v2555, 0.0
        %v2895 = vsel %vm2678, %v2556, 0.0
        %v2896 = vsel %vm2678, %v2557, 0.0
        %v2897 = vsel %vm2679, %v2558, 0.0
        %v2898 = vsel %vm2679, %v2559, 0.0
        %v2899 = vsel %vm2680, %v2560, 0.0
        %v2900 = vsel %vm2680, %v2561, 0.0
        %v2901 = vsel %vm2681, %v2562, 0.0
        %v2902 = vsel %vm2681, %v2563, 0.0
        %v2903 = vsel %vm2682, %v2564, 0.0
        %v2904 = vsel %vm2682, %v2565, 0.0
        %v2905 = vsel %vm2683, %v2566, 0.0
        %v2906 = vsel %vm2683, %v2567, 0.0
        %v2907 = vsel %vm2684, %v2568, 0.0
        %v2908 = vsel %vm2684, %v2569, 0.0
        %v2909 = vsel %vm2669, %v2570, 0.0
        %v2910 = vsel %vm2669, %v2571, 0.0
        %v2911 = vsel %vm2670, %v2572, 0.0
        %v2912 = vsel %vm2670, %v2573, 0.0
        %v2913 = vsel %vm2671, %v2574, 0.0
        %v2914 = vsel %vm2671, %v2575, 0.0
        %v2915 = vsel %vm2672, %v2576, 0.0
        %v2916 = vsel %vm2672, %v2577, 0.0
        %v2917 = vsel %vm2673, %v2578, 0.0
        %v2918 = vsel %vm2673, %v2579, 0.0
        %v2919 = vsel %vm2674, %v2580, 0.0
        %v2920 = vsel %vm2674, %v2581, 0.0
        %v2921 = vsel %vm2675, %v2582, 0.0
        %v2922 = vsel %vm2675, %v2583, 0.0
        %v2923 = vsel %vm2676, %v2584, 0.0
        %v2924 = vsel %vm2676, %v2585, 0.0
        %v2925 = vsel %vm2677, %v2586, 0.0
        %v2926 = vsel %vm2677, %v2587, 0.0
        %v2927 = vsel %vm2678, %v2588, 0.0
        %v2928 = vsel %vm2678, %v2589, 0.0
        %v2929 = vsel %vm2679, %v2590, 0.0
        %v2930 = vsel %vm2679, %v2591, 0.0
        %v2931 = vsel %vm2680, %v2592, 0.0
        %v2932 = vsel %vm2680, %v2593, 0.0
        %v2933 = vsel %vm2681, %v2594, 0.0
        %v2934 = vsel %vm2681, %v2595, 0.0
        %v2935 = vsel %vm2682, %v2596, 0.0
        %v2936 = vsel %vm2682, %v2597, 0.0
        %v2937 = vsel %vm2683, %v2598, 0.0
        %v2938 = vsel %vm2683, %v2599, 0.0
        %v2939 = vsel %vm2684, %v2600, 0.0
        %v2940 = vsel %vm2684, %v2601, 0.0
        %v2941 = vld [vmem:[#allocation2] sm:$0xff]
        %v2942 = vld [vmem:[#allocation2 + $0x8] sm:$0xff]
        %v2943 = vadd.f32 %v2685, %v2687
        %v2944 = vadd.f32 %v2943, %v2689
        %v2945 = vadd.f32 %v2944, %v2691
        %v2946 = vadd.f32 %v2945, %v2693
        %v2947 = vadd.f32 %v2946, %v2695
        %v2948 = vadd.f32 %v2947, %v2697
        %v2949 = vadd.f32 %v2948, %v2699
        %v2950 = vadd.f32 %v2949, %v2701
        %v2951 = vadd.f32 %v2950, %v2703
        %v2952 = vadd.f32 %v2951, %v2705
        %v2953 = vadd.f32 %v2952, %v2707
        %v2954 = vadd.f32 %v2953, %v2709
        %v2955 = vadd.f32 %v2954, %v2711
        %v2956 = vadd.f32 %v2955, %v2713
        %v2957 = vadd.f32 %v2956, %v2715
        %v2958 = vrot.slane %v2957, 4
        %v2959 = vadd.f32 %v2957, %v2958
        %v2960 = vrot.slane %v2959, 2
        %v2961 = vadd.f32 %v2959, %v2960
        %v2962 = vrot.slane %v2961, 1
        %v2963 = vadd.f32 %v2961, %v2962
        %v2964 = vadd.f32 %v2686, %v2688
        %v2965 = vadd.f32 %v2964, %v2690
        %v2966 = vadd.f32 %v2965, %v2692
        %v2967 = vadd.f32 %v2966, %v2694
        %v2968 = vadd.f32 %v2967, %v2696
        %v2969 = vadd.f32 %v2968, %v2698
        %v2970 = vadd.f32 %v2969, %v2700
        %v2971 = vadd.f32 %v2970, %v2702
        %v2972 = vadd.f32 %v2971, %v2704
        %v2973 = vadd.f32 %v2972, %v2706
        %v2974 = vadd.f32 %v2973, %v2708
        %v2975 = vadd.f32 %v2974, %v2710
        %v2976 = vadd.f32 %v2975, %v2712
        %v2977 = vadd.f32 %v2976, %v2714
        %v2978 = vadd.f32 %v2977, %v2716
        %v2979 = vrot.slane %v2978, 4
        %v2980 = vadd.f32 %v2978, %v2979
        %v2981 = vrot.slane %v2980, 2
        %v2982 = vadd.f32 %v2980, %v2981
        %v2983 = vrot.slane %v2982, 1
        %v2984 = vadd.f32 %v2982, %v2983
        %v2985 = vadd.f32 %v2717, %v2719
        %v2986 = vadd.f32 %v2985, %v2721
        %v2987 = vadd.f32 %v2986, %v2723
        %v2988 = vadd.f32 %v2987, %v2725
        %v2989 = vadd.f32 %v2988, %v2727
        %v2990 = vadd.f32 %v2989, %v2729
        %v2991 = vadd.f32 %v2990, %v2731
        %v2992 = vadd.f32 %v2991, %v2733
        %v2993 = vadd.f32 %v2992, %v2735
        %v2994 = vadd.f32 %v2993, %v2737
        %v2995 = vadd.f32 %v2994, %v2739
        %v2996 = vadd.f32 %v2995, %v2741
        %v2997 = vadd.f32 %v2996, %v2743
        %v2998 = vadd.f32 %v2997, %v2745
        %v2999 = vadd.f32 %v2998, %v2747
        %v3000 = vrot.slane %v2999, 4
        %v3001 = vadd.f32 %v2999, %v3000
        %v3002 = vrot.slane %v3001, 2
        %v3003 = vadd.f32 %v3001, %v3002
        %v3004 = vrot.slane %v3003, 1
        %v3005 = vadd.f32 %v3003, %v3004
        %v3006 = vadd.f32 %v2718, %v2720
        %v3007 = vadd.f32 %v3006, %v2722
        %v3008 = vadd.f32 %v3007, %v2724
        %v3009 = vadd.f32 %v3008, %v2726
        %v3010 = vadd.f32 %v3009, %v2728
        %v3011 = vadd.f32 %v3010, %v2730
        %v3012 = vadd.f32 %v3011, %v2732
        %v3013 = vadd.f32 %v3012, %v2734
        %v3014 = vadd.f32 %v3013, %v2736
        %v3015 = vadd.f32 %v3014, %v2738
        %v3016 = vadd.f32 %v3015, %v2740
        %v3017 = vadd.f32 %v3016, %v2742
        %v3018 = vadd.f32 %v3017, %v2744
        %v3019 = vadd.f32 %v3018, %v2746
        %v3020 = vadd.f32 %v3019, %v2748
        %v3021 = vrot.slane %v3020, 4
        %v3022 = vadd.f32 %v3020, %v3021
        %v3023 = vrot.slane %v3022, 2
        %v3024 = vadd.f32 %v3022, %v3023
        %v3025 = vrot.slane %v3024, 1
        %v3026 = vadd.f32 %v3024, %v3025
        %v3027 = vadd.f32 %v2749, %v2751
        %v3028 = vadd.f32 %v3027, %v2753
        %v3029 = vadd.f32 %v3028, %v2755
        %v3030 = vadd.f32 %v3029, %v2757
        %v3031 = vadd.f32 %v3030, %v2759
        %v3032 = vadd.f32 %v3031, %v2761
        %v3033 = vadd.f32 %v3032, %v2763
        %v3034 = vadd.f32 %v3033, %v2765
        %v3035 = vadd.f32 %v3034, %v2767
        %v3036 = vadd.f32 %v3035, %v2769
        %v3037 = vadd.f32 %v3036, %v2771
        %v3038 = vadd.f32 %v3037, %v2773
        %v3039 = vadd.f32 %v3038, %v2775
        %v3040 = vadd.f32 %v3039, %v2777
        %v3041 = vadd.f32 %v3040, %v2779
        %v3042 = vrot.slane %v3041, 4
        %v3043 = vadd.f32 %v3041, %v3042
        %v3044 = vrot.slane %v3043, 2
        %v3045 = vadd.f32 %v3043, %v3044
        %v3046 = vrot.slane %v3045, 1
        %v3047 = vadd.f32 %v3045, %v3046
        %v3048 = vadd.f32 %v2750, %v2752
        %v3049 = vadd.f32 %v3048, %v2754
        %v3050 = vadd.f32 %v3049, %v2756
        %v3051 = vadd.f32 %v3050, %v2758
        %v3052 = vadd.f32 %v3051, %v2760
        %v3053 = vadd.f32 %v3052, %v2762
        %v3054 = vadd.f32 %v3053, %v2764
        %v3055 = vadd.f32 %v3054, %v2766
        %v3056 = vadd.f32 %v3055, %v2768
        %v3057 = vadd.f32 %v3056, %v2770
        %v3058 = vadd.f32 %v3057, %v2772
        %v3059 = vadd.f32 %v3058, %v2774
        %v3060 = vadd.f32 %v3059, %v2776
        %v3061 = vadd.f32 %v3060, %v2778
        %v3062 = vadd.f32 %v3061, %v2780
        %v3063 = vrot.slane %v3062, 4
        %v3064 = vadd.f32 %v3062, %v3063
        %v3065 = vrot.slane %v3064, 2
        %v3066 = vadd.f32 %v3064, %v3065
        %v3067 = vrot.slane %v3066, 1
        %v3068 = vadd.f32 %v3066, %v3067
        %v3069 = vadd.f32 %v2781, %v2783
        %v3070 = vadd.f32 %v3069, %v2785
        %v3071 = vadd.f32 %v3070, %v2787
        %v3072 = vadd.f32 %v3071, %v2789
        %v3073 = vadd.f32 %v3072, %v2791
        %v3074 = vadd.f32 %v3073, %v2793
        %v3075 = vadd.f32 %v3074, %v2795
        %v3076 = vadd.f32 %v3075, %v2797
        %v3077 = vadd.f32 %v3076, %v2799
        %v3078 = vadd.f32 %v3077, %v2801
        %v3079 = vadd.f32 %v3078, %v2803
        %v3080 = vadd.f32 %v3079, %v2805
        %v3081 = vadd.f32 %v3080, %v2807
        %v3082 = vadd.f32 %v3081, %v2809
        %v3083 = vadd.f32 %v3082, %v2811
        %v3084 = vrot.slane %v3083, 4
        %v3085 = vadd.f32 %v3083, %v3084
        %v3086 = vrot.slane %v3085, 2
        %v3087 = vadd.f32 %v3085, %v3086
        %v3088 = vrot.slane %v3087, 1
        %v3089 = vadd.f32 %v3087, %v3088
        %v3090 = vadd.f32 %v2782, %v2784
        %v3091 = vadd.f32 %v3090, %v2786
        %v3092 = vadd.f32 %v3091, %v2788
        %v3093 = vadd.f32 %v3092, %v2790
        %v3094 = vadd.f32 %v3093, %v2792
        %v3095 = vadd.f32 %v3094, %v2794
        %v3096 = vadd.f32 %v3095, %v2796
        %v3097 = vadd.f32 %v3096, %v2798
        %v3098 = vadd.f32 %v3097, %v2800
        %v3099 = vadd.f32 %v3098, %v2802
        %v3100 = vadd.f32 %v3099, %v2804
        %v3101 = vadd.f32 %v3100, %v2806
        %v3102 = vadd.f32 %v3101, %v2808
        %v3103 = vadd.f32 %v3102, %v2810
        %v3104 = vadd.f32 %v3103, %v2812
        %v3105 = vrot.slane %v3104, 4
        %v3106 = vadd.f32 %v3104, %v3105
        %v3107 = vrot.slane %v3106, 2
        %v3108 = vadd.f32 %v3106, %v3107
        %v3109 = vrot.slane %v3108, 1
        %v3110 = vadd.f32 %v3108, %v3109
        %v3111 = vadd.f32 %v2813, %v2815
        %v3112 = vadd.f32 %v3111, %v2817
        %v3113 = vadd.f32 %v3112, %v2819
        %v3114 = vadd.f32 %v3113, %v2821
        %v3115 = vadd.f32 %v3114, %v2823
        %v3116 = vadd.f32 %v3115, %v2825
        %v3117 = vadd.f32 %v3116, %v2827
        %v3118 = vadd.f32 %v3117, %v2829
        %v3119 = vadd.f32 %v3118, %v2831
        %v3120 = vadd.f32 %v3119, %v2833
        %v3121 = vadd.f32 %v3120, %v2835
        %v3122 = vadd.f32 %v3121, %v2837
        %v3123 = vadd.f32 %v3122, %v2839
        %v3124 = vadd.f32 %v3123, %v2841
        %v3125 = vadd.f32 %v3124, %v2843
        %v3126 = vrot.slane %v3125, 4
        %v3127 = vadd.f32 %v3125, %v3126
        %v3128 = vrot.slane %v3127, 2
        %v3129 = vadd.f32 %v3127, %v3128
        %v3130 = vrot.slane %v3129, 1
        %v3131 = vadd.f32 %v3129, %v3130
        %v3132 = vadd.f32 %v2814, %v2816
        %v3133 = vadd.f32 %v3132, %v2818
        %v3134 = vadd.f32 %v3133, %v2820
        %v3135 = vadd.f32 %v3134, %v2822
        %v3136 = vadd.f32 %v3135, %v2824
        %v3137 = vadd.f32 %v3136, %v2826
        %v3138 = vadd.f32 %v3137, %v2828
        %v3139 = vadd.f32 %v3138, %v2830
        %v3140 = vadd.f32 %v3139, %v2832
        %v3141 = vadd.f32 %v3140, %v2834
        %v3142 = vadd.f32 %v3141, %v2836
        %v3143 = vadd.f32 %v3142, %v2838
        %v3144 = vadd.f32 %v3143, %v2840
        %v3145 = vadd.f32 %v3144, %v2842
        %v3146 = vadd.f32 %v3145, %v2844
        %v3147 = vrot.slane %v3146, 4
        %v3148 = vadd.f32 %v3146, %v3147
        %v3149 = vrot.slane %v3148, 2
        %v3150 = vadd.f32 %v3148, %v3149
        %v3151 = vrot.slane %v3150, 1
        %v3152 = vadd.f32 %v3150, %v3151
        %v3153 = vadd.f32 %v2845, %v2847
        %v3154 = vadd.f32 %v3153, %v2849
        %v3155 = vadd.f32 %v3154, %v2851
        %v3156 = vadd.f32 %v3155, %v2853
        %v3157 = vadd.f32 %v3156, %v2855
        %v3158 = vadd.f32 %v3157, %v2857
        %v3159 = vadd.f32 %v3158, %v2859
        %v3160 = vadd.f32 %v3159, %v2861
        %v3161 = vadd.f32 %v3160, %v2863
        %v3162 = vadd.f32 %v3161, %v2865
        %v3163 = vadd.f32 %v3162, %v2867
        %v3164 = vadd.f32 %v3163, %v2869
        %v3165 = vadd.f32 %v3164, %v2871
        %v3166 = vadd.f32 %v3165, %v2873
        %v3167 = vadd.f32 %v3166, %v2875
        %v3168 = vrot.slane %v3167, 4
        %v3169 = vadd.f32 %v3167, %v3168
        %v3170 = vrot.slane %v3169, 2
        %v3171 = vadd.f32 %v3169, %v3170
        %v3172 = vrot.slane %v3171, 1
        %v3173 = vadd.f32 %v3171, %v3172
        %v3174 = vadd.f32 %v2846, %v2848
        %v3175 = vadd.f32 %v3174, %v2850
        %v3176 = vadd.f32 %v3175, %v2852
        %v3177 = vadd.f32 %v3176, %v2854
        %v3178 = vadd.f32 %v3177, %v2856
        %v3179 = vadd.f32 %v3178, %v2858
        %v3180 = vadd.f32 %v3179, %v2860
        %v3181 = vadd.f32 %v3180, %v2862
        %v3182 = vadd.f32 %v3181, %v2864
        %v3183 = vadd.f32 %v3182, %v2866
        %v3184 = vadd.f32 %v3183, %v2868
        %v3185 = vadd.f32 %v3184, %v2870
        %v3186 = vadd.f32 %v3185, %v2872
        %v3187 = vadd.f32 %v3186, %v2874
        %v3188 = vadd.f32 %v3187, %v2876
        %v3189 = vrot.slane %v3188, 4
        %v3190 = vadd.f32 %v3188, %v3189
        %v3191 = vrot.slane %v3190, 2
        %v3192 = vadd.f32 %v3190, %v3191
        %v3193 = vrot.slane %v3192, 1
        %v3194 = vadd.f32 %v3192, %v3193
        %v3195 = vadd.f32 %v2877, %v2879
        %v3196 = vadd.f32 %v3195, %v2881
        %v3197 = vadd.f32 %v3196, %v2883
        %v3198 = vadd.f32 %v3197, %v2885
        %v3199 = vadd.f32 %v3198, %v2887
        %v3200 = vadd.f32 %v3199, %v2889
        %v3201 = vadd.f32 %v3200, %v2891
        %v3202 = vadd.f32 %v3201, %v2893
        %v3203 = vadd.f32 %v3202, %v2895
        %v3204 = vadd.f32 %v3203, %v2897
        %v3205 = vadd.f32 %v3204, %v2899
        %v3206 = vadd.f32 %v3205, %v2901
        %v3207 = vadd.f32 %v3206, %v2903
        %v3208 = vadd.f32 %v3207, %v2905
        %v3209 = vadd.f32 %v3208, %v2907
        %v3210 = vrot.slane %v3209, 4
        %v3211 = vadd.f32 %v3209, %v3210
        %v3212 = vrot.slane %v3211, 2
        %v3213 = vadd.f32 %v3211, %v3212
        %v3214 = vrot.slane %v3213, 1
        %v3215 = vadd.f32 %v3213, %v3214
        %v3216 = vadd.f32 %v2878, %v2880
        %v3217 = vadd.f32 %v3216, %v2882
        %v3218 = vadd.f32 %v3217, %v2884
        %v3219 = vadd.f32 %v3218, %v2886
        %v3220 = vadd.f32 %v3219, %v2888
        %v3221 = vadd.f32 %v3220, %v2890
        %v3222 = vadd.f32 %v3221, %v2892
        %v3223 = vadd.f32 %v3222, %v2894
        %v3224 = vadd.f32 %v3223, %v2896
        %v3225 = vadd.f32 %v3224, %v2898
        %v3226 = vadd.f32 %v3225, %v2900
        %v3227 = vadd.f32 %v3226, %v2902
        %v3228 = vadd.f32 %v3227, %v2904
        %v3229 = vadd.f32 %v3228, %v2906
        %v3230 = vadd.f32 %v3229, %v2908
        %v3231 = vrot.slane %v3230, 4
        %v3232 = vadd.f32 %v3230, %v3231
        %v3233 = vrot.slane %v3232, 2
        %v3234 = vadd.f32 %v3232, %v3233
        %v3235 = vrot.slane %v3234, 1
        %v3236 = vadd.f32 %v3234, %v3235
        %v3237 = vadd.f32 %v2909, %v2911
        %v3238 = vadd.f32 %v3237, %v2913
        %v3239 = vadd.f32 %v3238, %v2915
        %v3240 = vadd.f32 %v3239, %v2917
        %v3241 = vadd.f32 %v3240, %v2919
        %v3242 = vadd.f32 %v3241, %v2921
        %v3243 = vadd.f32 %v3242, %v2923
        %v3244 = vadd.f32 %v3243, %v2925
        %v3245 = vadd.f32 %v3244, %v2927
        %v3246 = vadd.f32 %v3245, %v2929
        %v3247 = vadd.f32 %v3246, %v2931
        %v3248 = vadd.f32 %v3247, %v2933
        %v3249 = vadd.f32 %v3248, %v2935
        %v3250 = vadd.f32 %v3249, %v2937
        %v3251 = vadd.f32 %v3250, %v2939
        %v3252 = vrot.slane %v3251, 4
        %v3253 = vadd.f32 %v3251, %v3252
        %v3254 = vrot.slane %v3253, 2
        %v3255 = vadd.f32 %v3253, %v3254
        %v3256 = vrot.slane %v3255, 1
        %v3257 = vadd.f32 %v3255, %v3256
        %v3258 = vadd.f32 %v2910, %v2912
        %v3259 = vadd.f32 %v3258, %v2914
        %v3260 = vadd.f32 %v3259, %v2916
        %v3261 = vadd.f32 %v3260, %v2918
        %v3262 = vadd.f32 %v3261, %v2920
        %v3263 = vadd.f32 %v3262, %v2922
        %v3264 = vadd.f32 %v3263, %v2924
        %v3265 = vadd.f32 %v3264, %v2926
        %v3266 = vadd.f32 %v3265, %v2928
        %v3267 = vadd.f32 %v3266, %v2930
        %v3268 = vadd.f32 %v3267, %v2932
        %v3269 = vadd.f32 %v3268, %v2934
        %v3270 = vadd.f32 %v3269, %v2936
        %v3271 = vadd.f32 %v3270, %v2938
        %v3272 = vadd.f32 %v3271, %v2940
        %v3273 = vrot.slane %v3272, 4
        %v3274 = vadd.f32 %v3272, %v3273
        %v3275 = vrot.slane %v3274, 2
        %v3276 = vadd.f32 %v3274, %v3275
        %v3277 = vrot.slane %v3276, 1
        %v3278 = vadd.f32 %v3276, %v3277
        %vm3295 = vcmask 1041409
        %v3296 = vsel %vm3295, %v3005, %v2963
        %vm3297 = vcmask 1042434
        %v3298 = vsel %vm3297, %v3047, %v3296
        %vm3299 = vcmask 1043459
        %v3300 = vsel %vm3299, %v3089, %v3298
        %vm3301 = vcmask 1044484
        %v3302 = vsel %vm3301, %v3131, %v3300
        %vm3303 = vcmask 1045509
        %v3304 = vsel %vm3303, %v3173, %v3302
        %vm3305 = vcmask 1046534
        %v3306 = vsel %vm3305, %v3215, %v3304
        %vm3307 = vcmask 1047559
        %v3308 = vsel %vm3307, %v3257, %v3306
        %v3309 = vsel %vm3295, %v3026, %v2984
        %v3310 = vsel %vm3297, %v3068, %v3309
        %v3311 = vsel %vm3299, %v3110, %v3310
        %v3312 = vsel %vm3301, %v3152, %v3311
        %v3313 = vsel %vm3303, %v3194, %v3312
        %v3314 = vsel %vm3305, %v3236, %v3313
        %v3315 = vsel %vm3307, %v3278, %v3314
        %v3318 = vadd.f32 %v2941, %v3308
        %v3319 = vadd.f32 %v2942, %v3315
        %3320 = vst [vmem:[#allocation2] sm:$0xff] %v3318
        %3321 = vst [vmem:[#allocation2 + $0x8] sm:$0xff] %v3319
        %p3322 = scmp.eq.s32.totalorder %s22, 2
        // Predicated region
        $region151: #{tpu_custom_call.1} parent=137 // pred_check
          %p3323 = pneg %p3322
        $region152: #{tpu_custom_call.1} parent=137 // pred_check_branch
          %3325 = sbr.rel (%p3323) target = $region154
        $region153: #{tpu_custom_call.1} parent=137 // pred_region
          %v3326 = vld [vmem:[#allocation2] sm:$0xff]
          %v3327 = vld [vmem:[#allocation2 + $0x8] sm:$0xff]
          %v3328 = vld [vmem:[%s1059] sm:$0xff]
          %3330 = vset.pattern.permute.xlu0 0
          %3331 = vperm.xlu0 %3330, %v3328
          %v3332 = vpop.permute.xlu0 %3331
          %v3334 = vmul.f32 %v3326, %v3332
          %v3335 = vmul.f32 %v3327, %v3332
          %v3336 = vpack.c.bf16 %v3334, %v3334
          %v3337 = vpack.c.bf16 %v3335, %v3335
          %v3340 = vunpack.c.l.b16 %v3336
          %v3341 = vunpack.c.l.b16 %v3337
          %v3342 = vpack.c.b16 %v3341, %v3340
          %3344 = vst [vmem:[%s1042] sm:$0xff] %v3342
        $region154: #{tpu_custom_call.1} parent=137 // pred_fallthru
          _
        %s3345 = sand.u32 %s119, 1
        %s3346 = scalar_lea.sflag [#allocation6], %s3345
        %s3347 = sand.u32 %s119, 1
        %s3348 = smul.addr %s3347, 8
        %s3349 = scalar_lea.vmem [#allocation5], %s3348
        // Predicated region
        $region155: #{tpu_custom_call.1} parent=137 // pred_check
          %p3350 = pneg %p129
        $region156: #{tpu_custom_call.1} parent=137 // pred_check_branch
          %3352 = sbr.rel (%p3350) target = $region158
        $region157: #{tpu_custom_call.1} parent=137 // pred_region
          %s3354 = ssub.s32 128, 128
          %3355 = vsyncadd %s3346, %s3354
          %s3356 = smul.addr %s21, 2
          %s3357 = smul.addr %s3356, 64
          %s3358 = scalar_lea.hbm %s3, %s3357
          %s3360 = sshll.u32 %s3349, 4
          %s3361 = int_to_ptr.vmem [resolvable:$true] %s3360
          %3363 = dma.vmem_to_hbm [thread:$0]  %s3361, 128, %s3358, %s3346
        $region158: #{tpu_custom_call.1} parent=137 // pred_fallthru
          _
      $region138: #{tpu_custom_call.1} parent=5 // pred_fallthru
        _
      %p3364 = scmp.le.s32.totalorder 2, %s12
      // Predicated region
      $region159: #{tpu_custom_call.1} parent=5 // pred_check
        %p3365 = pneg %p3364
      $region160: #{tpu_custom_call.1} parent=5 // pred_check_branch
        %3367 = sbr.rel (%p3365) target = $region162
      $region161: #{tpu_custom_call.1} parent=5 // pred_region
        %s3368 = ssub.s32 %s12, 2
        // Predicated region
        $region163: #{tpu_custom_call.1} parent=161 // pred_check
          %p3369 = pneg %p135
        $region164: #{tpu_custom_call.1} parent=161 // pred_check_branch
          %3371 = sbr.rel (%p3369) target = $region166
        $region165: #{tpu_custom_call.1} parent=161 // pred_region
          %s3372 = sand.u32 %s120, 1
          %s3373 = scalar_lea.sflag [#allocation6], %s3372
          %s3374 = sand.u32 %s120, 1
          %s3375 = smul.addr %s3374, 8
          %s3376 = scalar_lea.vmem [#allocation5], %s3375
          %3377 = dma.done %s3373, 128
        $region166: #{tpu_custom_call.1} parent=161 // pred_fallthru
          _
      $region162: #{tpu_custom_call.1} parent=5 // pred_fallthru
        _
    $region6: #{tpu_custom_call.1} parent=1 // loop_footer
      %s16 = sadd.s32 1, %s12
    $region7: #{tpu_custom_call.1} parent=1 // loop_footer_branch
      %11 = sbr.rel target = $region3
    $region8: #{tpu_custom_call.1} parent=1 // loop_exit
      _
    %3378 = vsyncpa [#allocation6], 1
    %s3379 = scalar_lea.sflag [#allocation6], 1
    %3380 = vsyncpa %s3379, 1

</llo_original>
